<compile_context>
chip_gen: v7x
topology: tpu7x:2x2x1
jax: 0.10.0
libtpu: 0.0.40
codegen_flags: <defaults>
</compile_context>

<pallas_src>
import numpy as np
import jax
import jax.numpy as jnp
from jax import lax
from jax.experimental import pallas as pl
from jax.experimental.pallas import tpu as pltpu

LANE = 128


def _round_up(c, m=LANE):
    return ((c + m - 1) // m) * m


def _pad_axis(a, axis, new_size):
    pad = [(0, 0)] * a.ndim
    pad[axis] = (0, new_size - a.shape[axis])
    return jnp.pad(a, pad)


def _pick_row_tile(H, W, Cinp, widthp, Coutp, budget_bytes=40 * 2**20):
    """Largest divisor of H whose VMEM footprint (double-buffered inputs/output
    + scratch + live temporaries) fits the budget."""
    def est(th):
        b = 0
        b += 2 * (H + 2) * W * Cinp * 2                                   # x image (bf16, dbl-buf)
        b += 2 * (Cinp * widthp + 9 * widthp * widthp + widthp * Coutp) * 2  # weights (bf16, dbl-buf)
        b += 2 * 6 * max(widthp, Coutp) * 4                               # scale/bias
        b += (th + 2) * (W + 16) * widthp * 2                             # h1pad scratch
        b += th * W * 9 * widthp * 2                                      # im2col scratch
        b += 2 * th * W * Coutp * 4                                       # out block (f32, dbl-buf)
        b += (th + 2) * W * widthp * 4 + th * W * widthp * 4 + th * W * Coutp * 4  # live temps
        return b

    divisors = [d for d in range(H, 0, -1) if H % d == 0]
    for d in divisors:
        if est(d) <= budget_bytes:
            return d, est(d)
    return divisors[-1], est(divisors[-1])


def bottleneck_kernel(x_ref, w1_ref, s1_ref, b1_ref,
                      w2_ref, s2_ref, b2_ref,
                      w3_ref, s3_ref, b3_ref,
                      out_ref, h1pad_ref, im2col_ref):
    # x_ref      : (1, H+2, W, Cinp)        bf16 (whole image, 1-row zero halo top/bot)
    # w1_ref     : (Cinp, widthp)           bf16
    # w2_ref     : (9*widthp, widthp)       bf16 ((ky,kx,cin) flattened along K)
    # w3_ref     : (widthp, Coutp)          bf16
    # s*/b*      : (1, c)                   f32  (folded BN scale / bias)
    # out_ref    : (1, TH, W, Coutp)        f32
    # h1pad_ref  : (TH+2, W+16, widthp)     bf16 scratch, interior at cols [8, 8+W)
    # im2col_ref : (TH*W, 9*widthp)         bf16 scratch
    _, TH, W, Coutp = out_ref.shape
    Cinp = x_ref.shape[-1]
    widthp = w1_ref.shape[-1]
    h = pl.program_id(1)
    n_h = pl.num_programs(1)

    # ---- conv1 (1x1) + bn1 + relu on a (TH+2)-row slab (1-row vertical halo) ----
    row0 = pl.multiple_of(h * TH, TH)
    x_slab = x_ref[0, pl.ds(row0, TH + 2), :, :]              # (TH+2, W, Cinp) bf16
    h1 = jnp.dot(x_slab.reshape((TH + 2) * W, Cinp), w1_ref[...],
                 preferred_element_type=jnp.float32)
    h1 = jnp.maximum(h1 * s1_ref[...] + b1_ref[...], 0.0)
    h1 = h1.astype(jnp.bfloat16).reshape(TH + 2, W, widthp)

    # Zero border columns (conv2's left/right zero padding).  They are never
    # overwritten, so clearing once per batch element (first row tile) suffices;
    # under megacore each core's first step for a batch element has h == 0.
    @pl.when(h == 0)
    def _():
        zc = jnp.zeros((TH + 2, 1, widthp), jnp.bfloat16)
        h1pad_ref[:, 7:8, :] = zc
        h1pad_ref[:, 8 + W:9 + W, :] = zc

    # Sublane-aligned (offset-8) unmasked interior store of the whole slab.
    h1pad_ref[:, 8:8 + W, :] = h1

    # Halo rows that fall outside the image (top halo of tile 0, bottom halo of
    # the last tile) must be zero for conv2's padding; conv1+bn of the zero pad
    # row is relu(b1) != 0, so overwrite just that one row conditionally.
    @pl.when(h == 0)
    def _():
        h1pad_ref[0:1, :, :] = jnp.zeros((1, W + 16, widthp), jnp.bfloat16)

    @pl.when(h == n_h - 1)
    def _():
        h1pad_ref[TH + 1:TH + 2, :, :] = jnp.zeros((1, W + 16, widthp), jnp.bfloat16)

    # ---- conv2 (3x3, pad=1) as a single fat-K (9*widthp) matmul -----------------
    for tap in range(9):
        dy, dx = tap // 3, tap % 3
        win = h1pad_ref[dy:dy + TH, 7 + dx:7 + dx + W, :]     # (TH, W, widthp)
        im2col_ref[:, tap * widthp:(tap + 1) * widthp] = win.reshape(TH * W, widthp)

    h2 = jnp.dot(im2col_ref[...], w2_ref[...],
                 preferred_element_type=jnp.float32)
    h2 = jnp.maximum(h2 * s2_ref[...] + b2_ref[...], 0.0)     # (TH*W, widthp) f32

    # ---- conv3 (1x1) + bn3 + residual + relu ------------------------------------
    h3 = jnp.dot(h2.astype(jnp.bfloat16), w3_ref[...],
                 preferred_element_type=jnp.float32)
    h3 = h3 * s3_ref[...] + b3_ref[...]                       # (TH*W, Coutp) f32

    identity = x_slab[1:TH + 1].astype(jnp.float32)           # (TH, W, Cinp==Coutp)
    out = jnp.maximum(h3.reshape(TH, W, Coutp) + identity, 0.0)
    out_ref[0] = out.astype(out_ref.dtype)


def bottleneck_pallas(x_nhwc, params):
    """x_nhwc: [N, H, W, Cin].  Returns [N, H, W, Cout] float32."""
    N, H, W, Cin = x_nhwc.shape
    w1, s1, b1, w2, s2, b2, w3, s3, b3 = params
    width = w1.shape[1]
    Cout = w3.shape[1]
    if Cin != Cout:
        raise NotImplementedError(
            "identity residual requires in_channel == out_channel * expansion")

    Cinp, widthp, Coutp = _round_up(Cin), _round_up(width), _round_up(Cout)

    # Row tile: largest divisor of H fitting the VMEM budget (1-row vertical halo
    # handled inside the kernel).  W % 8 == 0 keeps the in-kernel reshapes free.
    TH, est_bytes = _pick_row_tile(H, W, Cinp, widthp, Coutp)
    n_h = H // TH
    vmem_limit = int(min(56 * 2**20, max(32 * 2**20, est_bytes + (8 << 20))))

    # ---- channel-pad + bf16-cast parameters (wrapper-side, once) ----------------
    w1p = _pad_axis(_pad_axis(w1, 0, Cinp), 1, widthp).astype(jnp.bfloat16)
    w2p = _pad_axis(_pad_axis(w2, 2, widthp), 3, widthp)
    w2p = w2p.reshape(9 * widthp, widthp).astype(jnp.bfloat16)
    w3p = _pad_axis(_pad_axis(w3, 0, widthp), 1, Coutp).astype(jnp.bfloat16)
    s1p = _pad_axis(s1, 0, widthp).reshape(1, widthp).astype(jnp.float32)
    b1p = _pad_axis(b1, 0, widthp).reshape(1, widthp).astype(jnp.float32)
    s2p = _pad_axis(s2, 0, widthp).reshape(1, widthp).astype(jnp.float32)
    b2p = _pad_axis(b2, 0, widthp).reshape(1, widthp).astype(jnp.float32)
    s3p = _pad_axis(s3, 0, Coutp).reshape(1, Coutp).astype(jnp.float32)
    b3p = _pad_axis(b3, 0, Coutp).reshape(1, Coutp).astype(jnp.float32)

    # ---- input: bf16, channel-pad to 128 multiple, 1-row zero halo on H ---------
    xp = _pad_axis(x_nhwc.astype(jnp.bfloat16), 3, Cinp)
    xp = jnp.pad(xp, ((0, 0), (1, 1), (0, 0), (0, 0)))        # (N, H+2, W, Cinp)

    grid_spec = pltpu.PrefetchScalarGridSpec(
        num_scalar_prefetch=0,
        grid=(N, n_h),
        in_specs=[
            pl.BlockSpec((1, H + 2, W, Cinp), lambda n, h: (n, 0, 0, 0)),
            pl.BlockSpec((Cinp, widthp), lambda n, h: (0, 0)),
            pl.BlockSpec((1, widthp), lambda n, h: (0, 0)),
            pl.BlockSpec((1, widthp), lambda n, h: (0, 0)),
            pl.BlockSpec((9 * widthp, widthp), lambda n, h: (0, 0)),
            pl.BlockSpec((1, widthp), lambda n, h: (0, 0)),
            pl.BlockSpec((1, widthp), lambda n, h: (0, 0)),
            pl.BlockSpec((widthp, Coutp), lambda n, h: (0, 0)),
            pl.BlockSpec((1, Coutp), lambda n, h: (0, 0)),
            pl.BlockSpec((1, Coutp), lambda n, h: (0, 0)),
        ],
        out_specs=pl.BlockSpec((1, TH, W, Coutp), lambda n, h: (n, h, 0, 0)),
        scratch_shapes=[
            pltpu.VMEM((TH + 2, W + 16, widthp), jnp.bfloat16),
            pltpu.VMEM((TH * W, 9 * widthp), jnp.bfloat16),
        ],
    )

    out_p = pl.pallas_call(
        bottleneck_kernel,
        out_shape=jax.ShapeDtypeStruct((N, H, W, Coutp), jnp.float32),
        grid_spec=grid_spec,
        compiler_params=pltpu.CompilerParams(
            # Batch on the megacore-parallel axis (the full image is h-invariant
            # and must not be duplicated across cores); row tiles sequential.
            dimension_semantics=("parallel", "arbitrary"),
            vmem_limit_bytes=vmem_limit),
    )(xp, w1p, s1p, b1p, w2p, s2p, b2p, w3p, s3p, b3p)

    return out_p[..., :Cout]


def make_params(key, in_channel, out_channel, width):
    """Deterministic synthetic parameters (BN folded to scale/bias), f32."""
    expansion = 4
    c3_out = out_channel * expansion
    ks = jax.random.split(key, 15)
    eps = 1e-5

    def bn_fold(kg, kb, km, kv, c):
        gamma = 1.0 + 0.1 * jax.random.normal(kg, (c,), jnp.float32)
        beta = 0.1 * jax.random.normal(kb, (c,), jnp.float32)
        mean = 0.1 * jax.random.normal(km, (c,), jnp.float32)
        var = jnp.abs(jax.random.normal(kv, (c,), jnp.float32)) + 0.5
        scale = gamma / jnp.sqrt(var + eps)
        bias = beta - mean * scale
        return scale, bias

    w1 = 0.2 * jax.random.normal(ks[0], (in_channel, width), jnp.float32)
    s1, b1 = bn_fold(ks[1], ks[2], ks[3], ks[4], width)
    w2 = 0.2 * jax.random.normal(ks[5], (3, 3, width, width), jnp.float32)
    s2, b2 = bn_fold(ks[6], ks[7], ks[8], ks[9], width)
    w3 = 0.2 * jax.random.normal(ks[10], (width, c3_out), jnp.float32)
    s3, b3 = bn_fold(ks[11], ks[12], ks[13], ks[14], c3_out)
    return (w1, s1, b1, w2, s2, b2, w3, s3, b3)


def bottleneck_reference(x_nhwc, params):
    """Pure-JAX reference (NHWC) mirroring the PyTorch forward; bf16 matmul
    operands / f32 accumulation and bf16-quantized residual to match the
    kernel's numerics."""
    w1, s1, b1, w2, s2, b2, w3, s3, b3 = params
    dn = ("NHWC", "HWIO", "NHWC")

    def conv(x, w, pad):
        return lax.conv_general_dilated(
            x.astype(jnp.bfloat16), w.astype(jnp.bfloat16),
            window_strides=(1, 1), padding=pad, dimension_numbers=dn,
            preferred_element_type=jnp.float32)

    xb = x_nhwc.astype(jnp.bfloat16)
    h = conv(xb, w1.reshape(1, 1, *w1.shape), "VALID")
    h = jnp.maximum(h * s1 + b1, 0.0)
    h = conv(h, w2, "SAME")
    h = jnp.maximum(h * s2 + b2, 0.0)
    h = conv(h, w3.reshape(1, 1, *w3.shape), "VALID")
    h = h * s3 + b3
    return jnp.maximum(h + xb.astype(jnp.float32), 0.0)


if __name__ == "__main__":
    # Bottleneck(in_channel=16, out_channel=4): width=4, expansion=4, stride=1,
    # downsample=None.  PyTorch-convention input NCHW: [2, 16, 16, 16].
    N, out_channel, H, W = 2, 4, 16, 16
    expansion = 4
    in_channel = out_channel * expansion       # identity-residual case
    width = int(out_channel * (64 / 64.0)) * 1

    key = jax.random.PRNGKey(0)
    kx, kp = jax.random.split(key)
    x_nchw = jax.random.normal(kx, (N, in_channel, H, W), jnp.float32)
    params = make_params(kp, in_channel, out_channel, width)

    # NCHW -> NHWC for the kernel.
    x_nhwc = jnp.transpose(x_nchw, (0, 2, 3, 1))

    out_nhwc = jax.block_until_ready(bottleneck_pallas(x_nhwc, params))
    ref_nhwc = jax.block_until_ready(bottleneck_reference(x_nhwc, params))

    if not np.allclose(np.asarray(out_nhwc), np.asarray(ref_nhwc),
                       rtol=2e-2, atol=2e-2):
        err = float(np.max(np.abs(np.asarray(out_nhwc) - np.asarray(ref_nhwc))))
        raise AssertionError(
            f"Pallas kernel does not match JAX reference (max abs err {err})")

    # Back to PyTorch-convention NCHW output.
    out_nchw = jnp.transpose(out_nhwc, (0, 3, 1, 2))
    jax.block_until_ready(out_nchw)
    print("KERNEL_OK")
</pallas_src>

<mosaic_0001>
module attributes {stable_mosaic.version = 11 : i64} {
  func.func @bottleneck_kernel(%arg0: i32, %arg1: i32, %arg2: memref<1x18x16x128xbf16, #tpu.memory_space<vmem>>, %arg3: memref<128x128xbf16, #tpu.memory_space<vmem>>, %arg4: memref<1x128xf32, #tpu.memory_space<vmem>>, %arg5: memref<1x128xf32, #tpu.memory_space<vmem>>, %arg6: memref<1152x128xbf16, #tpu.memory_space<vmem>>, %arg7: memref<1x128xf32, #tpu.memory_space<vmem>>, %arg8: memref<1x128xf32, #tpu.memory_space<vmem>>, %arg9: memref<128x128xbf16, #tpu.memory_space<vmem>>, %arg10: memref<1x128xf32, #tpu.memory_space<vmem>>, %arg11: memref<1x128xf32, #tpu.memory_space<vmem>>, %arg12: memref<1x16x16x128xf32, #tpu.memory_space<vmem>>, %arg13: memref<18x32x128xbf16, #tpu.memory_space<vmem>>, %arg14: memref<256x1152xbf16, #tpu.memory_space<vmem>>) attributes {dimension_semantics = [#tpu.dimension_semantics<parallel>, #tpu.dimension_semantics<arbitrary>], iteration_bounds = array<i64: 2, 1>, scalar_prefetch = 0 : i64, scratch_operands = 2 : i64, tpu.core_type = #tpu.core_type<tc>, window_params = [{transform_indices = @transform_0, window_bounds = array<i64: 1, 18, 16, 128>}, {pipeline_mode = #tpu.pipeline_mode<synchronous>, transform_indices = @transform_1, window_bounds = array<i64: 128, 128>}, {pipeline_mode = #tpu.pipeline_mode<synchronous>, transform_indices = @transform_2, window_bounds = array<i64: 1, 128>}, {pipeline_mode = #tpu.pipeline_mode<synchronous>, transform_indices = @transform_3, window_bounds = array<i64: 1, 128>}, {pipeline_mode = #tpu.pipeline_mode<synchronous>, transform_indices = @transform_4, window_bounds = array<i64: 1152, 128>}, {pipeline_mode = #tpu.pipeline_mode<synchronous>, transform_indices = @transform_5, window_bounds = array<i64: 1, 128>}, {pipeline_mode = #tpu.pipeline_mode<synchronous>, transform_indices = @transform_6, window_bounds = array<i64: 1, 128>}, {pipeline_mode = #tpu.pipeline_mode<synchronous>, transform_indices = @transform_7, window_bounds = array<i64: 128, 128>}, {pipeline_mode = #tpu.pipeline_mode<synchronous>, transform_indices = @transform_8, window_bounds = array<i64: 1, 128>}, {pipeline_mode = #tpu.pipeline_mode<synchronous>, transform_indices = @transform_9, window_bounds = array<i64: 1, 128>}, {transform_indices = @transform_10, window_bounds = array<i64: 1, 16, 16, 128>}]} {
    %c16_i32 = arith.constant 16 : i32
    %0 = arith.muli %arg1, %c16_i32 : i32
    %1 = tpu.assume_multiple %0, 16 : i32
    %c0 = arith.constant 0 : index
    %2 = arith.index_cast %1 : i32 to index
    %c0_0 = arith.constant 0 : index
    %c0_1 = arith.constant 0 : index
    %3 = vector.load %arg2[%c0, %2, %c0_0, %c0_1] : memref<1x18x16x128xbf16, #tpu.memory_space<vmem>>, vector<1x18x16x128xbf16>
    %4 = vector.shape_cast %3 : vector<1x18x16x128xbf16> to vector<18x16x128xbf16>
    %5 = vector.shape_cast %4 : vector<18x16x128xbf16> to vector<288x128xbf16>
    %c0_2 = arith.constant 0 : index
    %c0_3 = arith.constant 0 : index
    %6 = vector.load %arg3[%c0_2, %c0_3] : memref<128x128xbf16, #tpu.memory_space<vmem>>, vector<128x128xbf16>
    %cst = arith.constant dense<0.000000e+00> : vector<288x128xf32>
    %7 = tpu.matmul %5, %6, %cst {dimension_numbers = #tpu.dot_dimension_numbers<[1], [0], [0], [1], [0, 0, 1, 1], [], []>} : vector<288x128xbf16>, vector<128x128xbf16>, vector<288x128xf32> -> vector<288x128xf32>
    %c0_4 = arith.constant 0 : index
    %c0_5 = arith.constant 0 : index
    %8 = vector.load %arg4[%c0_4, %c0_5] : memref<1x128xf32, #tpu.memory_space<vmem>>, vector<1x128xf32>
    %9 = vector.broadcast %8 : vector<1x128xf32> to vector<288x128xf32>
    %10 = arith.mulf %7, %9 : vector<288x128xf32>
    %c0_6 = arith.constant 0 : index
    %c0_7 = arith.constant 0 : index
    %11 = vector.load %arg5[%c0_6, %c0_7] : memref<1x128xf32, #tpu.memory_space<vmem>>, vector<1x128xf32>
    %12 = vector.broadcast %11 : vector<1x128xf32> to vector<288x128xf32>
    %13 = arith.addf %10, %12 : vector<288x128xf32>
    %cst_8 = arith.constant 0.000000e+00 : f32
    %14 = vector.broadcast %cst_8 : f32 to vector<288x128xf32>
    %15 = arith.maximumf %13, %14 : vector<288x128xf32>
    %16 = arith.truncf %15 : vector<288x128xf32> to vector<288x128xbf16>
    %17 = vector.shape_cast %16 : vector<288x128xbf16> to vector<18x16x128xbf16>
    %c0_i32 = arith.constant 0 : i32
    %18 = arith.cmpi eq, %arg1, %c0_i32 : i32
    %19 = arith.extui %18 : i1 to i32
    %c0_i32_9 = arith.constant 0 : i32
    %20 = arith.cmpi ne, %19, %c0_i32_9 : i32
    scf.if %20 {
      %cst_71 = arith.constant 0.000000e+00 : bf16
      %84 = vector.broadcast %cst_71 : bf16 to vector<18x1x128xbf16>
      %c0_72 = arith.constant 0 : index
      %c7_73 = arith.constant 7 : index
      %c0_74 = arith.constant 0 : index
      %85 = vector.load %arg13[%c0_72, %c7_73, %c0_74] : memref<18x32x128xbf16, #tpu.memory_space<vmem>>, vector<18x1x128xbf16>
      tpu.vector_store %arg13[%c0_72, %c7_73, %c0_74], %84 {strides = array<i32>} : memref<18x32x128xbf16, #tpu.memory_space<vmem>>, vector<18x1x128xbf16>,
      %c0_75 = arith.constant 0 : index
      %c24 = arith.constant 24 : index
      %c0_76 = arith.constant 0 : index
      %86 = vector.load %arg13[%c0_75, %c24, %c0_76] : memref<18x32x128xbf16, #tpu.memory_space<vmem>>, vector<18x1x128xbf16>
      tpu.vector_store %arg13[%c0_75, %c24, %c0_76], %84 {strides = array<i32>} : memref<18x32x128xbf16, #tpu.memory_space<vmem>>, vector<18x1x128xbf16>,
    } else {
    }
    %c0_10 = arith.constant 0 : index
    %c8 = arith.constant 8 : index
    %c0_11 = arith.constant 0 : index
    %21 = vector.load %arg13[%c0_10, %c8, %c0_11] : memref<18x32x128xbf16, #tpu.memory_space<vmem>>, vector<18x16x128xbf16>
    tpu.vector_store %arg13[%c0_10, %c8, %c0_11], %17 {strides = array<i32>} : memref<18x32x128xbf16, #tpu.memory_space<vmem>>, vector<18x16x128xbf16>,
    %c0_i32_12 = arith.constant 0 : i32
    %22 = arith.cmpi eq, %arg1, %c0_i32_12 : i32
    %23 = arith.extui %22 : i1 to i32
    %c0_i32_13 = arith.constant 0 : i32
    %24 = arith.cmpi ne, %23, %c0_i32_13 : i32
    scf.if %24 {
      %cst_71 = arith.constant 0.000000e+00 : bf16
      %84 = vector.broadcast %cst_71 : bf16 to vector<1x32x128xbf16>
      %c0_72 = arith.constant 0 : index
      %c0_73 = arith.constant 0 : index
      %c0_74 = arith.constant 0 : index
      %85 = vector.load %arg13[%c0_72, %c0_73, %c0_74] : memref<18x32x128xbf16, #tpu.memory_space<vmem>>, vector<1x32x128xbf16>
      tpu.vector_store %arg13[%c0_72, %c0_73, %c0_74], %84 {strides = array<i32>} : memref<18x32x128xbf16, #tpu.memory_space<vmem>>, vector<1x32x128xbf16>,
    } else {
    }
    %c0_i32_14 = arith.constant 0 : i32
    %25 = arith.cmpi eq, %arg1, %c0_i32_14 : i32
    %26 = arith.extui %25 : i1 to i32
    %c0_i32_15 = arith.constant 0 : i32
    %27 = arith.cmpi ne, %26, %c0_i32_15 : i32
    scf.if %27 {
      %cst_71 = arith.constant 0.000000e+00 : bf16
      %84 = vector.broadcast %cst_71 : bf16 to vector<1x32x128xbf16>
      %c17 = arith.constant 17 : index
      %c0_72 = arith.constant 0 : index
      %c0_73 = arith.constant 0 : index
      %85 = vector.load %arg13[%c17, %c0_72, %c0_73] : memref<18x32x128xbf16, #tpu.memory_space<vmem>>, vector<1x32x128xbf16>
      tpu.vector_store %arg13[%c17, %c0_72, %c0_73], %84 {strides = array<i32>} : memref<18x32x128xbf16, #tpu.memory_space<vmem>>, vector<1x32x128xbf16>,
    } else {
    }
    %c0_16 = arith.constant 0 : index
    %c7 = arith.constant 7 : index
    %c0_17 = arith.constant 0 : index
    %28 = vector.load %arg13[%c0_16, %c7, %c0_17] : memref<18x32x128xbf16, #tpu.memory_space<vmem>>, vector<16x16x128xbf16>
    %29 = vector.shape_cast %28 : vector<16x16x128xbf16> to vector<256x128xbf16>
    %c0_18 = arith.constant 0 : index
    %c0_19 = arith.constant 0 : index
    %30 = vector.load %arg14[%c0_18, %c0_19] : memref<256x1152xbf16, #tpu.memory_space<vmem>>, vector<256x128xbf16>
    tpu.vector_store %arg14[%c0_18, %c0_19], %29 {strides = array<i32>} : memref<256x1152xbf16, #tpu.memory_space<vmem>>, vector<256x128xbf16>,
    %c0_20 = arith.constant 0 : index
    %c8_21 = arith.constant 8 : index
    %c0_22 = arith.constant 0 : index
    %31 = vector.load %arg13[%c0_20, %c8_21, %c0_22] : memref<18x32x128xbf16, #tpu.memory_space<vmem>>, vector<16x16x128xbf16>
    %32 = vector.shape_cast %31 : vector<16x16x128xbf16> to vector<256x128xbf16>
    %c0_23 = arith.constant 0 : index
    %c128 = arith.constant 128 : index
    %33 = vector.load %arg14[%c0_23, %c128] : memref<256x1152xbf16, #tpu.memory_space<vmem>>, vector<256x128xbf16>
    tpu.vector_store %arg14[%c0_23, %c128], %32 {strides = array<i32>} : memref<256x1152xbf16, #tpu.memory_space<vmem>>, vector<256x128xbf16>,
    %c0_24 = arith.constant 0 : index
    %c9 = arith.constant 9 : index
    %c0_25 = arith.constant 0 : index
    %34 = vector.load %arg13[%c0_24, %c9, %c0_25] : memref<18x32x128xbf16, #tpu.memory_space<vmem>>, vector<16x16x128xbf16>
    %35 = vector.shape_cast %34 : vector<16x16x128xbf16> to vector<256x128xbf16>
    %c0_26 = arith.constant 0 : index
    %c256 = arith.constant 256 : index
    %36 = vector.load %arg14[%c0_26, %c256] : memref<256x1152xbf16, #tpu.memory_space<vmem>>, vector<256x128xbf16>
    tpu.vector_store %arg14[%c0_26, %c256], %35 {strides = array<i32>} : memref<256x1152xbf16, #tpu.memory_space<vmem>>, vector<256x128xbf16>,
    %c1 = arith.constant 1 : index
    %c7_27 = arith.constant 7 : index
    %c0_28 = arith.constant 0 : index
    %37 = vector.load %arg13[%c1, %c7_27, %c0_28] : memref<18x32x128xbf16, #tpu.memory_space<vmem>>, vector<16x16x128xbf16>
    %38 = vector.shape_cast %37 : vector<16x16x128xbf16> to vector<256x128xbf16>
    %c0_29 = arith.constant 0 : index
    %c384 = arith.constant 384 : index
    %39 = vector.load %arg14[%c0_29, %c384] : memref<256x1152xbf16, #tpu.memory_space<vmem>>, vector<256x128xbf16>
    tpu.vector_store %arg14[%c0_29, %c384], %38 {strides = array<i32>} : memref<256x1152xbf16, #tpu.memory_space<vmem>>, vector<256x128xbf16>,
    %c1_30 = arith.constant 1 : index
    %c8_31 = arith.constant 8 : index
    %c0_32 = arith.constant 0 : index
    %40 = vector.load %arg13[%c1_30, %c8_31, %c0_32] : memref<18x32x128xbf16, #tpu.memory_space<vmem>>, vector<16x16x128xbf16>
    %41 = vector.shape_cast %40 : vector<16x16x128xbf16> to vector<256x128xbf16>
    %c0_33 = arith.constant 0 : index
    %c512 = arith.constant 512 : index
    %42 = vector.load %arg14[%c0_33, %c512] : memref<256x1152xbf16, #tpu.memory_space<vmem>>, vector<256x128xbf16>
    tpu.vector_store %arg14[%c0_33, %c512], %41 {strides = array<i32>} : memref<256x1152xbf16, #tpu.memory_space<vmem>>, vector<256x128xbf16>,
    %c1_34 = arith.constant 1 : index
    %c9_35 = arith.constant 9 : index
    %c0_36 = arith.constant 0 : index
    %43 = vector.load %arg13[%c1_34, %c9_35, %c0_36] : memref<18x32x128xbf16, #tpu.memory_space<vmem>>, vector<16x16x128xbf16>
    %44 = vector.shape_cast %43 : vector<16x16x128xbf16> to vector<256x128xbf16>
    %c0_37 = arith.constant 0 : index
    %c640 = arith.constant 640 : index
    %45 = vector.load %arg14[%c0_37, %c640] : memref<256x1152xbf16, #tpu.memory_space<vmem>>, vector<256x128xbf16>
    tpu.vector_store %arg14[%c0_37, %c640], %44 {strides = array<i32>} : memref<256x1152xbf16, #tpu.memory_space<vmem>>, vector<256x128xbf16>,
    %c2 = arith.constant 2 : index
    %c7_38 = arith.constant 7 : index
    %c0_39 = arith.constant 0 : index
    %46 = vector.load %arg13[%c2, %c7_38, %c0_39] : memref<18x32x128xbf16, #tpu.memory_space<vmem>>, vector<16x16x128xbf16>
    %47 = vector.shape_cast %46 : vector<16x16x128xbf16> to vector<256x128xbf16>
    %c0_40 = arith.constant 0 : index
    %c768 = arith.constant 768 : index
    %48 = vector.load %arg14[%c0_40, %c768] : memref<256x1152xbf16, #tpu.memory_space<vmem>>, vector<256x128xbf16>
    tpu.vector_store %arg14[%c0_40, %c768], %47 {strides = array<i32>} : memref<256x1152xbf16, #tpu.memory_space<vmem>>, vector<256x128xbf16>,
    %c2_41 = arith.constant 2 : index
    %c8_42 = arith.constant 8 : index
    %c0_43 = arith.constant 0 : index
    %49 = vector.load %arg13[%c2_41, %c8_42, %c0_43] : memref<18x32x128xbf16, #tpu.memory_space<vmem>>, vector<16x16x128xbf16>
    %50 = vector.shape_cast %49 : vector<16x16x128xbf16> to vector<256x128xbf16>
    %c0_44 = arith.constant 0 : index
    %c896 = arith.constant 896 : index
    %51 = vector.load %arg14[%c0_44, %c896] : memref<256x1152xbf16, #tpu.memory_space<vmem>>, vector<256x128xbf16>
    tpu.vector_store %arg14[%c0_44, %c896], %50 {strides = array<i32>} : memref<256x1152xbf16, #tpu.memory_space<vmem>>, vector<256x128xbf16>,
    %c2_45 = arith.constant 2 : index
    %c9_46 = arith.constant 9 : index
    %c0_47 = arith.constant 0 : index
    %52 = vector.load %arg13[%c2_45, %c9_46, %c0_47] : memref<18x32x128xbf16, #tpu.memory_space<vmem>>, vector<16x16x128xbf16>
    %53 = vector.shape_cast %52 : vector<16x16x128xbf16> to vector<256x128xbf16>
    %c0_48 = arith.constant 0 : index
    %c1024 = arith.constant 1024 : index
    %54 = vector.load %arg14[%c0_48, %c1024] : memref<256x1152xbf16, #tpu.memory_space<vmem>>, vector<256x128xbf16>
    tpu.vector_store %arg14[%c0_48, %c1024], %53 {strides = array<i32>} : memref<256x1152xbf16, #tpu.memory_space<vmem>>, vector<256x128xbf16>,
    %c0_49 = arith.constant 0 : index
    %c0_50 = arith.constant 0 : index
    %55 = vector.load %arg14[%c0_49, %c0_50] : memref<256x1152xbf16, #tpu.memory_space<vmem>>, vector<256x1152xbf16>
    %c0_51 = arith.constant 0 : index
    %c0_52 = arith.constant 0 : index
    %56 = vector.load %arg6[%c0_51, %c0_52] : memref<1152x128xbf16, #tpu.memory_space<vmem>>, vector<1152x128xbf16>
    %cst_53 = arith.constant dense<0.000000e+00> : vector<256x128xf32>
    %57 = tpu.matmul %55, %56, %cst_53 {dimension_numbers = #tpu.dot_dimension_numbers<[1], [0], [0], [1], [0, 0, 1, 1], [], []>} : vector<256x1152xbf16>, vector<1152x128xbf16>, vector<256x128xf32> -> vector<256x128xf32>
    %c0_54 = arith.constant 0 : index
    %c0_55 = arith.constant 0 : index
    %58 = vector.load %arg7[%c0_54, %c0_55] : memref<1x128xf32, #tpu.memory_space<vmem>>, vector<1x128xf32>
    %59 = vector.broadcast %58 : vector<1x128xf32> to vector<256x128xf32>
    %60 = arith.mulf %57, %59 : vector<256x128xf32>
    %c0_56 = arith.constant 0 : index
    %c0_57 = arith.constant 0 : index
    %61 = vector.load %arg8[%c0_56, %c0_57] : memref<1x128xf32, #tpu.memory_space<vmem>>, vector<1x128xf32>
    %62 = vector.broadcast %61 : vector<1x128xf32> to vector<256x128xf32>
    %63 = arith.addf %60, %62 : vector<256x128xf32>
    %cst_58 = arith.constant 0.000000e+00 : f32
    %64 = vector.broadcast %cst_58 : f32 to vector<256x128xf32>
    %65 = arith.maximumf %63, %64 : vector<256x128xf32>
    %66 = arith.truncf %65 : vector<256x128xf32> to vector<256x128xbf16>
    %c0_59 = arith.constant 0 : index
    %c0_60 = arith.constant 0 : index
    %67 = vector.load %arg9[%c0_59, %c0_60] : memref<128x128xbf16, #tpu.memory_space<vmem>>, vector<128x128xbf16>
    %cst_61 = arith.constant dense<0.000000e+00> : vector<256x128xf32>
    %68 = tpu.matmul %66, %67, %cst_61 {dimension_numbers = #tpu.dot_dimension_numbers<[1], [0], [0], [1], [0, 0, 1, 1], [], []>} : vector<256x128xbf16>, vector<128x128xbf16>, vector<256x128xf32> -> vector<256x128xf32>
    %c0_62 = arith.constant 0 : index
    %c0_63 = arith.constant 0 : index
    %69 = vector.load %arg10[%c0_62, %c0_63] : memref<1x128xf32, #tpu.memory_space<vmem>>, vector<1x128xf32>
    %70 = vector.broadcast %69 : vector<1x128xf32> to vector<256x128xf32>
    %71 = arith.mulf %68, %70 : vector<256x128xf32>
    %c0_64 = arith.constant 0 : index
    %c0_65 = arith.constant 0 : index
    %72 = vector.load %arg11[%c0_64, %c0_65] : memref<1x128xf32, #tpu.memory_space<vmem>>, vector<1x128xf32>
    %73 = vector.broadcast %72 : vector<1x128xf32> to vector<256x128xf32>
    %74 = arith.addf %71, %73 : vector<256x128xf32>
    %75 = vector.extract_strided_slice %4 {offsets = [1, 0, 0], sizes = [16, 16, 128], strides = [1, 1, 1]} : vector<18x16x128xbf16> to vector<16x16x128xbf16>
    %76 = arith.extf %75 : vector<16x16x128xbf16> to vector<16x16x128xf32>
    %77 = vector.shape_cast %74 : vector<256x128xf32> to vector<16x16x128xf32>
    %78 = arith.addf %77, %76 : vector<16x16x128xf32>
    %cst_66 = arith.constant 0.000000e+00 : f32
    %79 = vector.broadcast %cst_66 : f32 to vector<16x16x128xf32>
    %80 = arith.maximumf %78, %79 : vector<16x16x128xf32>
    %c0_67 = arith.constant 0 : index
    %c0_68 = arith.constant 0 : index
    %c0_69 = arith.constant 0 : index
    %c0_70 = arith.constant 0 : index
    %81 = vector.load %arg12[%c0_67, %c0_68, %c0_69, %c0_70] : memref<1x16x16x128xf32, #tpu.memory_space<vmem>>, vector<1x16x16x128xf32>
    %82 = vector.shape_cast %81 : vector<1x16x16x128xf32> to vector<16x16x128xf32>
    %83 = vector.shape_cast %80 : vector<16x16x128xf32> to vector<1x16x16x128xf32>
    tpu.vector_store %arg12[%c0_67, %c0_68, %c0_69, %c0_70], %83 {strides = array<i32>} : memref<1x16x16x128xf32, #tpu.memory_space<vmem>>, vector<1x16x16x128xf32>,
    return
  }
  func.func @transform_0(%arg0: i32, %arg1: i32) -> (i32, i32, i32, i32) {
    %c0_i32 = arith.constant 0 : i32
    %c0_i32_0 = arith.constant 0 : i32
    %c0_i32_1 = arith.constant 0 : i32
    %c0_i32_2 = arith.constant 0 : i32
    return %arg0, %c0_i32, %c0_i32_0, %c0_i32_1 : i32, i32, i32, i32
  }
  func.func @transform_1(%arg0: i32, %arg1: i32) -> (i32, i32) {
    %c0_i32 = arith.constant 0 : i32
    %c0_i32_0 = arith.constant 0 : i32
    %c0_i32_1 = arith.constant 0 : i32
    return %c0_i32, %c0_i32_0 : i32, i32
  }
  func.func @transform_2(%arg0: i32, %arg1: i32) -> (i32, i32) {
    %c0_i32 = arith.constant 0 : i32
    %c0_i32_0 = arith.constant 0 : i32
    %c0_i32_1 = arith.constant 0 : i32
    return %c0_i32, %c0_i32_0 : i32, i32
  }
  func.func @transform_3(%arg0: i32, %arg1: i32) -> (i32, i32) {
    %c0_i32 = arith.constant 0 : i32
    %c0_i32_0 = arith.constant 0 : i32
    %c0_i32_1 = arith.constant 0 : i32
    return %c0_i32, %c0_i32_0 : i32, i32
  }
  func.func @transform_4(%arg0: i32, %arg1: i32) -> (i32, i32) {
    %c0_i32 = arith.constant 0 : i32
    %c0_i32_0 = arith.constant 0 : i32
    %c0_i32_1 = arith.constant 0 : i32
    return %c0_i32, %c0_i32_0 : i32, i32
  }
  func.func @transform_5(%arg0: i32, %arg1: i32) -> (i32, i32) {
    %c0_i32 = arith.constant 0 : i32
    %c0_i32_0 = arith.constant 0 : i32
    %c0_i32_1 = arith.constant 0 : i32
    return %c0_i32, %c0_i32_0 : i32, i32
  }
  func.func @transform_6(%arg0: i32, %arg1: i32) -> (i32, i32) {
    %c0_i32 = arith.constant 0 : i32
    %c0_i32_0 = arith.constant 0 : i32
    %c0_i32_1 = arith.constant 0 : i32
    return %c0_i32, %c0_i32_0 : i32, i32
  }
  func.func @transform_7(%arg0: i32, %arg1: i32) -> (i32, i32) {
    %c0_i32 = arith.constant 0 : i32
    %c0_i32_0 = arith.constant 0 : i32
    %c0_i32_1 = arith.constant 0 : i32
    return %c0_i32, %c0_i32_0 : i32, i32
  }
  func.func @transform_8(%arg0: i32, %arg1: i32) -> (i32, i32) {
    %c0_i32 = arith.constant 0 : i32
    %c0_i32_0 = arith.constant 0 : i32
    %c0_i32_1 = arith.constant 0 : i32
    return %c0_i32, %c0_i32_0 : i32, i32
  }
  func.func @transform_9(%arg0: i32, %arg1: i32) -> (i32, i32) {
    %c0_i32 = arith.constant 0 : i32
    %c0_i32_0 = arith.constant 0 : i32
    %c0_i32_1 = arith.constant 0 : i32
    return %c0_i32, %c0_i32_0 : i32, i32
  }
  func.func @transform_10(%arg0: i32, %arg1: i32) -> (i32, i32, i32, i32) {
    %c0_i32 = arith.constant 0 : i32
    %c0_i32_0 = arith.constant 0 : i32
    %c0_i32_1 = arith.constant 0 : i32
    return %arg0, %arg1, %c0_i32, %c0_i32_0 : i32, i32, i32, i32
  }
}

</mosaic_0001>

<llo_original>
// kernel: tpu_custom_call.1
$region0: #{tpu_custom_call.1}
  #allocation0 [shape = 'u32[]', space=smem, size = 0x4, offset = 0x4, fixed_abs, tag = 'smem constant byte address 0x4 - core index']
  #allocation1 [shape = 'u32[144,128]{1,0:T(1,128)}', space=vmem, size = 0x12000, scoped, tag = 'internal scratch']
  #allocation2 [shape = 'bf16[18,32,128]{2,1,0:T(16,128)(2,1)}', space=vmem, size = 0x24000, scoped, tag = 'scratch operand']
  #allocation3 [shape = 'bf16[256,1152]{1,0:T(16,128)(2,1)}', space=vmem, size = 0x90000, scoped, tag = 'scratch operand']
  %s0 = inlined_call_operand.hbm [shape: bf16[2,18,16,128], index: 0, kind: input, shape index: {}]
  %s1 = inlined_call_operand.hbm [shape: bf16[128,128], index: 1, kind: input, shape index: {}]
  %s2 = inlined_call_operand.vmem [shape: f32[1,128], index: 2, kind: input, shape index: {}]
  %s3 = inlined_call_operand.vmem [shape: f32[1,128], index: 3, kind: input, shape index: {}]
  %s4 = inlined_call_operand.hbm [shape: bf16[1152,128], index: 4, kind: input, shape index: {}]
  %s5 = inlined_call_operand.vmem [shape: f32[1,128], index: 5, kind: input, shape index: {}]
  %s6 = inlined_call_operand.vmem [shape: f32[1,128], index: 6, kind: input, shape index: {}]
  %s7 = inlined_call_operand.hbm [shape: bf16[128,128], index: 7, kind: input, shape index: {}]
  %s8 = inlined_call_operand.vmem [shape: f32[1,128], index: 8, kind: input, shape index: {}]
  %s9 = inlined_call_operand.vmem [shape: f32[1,128], index: 9, kind: input, shape index: {}]
  %s10 = inlined_call_operand.hbm [shape: f32[2,16,16,128], index: 10, kind: output, shape index: {}]
  %s11 = sld [smem:[#allocation0]]
  $region97: #{tpu_custom_call.1} parent=0
    _
  %s13 = ssub.s32 1, %s11
  %s14 = scalar_select 0, %s13, %s11
  $region1: #{tpu_custom_call.1} parent=0
    #allocation4 [shape = 'u8[147456]{0}', space=vmem, size = 0x24000, scoped, tag = 'input window, operand 0']
    #allocation5 [shape = 's32[2]{0}', space=sflag, size = 0x8, scoped, tag = 'scoped memory for tpu_custom_call.1']
    #allocation6 [shape = 's32[2]{0}', space=sflag, size = 0x8, scoped, tag = 'scoped memory for tpu_custom_call.1']
    #allocation7 [shape = 'u8[32768]{0}', space=vmem, size = 0x8000, scoped, tag = 'input window, operand 1, single buffered']
    #allocation8 [shape = 's32[1]{0}', space=sflag, size = 0x4, scoped, tag = 'scoped memory for tpu_custom_call.1']
    #allocation9 [shape = 'u8[294912]{0}', space=vmem, size = 0x48000, scoped, tag = 'input window, operand 4, single buffered']
    #allocation10 [shape = 'u8[32768]{0}', space=vmem, size = 0x8000, scoped, tag = 'input window, operand 7, single buffered']
    #allocation11 [shape = 's32[1]{0}', space=sflag, size = 0x4, scoped, tag = 'scoped memory for tpu_custom_call.1']
    #allocation12 [shape = 'u8[262144]{0}', space=vmem, size = 0x40000, scoped, tag = 'output window, operand 0']
    %15 = vsyncpa [#allocation5], 0
    %s16 = scalar_lea.sflag [#allocation5], 1
    %17 = vsyncpa %s16, 0
    %18 = vsyncpa [#allocation8], 0
    %19 = vsyncpa [#allocation11], 0
    %20 = vsyncpa [#allocation6], 0
    %s21 = scalar_lea.sflag [#allocation6], 1
    %22 = vsyncpa %s21, 0
    loop: start=0, step=1, limit=4
    $region2: #{tpu_custom_call.1} parent=1 // loop_pre_header
      _
    $region3: #{tpu_custom_call.1} parent=1 // loop_header
      %s24 = sphi 0, %s28
      %p25 = scmp.ge.s32.totalorder %s24, 4
      %s31 = sphi 0, %s43
      %s32 = sphi 0, %s39
      %s33 = sphi 0, %s31
      %s34 = sphi 0, %s32
      %s35 = sphi 0, %s33
      %s36 = sphi 0, %s34
      %s46 = sphi 0, %s48
      %s49 = sphi 0, %s46
      %s50 = sphi 0, %s49
      %s66 = sphi 0, %s50
      %s70 = sphi 0, %s70
      %s72 = sphi 0, %s70
      %s73 = sphi 0, %s72
      %s87 = sphi 0, %s73
      %s91 = sphi 0, %s91
      %s93 = sphi 0, %s91
      %s94 = sphi 0, %s93
      %s108 = sphi 0, %s94
      %s112 = sphi 0, %s112
      %s114 = sphi 0, %s112
      %s115 = sphi 0, %s114
      %s129 = sphi 0, %s115
      %s133 = sphi 0, %s133
      %s135 = sphi 0, %s133
      %s136 = sphi 0, %s135
      %s150 = sphi 0, %s136
      %s154 = sphi 0, %s154
      %s156 = sphi 0, %s154
      %s157 = sphi 0, %s156
      %s171 = sphi 0, %s157
      %s175 = sphi 0, %s175
      %s177 = sphi 0, %s175
      %s178 = sphi 0, %s177
      %s192 = sphi 0, %s178
      %s196 = sphi 0, %s196
      %s198 = sphi 0, %s196
      %s199 = sphi 0, %s198
      %s213 = sphi 0, %s199
      %s217 = sphi 0, %s217
      %s219 = sphi 0, %s217
      %s220 = sphi 0, %s219
      %s234 = sphi 0, %s220
      %s238 = sphi 0, %s238
      %s240 = sphi 0, %s238
      %s241 = sphi 0, %s240
      %s255 = sphi 0, %s241
      %s263 = sphi 0, %s265
      %s266 = sphi 0, %s263
      %s267 = sphi 0, %s266
      %s283 = sphi 0, %s267
    $region4: #{tpu_custom_call.1} parent=1 // loop_header_branch
      %27 = sbr.rel (%p25) target = $region8
    $region5: #{tpu_custom_call.1} parent=1 // loop_body
      %s29 = ssub.s32 %s24, 1
      %s30 = ssub.s32 %s24, 2
      %s37 = sadd.s32 1, %s32
      %p38 = scmp.ge.s32.totalorder %s37, 1
      %s39 = scalar_select %p38, 0, %s37
      %s40 = sadd.s32 1, %s31
      %s41 = scalar_select %p38, %s40, %s31
      %p42 = scmp.ge.s32.totalorder %s41, 2
      %s43 = scalar_select %p42, 0, %s41
      %s44 = ssub.s32 %s31, %s43
      %p45 = scmp.eq.s32.totalorder %s44, 0
      %s47 = sadd.s32 %s46, 1
      %s48 = scalar_select %p45, %s46, %s47
      %p51 = pneg %p45
      %p52 = scmp.eq.s32.totalorder %s24, 1
      %p53 = por %p51, %p52
      %p54 = scmp.ne.s32.totalorder %s46, %s49
      %p55 = scmp.eq.s32.totalorder %s24, 0
      %p56 = por %p54, %p55
      %p57 = scmp.ne.s32.totalorder %s46, %s49
      %p58 = scmp.eq.s32.totalorder %s29, 1
      %p59 = por %p57, %p58
      %p60 = scmp.ne.s32.totalorder %s49, %s50
      %p61 = scmp.eq.s32.totalorder %s29, 0
      %p62 = por %p60, %p61
      %p63 = scmp.ne.s32.totalorder %s49, %s50
      %p64 = scmp.eq.s32.totalorder %s30, 1
      %p65 = por %p63, %p64
      %p67 = scmp.ne.s32.totalorder %s50, %s66
      %p68 = scmp.eq.s32.totalorder %s30, 0
      %p69 = por %p67, %p68
      %s71 = sadd.s32 %s70, 1
      %p74 = scmp.eq.s32.totalorder %s24, 1
      %p75 = scmp.ne.s32.totalorder %s70, %s72
      %p76 = scmp.eq.s32.totalorder %s24, 0
      %p77 = por %p75, %p76
      %p78 = scmp.ne.s32.totalorder %s70, %s72
      %p79 = scmp.eq.s32.totalorder %s29, 1
      %p80 = por %p78, %p79
      %p81 = scmp.ne.s32.totalorder %s72, %s73
      %p82 = scmp.eq.s32.totalorder %s29, 0
      %p83 = por %p81, %p82
      %p84 = scmp.ne.s32.totalorder %s72, %s73
      %p85 = scmp.eq.s32.totalorder %s30, 1
      %p86 = por %p84, %p85
      %p88 = scmp.ne.s32.totalorder %s73, %s87
      %p89 = scmp.eq.s32.totalorder %s30, 0
      %p90 = por %p88, %p89
      %s92 = sadd.s32 %s91, 1
      %p95 = scmp.eq.s32.totalorder %s24, 1
      %p96 = scmp.ne.s32.totalorder %s91, %s93
      %p97 = scmp.eq.s32.totalorder %s24, 0
      %p98 = por %p96, %p97
      %p99 = scmp.ne.s32.totalorder %s91, %s93
      %p100 = scmp.eq.s32.totalorder %s29, 1
      %p101 = por %p99, %p100
      %p102 = scmp.ne.s32.totalorder %s93, %s94
      %p103 = scmp.eq.s32.totalorder %s29, 0
      %p104 = por %p102, %p103
      %p105 = scmp.ne.s32.totalorder %s93, %s94
      %p106 = scmp.eq.s32.totalorder %s30, 1
      %p107 = por %p105, %p106
      %p109 = scmp.ne.s32.totalorder %s94, %s108
      %p110 = scmp.eq.s32.totalorder %s30, 0
      %p111 = por %p109, %p110
      %s113 = sadd.s32 %s112, 1
      %p116 = scmp.eq.s32.totalorder %s24, 1
      %p117 = scmp.ne.s32.totalorder %s112, %s114
      %p118 = scmp.eq.s32.totalorder %s24, 0
      %p119 = por %p117, %p118
      %p120 = scmp.ne.s32.totalorder %s112, %s114
      %p121 = scmp.eq.s32.totalorder %s29, 1
      %p122 = por %p120, %p121
      %p123 = scmp.ne.s32.totalorder %s114, %s115
      %p124 = scmp.eq.s32.totalorder %s29, 0
      %p125 = por %p123, %p124
      %p126 = scmp.ne.s32.totalorder %s114, %s115
      %p127 = scmp.eq.s32.totalorder %s30, 1
      %p128 = por %p126, %p127
      %p130 = scmp.ne.s32.totalorder %s115, %s129
      %p131 = scmp.eq.s32.totalorder %s30, 0
      %p132 = por %p130, %p131
      %s134 = sadd.s32 %s133, 1
      %p137 = scmp.eq.s32.totalorder %s24, 1
      %p138 = scmp.ne.s32.totalorder %s133, %s135
      %p139 = scmp.eq.s32.totalorder %s24, 0
      %p140 = por %p138, %p139
      %p141 = scmp.ne.s32.totalorder %s133, %s135
      %p142 = scmp.eq.s32.totalorder %s29, 1
      %p143 = por %p141, %p142
      %p144 = scmp.ne.s32.totalorder %s135, %s136
      %p145 = scmp.eq.s32.totalorder %s29, 0
      %p146 = por %p144, %p145
      %p147 = scmp.ne.s32.totalorder %s135, %s136
      %p148 = scmp.eq.s32.totalorder %s30, 1
      %p149 = por %p147, %p148
      %p151 = scmp.ne.s32.totalorder %s136, %s150
      %p152 = scmp.eq.s32.totalorder %s30, 0
      %p153 = por %p151, %p152
      %s155 = sadd.s32 %s154, 1
      %p158 = scmp.eq.s32.totalorder %s24, 1
      %p159 = scmp.ne.s32.totalorder %s154, %s156
      %p160 = scmp.eq.s32.totalorder %s24, 0
      %p161 = por %p159, %p160
      %p162 = scmp.ne.s32.totalorder %s154, %s156
      %p163 = scmp.eq.s32.totalorder %s29, 1
      %p164 = por %p162, %p163
      %p165 = scmp.ne.s32.totalorder %s156, %s157
      %p166 = scmp.eq.s32.totalorder %s29, 0
      %p167 = por %p165, %p166
      %p168 = scmp.ne.s32.totalorder %s156, %s157
      %p169 = scmp.eq.s32.totalorder %s30, 1
      %p170 = por %p168, %p169
      %p172 = scmp.ne.s32.totalorder %s157, %s171
      %p173 = scmp.eq.s32.totalorder %s30, 0
      %p174 = por %p172, %p173
      %s176 = sadd.s32 %s175, 1
      %p179 = scmp.eq.s32.totalorder %s24, 1
      %p180 = scmp.ne.s32.totalorder %s175, %s177
      %p181 = scmp.eq.s32.totalorder %s24, 0
      %p182 = por %p180, %p181
      %p183 = scmp.ne.s32.totalorder %s175, %s177
      %p184 = scmp.eq.s32.totalorder %s29, 1
      %p185 = por %p183, %p184
      %p186 = scmp.ne.s32.totalorder %s177, %s178
      %p187 = scmp.eq.s32.totalorder %s29, 0
      %p188 = por %p186, %p187
      %p189 = scmp.ne.s32.totalorder %s177, %s178
      %p190 = scmp.eq.s32.totalorder %s30, 1
      %p191 = por %p189, %p190
      %p193 = scmp.ne.s32.totalorder %s178, %s192
      %p194 = scmp.eq.s32.totalorder %s30, 0
      %p195 = por %p193, %p194
      %s197 = sadd.s32 %s196, 1
      %p200 = scmp.eq.s32.totalorder %s24, 1
      %p201 = scmp.ne.s32.totalorder %s196, %s198
      %p202 = scmp.eq.s32.totalorder %s24, 0
      %p203 = por %p201, %p202
      %p204 = scmp.ne.s32.totalorder %s196, %s198
      %p205 = scmp.eq.s32.totalorder %s29, 1
      %p206 = por %p204, %p205
      %p207 = scmp.ne.s32.totalorder %s198, %s199
      %p208 = scmp.eq.s32.totalorder %s29, 0
      %p209 = por %p207, %p208
      %p210 = scmp.ne.s32.totalorder %s198, %s199
      %p211 = scmp.eq.s32.totalorder %s30, 1
      %p212 = por %p210, %p211
      %p214 = scmp.ne.s32.totalorder %s199, %s213
      %p215 = scmp.eq.s32.totalorder %s30, 0
      %p216 = por %p214, %p215
      %s218 = sadd.s32 %s217, 1
      %p221 = scmp.eq.s32.totalorder %s24, 1
      %p222 = scmp.ne.s32.totalorder %s217, %s219
      %p223 = scmp.eq.s32.totalorder %s24, 0
      %p224 = por %p222, %p223
      %p225 = scmp.ne.s32.totalorder %s217, %s219
      %p226 = scmp.eq.s32.totalorder %s29, 1
      %p227 = por %p225, %p226
      %p228 = scmp.ne.s32.totalorder %s219, %s220
      %p229 = scmp.eq.s32.totalorder %s29, 0
      %p230 = por %p228, %p229
      %p231 = scmp.ne.s32.totalorder %s219, %s220
      %p232 = scmp.eq.s32.totalorder %s30, 1
      %p233 = por %p231, %p232
      %p235 = scmp.ne.s32.totalorder %s220, %s234
      %p236 = scmp.eq.s32.totalorder %s30, 0
      %p237 = por %p235, %p236
      %s239 = sadd.s32 %s238, 1
      %p242 = scmp.eq.s32.totalorder %s24, 1
      %p243 = scmp.ne.s32.totalorder %s238, %s240
      %p244 = scmp.eq.s32.totalorder %s24, 0
      %p245 = por %p243, %p244
      %p246 = scmp.ne.s32.totalorder %s238, %s240
      %p247 = scmp.eq.s32.totalorder %s29, 1
      %p248 = por %p246, %p247
      %p249 = scmp.ne.s32.totalorder %s240, %s241
      %p250 = scmp.eq.s32.totalorder %s29, 0
      %p251 = por %p249, %p250
      %p252 = scmp.ne.s32.totalorder %s240, %s241
      %p253 = scmp.eq.s32.totalorder %s30, 1
      %p254 = por %p252, %p253
      %p256 = scmp.ne.s32.totalorder %s241, %s255
      %p257 = scmp.eq.s32.totalorder %s30, 0
      %p258 = por %p256, %p257
      %s259 = ssub.s32 %s31, %s43
      %s260 = ssub.s32 %s32, %s39
      %s261 = sor.u32 %s259, %s260
      %p262 = scmp.eq.s32.totalorder %s261, 0
      %s264 = sadd.s32 %s263, 1
      %s265 = scalar_select %p262, %s263, %s264
      %p268 = pneg %p262
      %p269 = scmp.eq.s32.totalorder %s24, 1
      %p270 = por %p268, %p269
      %p271 = scmp.ne.s32.totalorder %s263, %s266
      %p272 = scmp.eq.s32.totalorder %s24, 0
      %p273 = por %p271, %p272
      %p274 = scmp.ne.s32.totalorder %s263, %s266
      %p275 = scmp.eq.s32.totalorder %s29, 1
      %p276 = por %p274, %p275
      %p277 = scmp.ne.s32.totalorder %s266, %s267
      %p278 = scmp.eq.s32.totalorder %s29, 0
      %p279 = por %p277, %p278
      %p280 = scmp.ne.s32.totalorder %s266, %s267
      %p281 = scmp.eq.s32.totalorder %s30, 1
      %p282 = por %p280, %p281
      %p284 = scmp.ne.s32.totalorder %s267, %s283
      %p285 = scmp.eq.s32.totalorder %s30, 0
      %p286 = por %p284, %p285
      %p287 = scmp.le.s32.totalorder 1, %s24
      %p288 = scmp.lt.s32.totalorder %s24, 3
      %p289 = pnand %p287, %p288
      %p290 = pneg %p289
      // Predicated region
      $region9: #{tpu_custom_call.1} parent=5 // pred_check
        _
      $region10: #{tpu_custom_call.1} parent=5 // pred_check_branch
        %292 = sbr.rel (%p289) target = $region12
      $region11: #{tpu_custom_call.1} parent=5 // pred_region
        %s293 = ssub.s32 %s24, 1
        // Predicated region
        $region13: #{tpu_custom_call.1} parent=11 // pred_check
          %p294 = pneg %p83
        $region14: #{tpu_custom_call.1} parent=11 // pred_check_branch
          %296 = sbr.rel (%p294) target = $region16
        $region15: #{tpu_custom_call.1} parent=11 // pred_region
          %s298 = ssub.s32 1024, 1024
          %299 = vsyncadd [#allocation8], %s298
          %s300 = sshll.u32 [#allocation7], 4
          %s301 = int_to_ptr.vmem [resolvable:$true] %s300
          %306 = dma.hbm_to_vmem [thread:$0]  %s1, 1024, %s301, [#allocation8], 64, 64, 4
        $region16: #{tpu_custom_call.1} parent=11 // pred_fallthru
          _
        // Predicated region
        $region17: #{tpu_custom_call.1} parent=11 // pred_check
          %p307 = pneg %p104
        $region18: #{tpu_custom_call.1} parent=11 // pred_check_branch
          %309 = sbr.rel (%p307) target = $region20
        $region19: #{tpu_custom_call.1} parent=11 // pred_region
          _
        $region20: #{tpu_custom_call.1} parent=11 // pred_fallthru
          _
        // Predicated region
        $region21: #{tpu_custom_call.1} parent=11 // pred_check
          %p310 = pneg %p125
        $region22: #{tpu_custom_call.1} parent=11 // pred_check_branch
          %312 = sbr.rel (%p310) target = $region24
        $region23: #{tpu_custom_call.1} parent=11 // pred_region
          _
        $region24: #{tpu_custom_call.1} parent=11 // pred_fallthru
          _
        // Predicated region
        $region25: #{tpu_custom_call.1} parent=11 // pred_check
          %p313 = pneg %p146
        $region26: #{tpu_custom_call.1} parent=11 // pred_check_branch
          %315 = sbr.rel (%p313) target = $region28
        $region27: #{tpu_custom_call.1} parent=11 // pred_region
          %s317 = ssub.s32 9216, 9216
          %318 = vsyncadd [#allocation8], %s317
          %s319 = sshll.u32 [#allocation9], 4
          %s320 = int_to_ptr.vmem [resolvable:$true] %s319
          %325 = dma.hbm_to_vmem [thread:$0]  %s4, 9216, %s320, [#allocation8], 64, 64, 4
        $region28: #{tpu_custom_call.1} parent=11 // pred_fallthru
          _
        // Predicated region
        $region29: #{tpu_custom_call.1} parent=11 // pred_check
          %p326 = pneg %p167
        $region30: #{tpu_custom_call.1} parent=11 // pred_check_branch
          %328 = sbr.rel (%p326) target = $region32
        $region31: #{tpu_custom_call.1} parent=11 // pred_region
          _
        $region32: #{tpu_custom_call.1} parent=11 // pred_fallthru
          _
        // Predicated region
        $region33: #{tpu_custom_call.1} parent=11 // pred_check
          %p329 = pneg %p188
        $region34: #{tpu_custom_call.1} parent=11 // pred_check_branch
          %331 = sbr.rel (%p329) target = $region36
        $region35: #{tpu_custom_call.1} parent=11 // pred_region
          _
        $region36: #{tpu_custom_call.1} parent=11 // pred_fallthru
          _
        // Predicated region
        $region37: #{tpu_custom_call.1} parent=11 // pred_check
          %p332 = pneg %p209
        $region38: #{tpu_custom_call.1} parent=11 // pred_check_branch
          %334 = sbr.rel (%p332) target = $region40
        $region39: #{tpu_custom_call.1} parent=11 // pred_region
          %s336 = ssub.s32 1024, 1024
          %337 = vsyncadd [#allocation11], %s336
          %s338 = sshll.u32 [#allocation10], 4
          %s339 = int_to_ptr.vmem [resolvable:$true] %s338
          %344 = dma.hbm_to_vmem [thread:$0]  %s7, 1024, %s339, [#allocation11], 64, 64, 4
        $region40: #{tpu_custom_call.1} parent=11 // pred_fallthru
          _
        // Predicated region
        $region41: #{tpu_custom_call.1} parent=11 // pred_check
          %p345 = pneg %p230
        $region42: #{tpu_custom_call.1} parent=11 // pred_check_branch
          %347 = sbr.rel (%p345) target = $region44
        $region43: #{tpu_custom_call.1} parent=11 // pred_region
          _
        $region44: #{tpu_custom_call.1} parent=11 // pred_fallthru
          _
        // Predicated region
        $region45: #{tpu_custom_call.1} parent=11 // pred_check
          %p348 = pneg %p251
        $region46: #{tpu_custom_call.1} parent=11 // pred_check_branch
          %350 = sbr.rel (%p348) target = $region48
        $region47: #{tpu_custom_call.1} parent=11 // pred_region
          _
        $region48: #{tpu_custom_call.1} parent=11 // pred_fallthru
          _
      $region12: #{tpu_custom_call.1} parent=5 // pred_fallthru
        _
      %p351 = scmp.lt.s32.totalorder %s24, 2
      // Predicated region
      $region49: #{tpu_custom_call.1} parent=5 // pred_check
        %p352 = pneg %p351
      $region50: #{tpu_custom_call.1} parent=5 // pred_check_branch
        %354 = sbr.rel (%p352) target = $region52
      $region51: #{tpu_custom_call.1} parent=5 // pred_region
        // Predicated region
        $region53: #{tpu_custom_call.1} parent=51 // pred_check
          %p355 = pneg %p56
        $region54: #{tpu_custom_call.1} parent=51 // pred_check_branch
          %357 = sbr.rel (%p355) target = $region56
        $region55: #{tpu_custom_call.1} parent=51 // pred_region
          %s358 = sand.u32 %s46, 1
          %s359 = scalar_lea.sflag [#allocation5], %s358
          %s360 = sand.u32 %s46, 1
          %s361 = smul.addr %s360, 144
          %s362 = scalar_lea.vmem [#allocation4], %s361
          %s364 = ssub.s32 2304, 2304
          %365 = vsyncadd %s359, %s364
          %s366 = smul.addr %s31, 36
          %s367 = smul.addr %s366, 64
          %s368 = scalar_lea.hbm %s0, %s367
          %s369 = sshll.u32 %s362, 4
          %s370 = int_to_ptr.vmem [resolvable:$true] %s369
          %375 = dma.hbm_to_vmem [thread:$0]  %s368, 2304, %s370, %s359, 64, 64, 4
        $region56: #{tpu_custom_call.1} parent=51 // pred_fallthru
          _
      $region52: #{tpu_custom_call.1} parent=5 // pred_fallthru
        _
      %p376 = scmp.le.s32.totalorder 1, %s24
      %p377 = scmp.lt.s32.totalorder %s24, 3
      %p378 = pnand %p376, %p377
      %p379 = pneg %p378
      // Predicated region
      $region57: #{tpu_custom_call.1} parent=5 // pred_check
        _
      $region58: #{tpu_custom_call.1} parent=5 // pred_check_branch
        %381 = sbr.rel (%p378) target = $region60
      $region59: #{tpu_custom_call.1} parent=5 // pred_region
        %s382 = ssub.s32 %s24, 1
        %s383 = sand.u32 %s49, 1
        %s384 = scalar_lea.sflag [#allocation5], %s383
        %s385 = sand.u32 %s49, 1
        %s386 = smul.addr %s385, 144
        %s387 = scalar_lea.vmem [#allocation4], %s386
        // Predicated region
        $region61: #{tpu_custom_call.1} parent=59 // pred_check
          %p388 = pneg %p62
        $region62: #{tpu_custom_call.1} parent=59 // pred_check_branch
          %390 = sbr.rel (%p388) target = $region64
        $region63: #{tpu_custom_call.1} parent=59 // pred_region
          %391 = dma.done %s384, 2304
        $region64: #{tpu_custom_call.1} parent=59 // pred_fallthru
          _
        // Predicated region
        $region65: #{tpu_custom_call.1} parent=59 // pred_check
          %p392 = pneg %p83
        $region66: #{tpu_custom_call.1} parent=59 // pred_check_branch
          %394 = sbr.rel (%p392) target = $region68
        $region67: #{tpu_custom_call.1} parent=59 // pred_region
          %395 = dma.done [#allocation8], 1024
        $region68: #{tpu_custom_call.1} parent=59 // pred_fallthru
          _
        // Predicated region
        $region69: #{tpu_custom_call.1} parent=59 // pred_check
          %p396 = pneg %p146
        $region70: #{tpu_custom_call.1} parent=59 // pred_check_branch
          %398 = sbr.rel (%p396) target = $region72
        $region71: #{tpu_custom_call.1} parent=59 // pred_region
          %399 = dma.done [#allocation8], 9216
        $region72: #{tpu_custom_call.1} parent=59 // pred_fallthru
          _
        // Predicated region
        $region73: #{tpu_custom_call.1} parent=59 // pred_check
          %p400 = pneg %p209
        $region74: #{tpu_custom_call.1} parent=59 // pred_check_branch
          %402 = sbr.rel (%p400) target = $region76
        $region75: #{tpu_custom_call.1} parent=59 // pred_region
          %403 = dma.done [#allocation11], 1024
        $region76: #{tpu_custom_call.1} parent=59 // pred_fallthru
          _
        %s404 = sand.u32 %s49, 1
        %s405 = scalar_lea.sflag [#allocation5], %s404
        %s406 = sand.u32 %s49, 1
        %s407 = smul.addr %s406, 144
        %s408 = scalar_lea.vmem [#allocation4], %s407
        %p409 = pneg %p62
        %p410 = pneg %p59
        %p411 = pneg %p83
        %p412 = pneg %p80
        %p413 = pneg %p104
        %p414 = pneg %p101
        %p415 = pneg %p125
        %p416 = pneg %p122
        %p417 = pneg %p146
        %p418 = pneg %p143
        %p419 = pneg %p167
        %p420 = pneg %p164
        %p421 = pneg %p188
        %p422 = pneg %p185
        %p423 = pneg %p209
        %p424 = pneg %p206
        %p425 = pneg %p230
        %p426 = pneg %p227
        %p427 = pneg %p251
        %p428 = pneg %p248
        %p429 = pneg %p279
        %p430 = pneg %p276
        %s431 = sand.u32 %s266, 1
        %s432 = scalar_lea.sflag [#allocation6], %s431
        %s433 = sand.u32 %s266, 1
        %s434 = smul.addr %s433, 256
        %s435 = scalar_lea.vmem [#allocation12], %s434
        %s436 = smul.u32 16, %s34
        %s438 = smul.u32 %s34, 16
        %s439 = smul.u32 %s438, 2
        %s440 = smul.addr %s439, 4
        %s441 = scalar_lea.vmem %s387, %s440 [#allocation4]
        %v442 = vld [vmem:[%s441] sm:$0xf]
        %v443 = vld [vmem:[%s441 + $0x4] sm:$0xf]
        %v444 = vld [vmem:[%s441 + $0x8] sm:$0xf]
        %v445 = vld [vmem:[%s441 + $0xc] sm:$0xf]
        %v446 = vld [vmem:[%s441 + $0x10] sm:$0xf]
        %v447 = vld [vmem:[%s441 + $0x14] sm:$0xf]
        %v448 = vld [vmem:[%s441 + $0x18] sm:$0xf]
        %v449 = vld [vmem:[%s441 + $0x1c] sm:$0xf]
        %v450 = vld [vmem:[%s441 + $0x20] sm:$0xf]
        %v451 = vld [vmem:[%s441 + $0x24] sm:$0xf]
        %v452 = vld [vmem:[%s441 + $0x28] sm:$0xf]
        %v453 = vld [vmem:[%s441 + $0x2c] sm:$0xf]
        %v454 = vld [vmem:[%s441 + $0x30] sm:$0xf]
        %v455 = vld [vmem:[%s441 + $0x34] sm:$0xf]
        %v456 = vld [vmem:[%s441 + $0x38] sm:$0xf]
        %v457 = vld [vmem:[%s441 + $0x3c] sm:$0xf]
        %v458 = vld [vmem:[%s441 + $0x40] sm:$0xf]
        %v459 = vld [vmem:[%s441 + $0x44] sm:$0xf]
        %v460 = vld [vmem:[%s441 + $0x48] sm:$0xf]
        %v461 = vld [vmem:[%s441 + $0x4c] sm:$0xf]
        %v462 = vld [vmem:[%s441 + $0x50] sm:$0xf]
        %v463 = vld [vmem:[%s441 + $0x54] sm:$0xf]
        %v464 = vld [vmem:[%s441 + $0x58] sm:$0xf]
        %v465 = vld [vmem:[%s441 + $0x5c] sm:$0xf]
        %v466 = vld [vmem:[%s441 + $0x60] sm:$0xf]
        %v467 = vld [vmem:[%s441 + $0x64] sm:$0xf]
        %v468 = vld [vmem:[%s441 + $0x68] sm:$0xf]
        %v469 = vld [vmem:[%s441 + $0x6c] sm:$0xf]
        %v470 = vld [vmem:[%s441 + $0x70] sm:$0xf]
        %v471 = vld [vmem:[%s441 + $0x74] sm:$0xf]
        %v472 = vld [vmem:[%s441 + $0x78] sm:$0xf]
        %v473 = vld [vmem:[%s441 + $0x7c] sm:$0xf]
        %v474 = vld [vmem:[%s441 + $0x80] sm:$0xf]
        %v475 = vld [vmem:[%s441 + $0x84] sm:$0xf]
        %v476 = vld [vmem:[%s441 + $0x88] sm:$0xf]
        %v477 = vld [vmem:[%s441 + $0x8c] sm:$0xf]
        %v478 = vld [vmem:[#allocation7] sm:$0xf]
        %v479 = vld [vmem:[#allocation7 + $0x4] sm:$0xf]
        %v480 = vld [vmem:[#allocation7 + $0x8] sm:$0xf]
        %v481 = vld [vmem:[#allocation7 + $0xc] sm:$0xf]
        %v482 = vld [vmem:[#allocation7 + $0x10] sm:$0xf]
        %v483 = vld [vmem:[#allocation7 + $0x14] sm:$0xf]
        %v484 = vld [vmem:[#allocation7 + $0x18] sm:$0xf]
        %v485 = vld [vmem:[#allocation7 + $0x1c] sm:$0xf]
        %v486 = vld [vmem:[#allocation7 + $0x20] sm:$0xf]
        %v487 = vld [vmem:[#allocation7 + $0x24] sm:$0xf]
        %v488 = vld [vmem:[#allocation7 + $0x28] sm:$0xf]
        %v489 = vld [vmem:[#allocation7 + $0x2c] sm:$0xf]
        %v490 = vld [vmem:[#allocation7 + $0x30] sm:$0xf]
        %v491 = vld [vmem:[#allocation7 + $0x34] sm:$0xf]
        %v492 = vld [vmem:[#allocation7 + $0x38] sm:$0xf]
        %v493 = vld [vmem:[#allocation7 + $0x3c] sm:$0xf]
        %v530 = vunpack.c.l.b16 %v442
        %v531 = vunpack.c.l.b16 %v443
        %v532 = vunpack.c.l.b16 %v444
        %v533 = vunpack.c.l.b16 %v445
        %v534 = vunpack.c.l.b16 %v446
        %v535 = vunpack.c.l.b16 %v447
        %v536 = vunpack.c.l.b16 %v448
        %v537 = vunpack.c.l.b16 %v449
        %v538 = vunpack.c.l.b16 %v450
        %v539 = vunpack.c.l.b16 %v451
        %v540 = vunpack.c.l.b16 %v452
        %v541 = vunpack.c.l.b16 %v453
        %v542 = vunpack.c.l.b16 %v454
        %v543 = vunpack.c.l.b16 %v455
        %v544 = vunpack.c.l.b16 %v456
        %v545 = vunpack.c.l.b16 %v457
        %v546 = vunpack.c.l.b16 %v458
        %v547 = vunpack.c.l.b16 %v459
        %v548 = vunpack.c.l.b16 %v460
        %v549 = vunpack.c.l.b16 %v461
        %v550 = vunpack.c.l.b16 %v462
        %v551 = vunpack.c.l.b16 %v463
        %v552 = vunpack.c.l.b16 %v464
        %v553 = vunpack.c.l.b16 %v465
        %v554 = vunpack.c.l.b16 %v466
        %v555 = vunpack.c.l.b16 %v467
        %v556 = vunpack.c.l.b16 %v468
        %v557 = vunpack.c.l.b16 %v469
        %v558 = vunpack.c.l.b16 %v470
        %v559 = vunpack.c.l.b16 %v471
        %v560 = vunpack.c.l.b16 %v472
        %v561 = vunpack.c.l.b16 %v473
        %v562 = vunpack.c.l.b16 %v474
        %v563 = vunpack.c.l.b16 %v475
        %v564 = vunpack.c.l.b16 %v476
        %v565 = vunpack.c.l.b16 %v477
        %v566 = vpack.c.b16 %v531, %v530
        %v567 = vpack.c.b16 %v533, %v532
        %v568 = vpack.c.b16 %v535, %v534
        %v569 = vpack.c.b16 %v537, %v536
        %v570 = vpack.c.b16 %v539, %v538
        %v571 = vpack.c.b16 %v541, %v540
        %v572 = vpack.c.b16 %v543, %v542
        %v573 = vpack.c.b16 %v545, %v544
        %v574 = vpack.c.b16 %v547, %v546
        %v575 = vpack.c.b16 %v549, %v548
        %v576 = vpack.c.b16 %v551, %v550
        %v577 = vpack.c.b16 %v553, %v552
        %v578 = vpack.c.b16 %v555, %v554
        %v579 = vpack.c.b16 %v557, %v556
        %v580 = vpack.c.b16 %v559, %v558
        %v581 = vpack.c.b16 %v561, %v560
        %v582 = vpack.c.b16 %v563, %v562
        %v583 = vpack.c.b16 %v565, %v564
        %v618 = vunpack.c.l.b16 %v478
        %v619 = vunpack.c.l.b16 %v479
        %v620 = vunpack.c.l.b16 %v480
        %v621 = vunpack.c.l.b16 %v481
        %v622 = vunpack.c.l.b16 %v482
        %v623 = vunpack.c.l.b16 %v483
        %v624 = vunpack.c.l.b16 %v484
        %v625 = vunpack.c.l.b16 %v485
        %v626 = vunpack.c.l.b16 %v486
        %v627 = vunpack.c.l.b16 %v487
        %v628 = vunpack.c.l.b16 %v488
        %v629 = vunpack.c.l.b16 %v489
        %v630 = vunpack.c.l.b16 %v490
        %v631 = vunpack.c.l.b16 %v491
        %v632 = vunpack.c.l.b16 %v492
        %v633 = vunpack.c.l.b16 %v493
        %v634 = vpack.c.b16 %v619, %v618
        %v635 = vpack.c.b16 %v621, %v620
        %v636 = vpack.c.b16 %v623, %v622
        %v637 = vpack.c.b16 %v625, %v624
        %v638 = vpack.c.b16 %v627, %v626
        %v639 = vpack.c.b16 %v629, %v628
        %v640 = vpack.c.b16 %v631, %v630
        %v641 = vpack.c.b16 %v633, %v632
        %650 = vmatprep.subr.bf16.mxu0 0
        %651 = vmatpush1.bf16.msra.mxu0 %v634
        %652 = vmatprep.subr.bf16.mxu0 0
        %653 = vmatpush1.bf16.msra.mxu0 %v635
        %654 = vmatprep.subr.bf16.mxu0 0
        %655 = vmatpush1.bf16.msra.mxu0 %v636
        %656 = vmatprep.subr.bf16.mxu0 0
        %657 = vmatpush1.bf16.msra.mxu0 %v637
        %658 = vmatprep.subr.bf16.mxu0 0
        %659 = vmatpush1.bf16.msra.mxu0 %v638
        %660 = vmatprep.subr.bf16.mxu0 0
        %661 = vmatpush1.bf16.msra.mxu0 %v639
        %662 = vmatprep.subr.bf16.mxu0 0
        %663 = vmatpush1.bf16.msra.mxu0 %v640
        %664 = vmatprep.subr.bf16.mxu0 0
        %665 = vmatpush1.bf16.msra.mxu0 %v641
        %666 = vmatprep.subr.bf16.mxu0 0
        %667 = vmatpush1.bf16.msra.mxu0 0
        %668 = vmatprep.subr.bf16.mxu0 0
        %669 = vmatpush1.bf16.msra.mxu0 0
        %670 = vmatprep.subr.bf16.mxu0 0
        %671 = vmatpush1.bf16.msra.mxu0 0
        %672 = vmatprep.subr.bf16.mxu0 0
        %673 = vmatpush1.bf16.msra.mxu0 0
        %674 = vmatprep.subr.bf16.mxu0 0
        %675 = vmatpush1.bf16.msra.mxu0 0
        %676 = vmatprep.subr.bf16.mxu0 0
        %677 = vmatpush1.bf16.msra.mxu0 0
        %678 = vmatprep.subr.bf16.mxu0 0
        %679 = vmatpush1.bf16.msra.mxu0 0
        %680 = vmatprep.subr.bf16.mxu0 0
        %681 = vmatpush1.bf16.msra.mxu0 0
        %682 = vmatprep.mubr.bf16.mxu0 0
        %683 = vmatmul.mubr.bf16.gmra.mrb[0].mxu0 %v566
        %v684 = vpop.f32.mrb[0].mxu0
        %v685 = vadd.f32 0.0, %v684
        %v686 = vpop.f32.mrb[0].mxu0
        %v687 = vpop.f32.mrb[0].mxu0
        %v688 = vadd.f32 0.0, %v687
        %v689 = vpop.f32.mrb[0].mxu0
        %690 = vmatprep.mubr.bf16.mxu0 0
        %691 = vmatmul.mubr.bf16.gmra.mrb[0].mxu0 %v567
        %v692 = vpop.f32.mrb[0].mxu0
        %v693 = vadd.f32 0.0, %v692
        %v694 = vpop.f32.mrb[0].mxu0
        %v695 = vpop.f32.mrb[0].mxu0
        %v696 = vadd.f32 0.0, %v695
        %v697 = vpop.f32.mrb[0].mxu0
        %698 = vmatprep.mubr.bf16.mxu0 0
        %699 = vmatmul.mubr.bf16.gmra.mrb[0].mxu0 %v568
        %v700 = vpop.f32.mrb[0].mxu0
        %v701 = vadd.f32 0.0, %v700
        %v702 = vpop.f32.mrb[0].mxu0
        %v703 = vpop.f32.mrb[0].mxu0
        %v704 = vadd.f32 0.0, %v703
        %v705 = vpop.f32.mrb[0].mxu0
        %706 = vmatprep.mubr.bf16.mxu0 0
        %707 = vmatmul.mubr.bf16.gmra.mrb[0].mxu0 %v569
        %v708 = vpop.f32.mrb[0].mxu0
        %v709 = vadd.f32 0.0, %v708
        %v710 = vpop.f32.mrb[0].mxu0
        %v711 = vpop.f32.mrb[0].mxu0
        %v712 = vadd.f32 0.0, %v711
        %v713 = vpop.f32.mrb[0].mxu0
        %714 = vmatprep.mubr.bf16.mxu0 0
        %715 = vmatmul.mubr.bf16.gmra.mrb[0].mxu0 %v570
        %v716 = vpop.f32.mrb[0].mxu0
        %v717 = vadd.f32 0.0, %v716
        %v718 = vpop.f32.mrb[0].mxu0
        %v719 = vpop.f32.mrb[0].mxu0
        %v720 = vadd.f32 0.0, %v719
        %v721 = vpop.f32.mrb[0].mxu0
        %722 = vmatprep.mubr.bf16.mxu0 0
        %723 = vmatmul.mubr.bf16.gmra.mrb[0].mxu0 %v571
        %v724 = vpop.f32.mrb[0].mxu0
        %v725 = vadd.f32 0.0, %v724
        %v726 = vpop.f32.mrb[0].mxu0
        %v727 = vpop.f32.mrb[0].mxu0
        %v728 = vadd.f32 0.0, %v727
        %v729 = vpop.f32.mrb[0].mxu0
        %730 = vmatprep.mubr.bf16.mxu0 0
        %731 = vmatmul.mubr.bf16.gmra.mrb[0].mxu0 %v572
        %v732 = vpop.f32.mrb[0].mxu0
        %v733 = vadd.f32 0.0, %v732
        %v734 = vpop.f32.mrb[0].mxu0
        %v735 = vpop.f32.mrb[0].mxu0
        %v736 = vadd.f32 0.0, %v735
        %v737 = vpop.f32.mrb[0].mxu0
        %738 = vmatprep.mubr.bf16.mxu0 0
        %739 = vmatmul.mubr.bf16.gmra.mrb[0].mxu0 %v573
        %v740 = vpop.f32.mrb[0].mxu0
        %v741 = vadd.f32 0.0, %v740
        %v742 = vpop.f32.mrb[0].mxu0
        %v743 = vpop.f32.mrb[0].mxu0
        %v744 = vadd.f32 0.0, %v743
        %v745 = vpop.f32.mrb[0].mxu0
        %746 = vmatprep.mubr.bf16.mxu0 0
        %747 = vmatmul.mubr.bf16.gmra.mrb[0].mxu0 %v574
        %v748 = vpop.f32.mrb[0].mxu0
        %v749 = vadd.f32 0.0, %v748
        %v750 = vpop.f32.mrb[0].mxu0
        %v751 = vpop.f32.mrb[0].mxu0
        %v752 = vadd.f32 0.0, %v751
        %v753 = vpop.f32.mrb[0].mxu0
        %754 = vmatprep.mubr.bf16.mxu0 0
        %755 = vmatmul.mubr.bf16.gmra.mrb[0].mxu0 %v575
        %v756 = vpop.f32.mrb[0].mxu0
        %v757 = vadd.f32 0.0, %v756
        %v758 = vpop.f32.mrb[0].mxu0
        %v759 = vpop.f32.mrb[0].mxu0
        %v760 = vadd.f32 0.0, %v759
        %v761 = vpop.f32.mrb[0].mxu0
        %762 = vmatprep.mubr.bf16.mxu0 0
        %763 = vmatmul.mubr.bf16.gmra.mrb[0].mxu0 %v576
        %v764 = vpop.f32.mrb[0].mxu0
        %v765 = vadd.f32 0.0, %v764
        %v766 = vpop.f32.mrb[0].mxu0
        %v767 = vpop.f32.mrb[0].mxu0
        %v768 = vadd.f32 0.0, %v767
        %v769 = vpop.f32.mrb[0].mxu0
        %770 = vmatprep.mubr.bf16.mxu0 0
        %771 = vmatmul.mubr.bf16.gmra.mrb[0].mxu0 %v577
        %v772 = vpop.f32.mrb[0].mxu0
        %v773 = vadd.f32 0.0, %v772
        %v774 = vpop.f32.mrb[0].mxu0
        %v775 = vpop.f32.mrb[0].mxu0
        %v776 = vadd.f32 0.0, %v775
        %v777 = vpop.f32.mrb[0].mxu0
        %778 = vmatprep.mubr.bf16.mxu0 0
        %779 = vmatmul.mubr.bf16.gmra.mrb[0].mxu0 %v578
        %v780 = vpop.f32.mrb[0].mxu0
        %v781 = vadd.f32 0.0, %v780
        %v782 = vpop.f32.mrb[0].mxu0
        %v783 = vpop.f32.mrb[0].mxu0
        %v784 = vadd.f32 0.0, %v783
        %v785 = vpop.f32.mrb[0].mxu0
        %786 = vmatprep.mubr.bf16.mxu0 0
        %787 = vmatmul.mubr.bf16.gmra.mrb[0].mxu0 %v579
        %v788 = vpop.f32.mrb[0].mxu0
        %v789 = vadd.f32 0.0, %v788
        %v790 = vpop.f32.mrb[0].mxu0
        %v791 = vpop.f32.mrb[0].mxu0
        %v792 = vadd.f32 0.0, %v791
        %v793 = vpop.f32.mrb[0].mxu0
        %794 = vmatprep.mubr.bf16.mxu0 0
        %795 = vmatmul.mubr.bf16.gmra.mrb[0].mxu0 %v580
        %v796 = vpop.f32.mrb[0].mxu0
        %v797 = vadd.f32 0.0, %v796
        %v798 = vpop.f32.mrb[0].mxu0
        %v799 = vpop.f32.mrb[0].mxu0
        %v800 = vadd.f32 0.0, %v799
        %v801 = vpop.f32.mrb[0].mxu0
        %802 = vmatprep.mubr.bf16.mxu0 0
        %803 = vmatmul.mubr.bf16.gmra.mrb[0].mxu0 %v581
        %v804 = vpop.f32.mrb[0].mxu0
        %v805 = vadd.f32 0.0, %v804
        %v806 = vpop.f32.mrb[0].mxu0
        %v807 = vpop.f32.mrb[0].mxu0
        %v808 = vadd.f32 0.0, %v807
        %v809 = vpop.f32.mrb[0].mxu0
        %810 = vmatprep.mubr.bf16.mxu0 0
        %811 = vmatmul.mubr.bf16.gmra.mrb[0].mxu0 %v582
        %v812 = vpop.f32.mrb[0].mxu0
        %v813 = vadd.f32 0.0, %v812
        %v814 = vpop.f32.mrb[0].mxu0
        %v815 = vpop.f32.mrb[0].mxu0
        %v816 = vadd.f32 0.0, %v815
        %v817 = vpop.f32.mrb[0].mxu0
        %818 = vmatprep.mubr.bf16.mxu0 0
        %819 = vmatmul.mubr.bf16.gmra.mrb[0].mxu0 %v583
        %v820 = vpop.f32.mrb[0].mxu0
        %v821 = vadd.f32 0.0, %v820
        %v822 = vpop.f32.mrb[0].mxu0
        %v823 = vpop.f32.mrb[0].mxu0
        %v824 = vadd.f32 0.0, %v823
        %v825 = vpop.f32.mrb[0].mxu0
        %826 = vdwg.mxu0
        %v827 = vld [vmem:[%s2] sm:$0x1]
        %v829 = vlaneseq
        %v830 = vshrl.u32 %v829, 7
        %v831 = vsub.s32 0, %v830
        %v832 = vrot.slane %v827, %v831
        %v834 = vmul.f32 %v685, %v832
        %v835 = vmul.f32 %v688, %v832
        %v836 = vmul.f32 %v693, %v832
        %v837 = vmul.f32 %v696, %v832
        %v838 = vmul.f32 %v701, %v832
        %v839 = vmul.f32 %v704, %v832
        %v840 = vmul.f32 %v709, %v832
        %v841 = vmul.f32 %v712, %v832
        %v842 = vmul.f32 %v717, %v832
        %v843 = vmul.f32 %v720, %v832
        %v844 = vmul.f32 %v725, %v832
        %v845 = vmul.f32 %v728, %v832
        %v846 = vmul.f32 %v733, %v832
        %v847 = vmul.f32 %v736, %v832
        %v848 = vmul.f32 %v741, %v832
        %v849 = vmul.f32 %v744, %v832
        %v850 = vmul.f32 %v749, %v832
        %v851 = vmul.f32 %v752, %v832
        %v852 = vmul.f32 %v757, %v832
        %v853 = vmul.f32 %v760, %v832
        %v854 = vmul.f32 %v765, %v832
        %v855 = vmul.f32 %v768, %v832
        %v856 = vmul.f32 %v773, %v832
        %v857 = vmul.f32 %v776, %v832
        %v858 = vmul.f32 %v781, %v832
        %v859 = vmul.f32 %v784, %v832
        %v860 = vmul.f32 %v789, %v832
        %v861 = vmul.f32 %v792, %v832
        %v862 = vmul.f32 %v797, %v832
        %v863 = vmul.f32 %v800, %v832
        %v864 = vmul.f32 %v805, %v832
        %v865 = vmul.f32 %v808, %v832
        %v866 = vmul.f32 %v813, %v832
        %v867 = vmul.f32 %v816, %v832
        %v868 = vmul.f32 %v821, %v832
        %v869 = vmul.f32 %v824, %v832
        %v870 = vld [vmem:[%s3] sm:$0x1]
        %v872 = vlaneseq
        %v873 = vshrl.u32 %v872, 7
        %v874 = vsub.s32 0, %v873
        %v875 = vrot.slane %v870, %v874
        %v877 = vadd.f32 %v834, %v875
        %v878 = vadd.f32 %v835, %v875
        %v879 = vadd.f32 %v836, %v875
        %v880 = vadd.f32 %v837, %v875
        %v881 = vadd.f32 %v838, %v875
        %v882 = vadd.f32 %v839, %v875
        %v883 = vadd.f32 %v840, %v875
        %v884 = vadd.f32 %v841, %v875
        %v885 = vadd.f32 %v842, %v875
        %v886 = vadd.f32 %v843, %v875
        %v887 = vadd.f32 %v844, %v875
        %v888 = vadd.f32 %v845, %v875
        %v889 = vadd.f32 %v846, %v875
        %v890 = vadd.f32 %v847, %v875
        %v891 = vadd.f32 %v848, %v875
        %v892 = vadd.f32 %v849, %v875
        %v893 = vadd.f32 %v850, %v875
        %v894 = vadd.f32 %v851, %v875
        %v895 = vadd.f32 %v852, %v875
        %v896 = vadd.f32 %v853, %v875
        %v897 = vadd.f32 %v854, %v875
        %v898 = vadd.f32 %v855, %v875
        %v899 = vadd.f32 %v856, %v875
        %v900 = vadd.f32 %v857, %v875
        %v901 = vadd.f32 %v858, %v875
        %v902 = vadd.f32 %v859, %v875
        %v903 = vadd.f32 %v860, %v875
        %v904 = vadd.f32 %v861, %v875
        %v905 = vadd.f32 %v862, %v875
        %v906 = vadd.f32 %v863, %v875
        %v907 = vadd.f32 %v864, %v875
        %v908 = vadd.f32 %v865, %v875
        %v909 = vadd.f32 %v866, %v875
        %v910 = vadd.f32 %v867, %v875
        %v911 = vadd.f32 %v868, %v875
        %v912 = vadd.f32 %v869, %v875
        %v913 = vmax.f32 %v877, 0.0
        %v914 = vmax.f32 %v878, 0.0
        %v915 = vmax.f32 %v879, 0.0
        %v916 = vmax.f32 %v880, 0.0
        %v917 = vmax.f32 %v881, 0.0
        %v918 = vmax.f32 %v882, 0.0
        %v919 = vmax.f32 %v883, 0.0
        %v920 = vmax.f32 %v884, 0.0
        %v921 = vmax.f32 %v885, 0.0
        %v922 = vmax.f32 %v886, 0.0
        %v923 = vmax.f32 %v887, 0.0
        %v924 = vmax.f32 %v888, 0.0
        %v925 = vmax.f32 %v889, 0.0
        %v926 = vmax.f32 %v890, 0.0
        %v927 = vmax.f32 %v891, 0.0
        %v928 = vmax.f32 %v892, 0.0
        %v929 = vmax.f32 %v893, 0.0
        %v930 = vmax.f32 %v894, 0.0
        %v931 = vmax.f32 %v895, 0.0
        %v932 = vmax.f32 %v896, 0.0
        %v933 = vmax.f32 %v897, 0.0
        %v934 = vmax.f32 %v898, 0.0
        %v935 = vmax.f32 %v899, 0.0
        %v936 = vmax.f32 %v900, 0.0
        %v937 = vmax.f32 %v901, 0.0
        %v938 = vmax.f32 %v902, 0.0
        %v939 = vmax.f32 %v903, 0.0
        %v940 = vmax.f32 %v904, 0.0
        %v941 = vmax.f32 %v905, 0.0
        %v942 = vmax.f32 %v906, 0.0
        %v943 = vmax.f32 %v907, 0.0
        %v944 = vmax.f32 %v908, 0.0
        %v945 = vmax.f32 %v909, 0.0
        %v946 = vmax.f32 %v910, 0.0
        %v947 = vmax.f32 %v911, 0.0
        %v948 = vmax.f32 %v912, 0.0
        %v949 = vpack.c.bf16 %v914, %v913
        %v950 = vpack.c.bf16 %v916, %v915
        %v951 = vpack.c.bf16 %v918, %v917
        %v952 = vpack.c.bf16 %v920, %v919
        %v953 = vpack.c.bf16 %v922, %v921
        %v954 = vpack.c.bf16 %v924, %v923
        %v955 = vpack.c.bf16 %v926, %v925
        %v956 = vpack.c.bf16 %v928, %v927
        %v957 = vpack.c.bf16 %v930, %v929
        %v958 = vpack.c.bf16 %v932, %v931
        %v959 = vpack.c.bf16 %v934, %v933
        %v960 = vpack.c.bf16 %v936, %v935
        %v961 = vpack.c.bf16 %v938, %v937
        %v962 = vpack.c.bf16 %v940, %v939
        %v963 = vpack.c.bf16 %v942, %v941
        %v964 = vpack.c.bf16 %v944, %v943
        %v965 = vpack.c.bf16 %v946, %v945
        %v966 = vpack.c.bf16 %v948, %v947
        %p967 = scmp.eq.s32.totalorder %s34, 0
        // Predicated region
        $region77: #{tpu_custom_call.1} parent=59 // pred_check
          %p968 = pneg %p967
        $region78: #{tpu_custom_call.1} parent=59 // pred_check_branch
          %970 = sbr.rel (%p968) target = $region80
        $region79: #{tpu_custom_call.1} parent=59 // pred_region
          %vm971 = vcmask 1043459
          %vm972 = vsmask.f32 7950
          %vm973 = vmand %vm971, %vm972
          %v974 = vld [vmem:[#allocation2] sm:$0x8]
          %v975 = vsel %vm973, 0, %v974
          %976 = vst [vmem:[#allocation2] sm:$0x8] %v975
          %v977 = vld [vmem:[#allocation2 + $0x10] sm:$0x8]
          %v978 = vsel %vm973, 0, %v977
          %979 = vst [vmem:[#allocation2 + $0x10] sm:$0x8] %v978
          %v980 = vld [vmem:[#allocation2 + $0x20] sm:$0x8]
          %v981 = vsel %vm973, 0, %v980
          %982 = vst [vmem:[#allocation2 + $0x20] sm:$0x8] %v981
          %v983 = vld [vmem:[#allocation2 + $0x30] sm:$0x8]
          %v984 = vsel %vm973, 0, %v983
          %985 = vst [vmem:[#allocation2 + $0x30] sm:$0x8] %v984
          %v986 = vld [vmem:[#allocation2 + $0x40] sm:$0x8]
          %v987 = vsel %vm973, 0, %v986
          %988 = vst [vmem:[#allocation2 + $0x40] sm:$0x8] %v987
          %v989 = vld [vmem:[#allocation2 + $0x50] sm:$0x8]
          %v990 = vsel %vm973, 0, %v989
          %991 = vst [vmem:[#allocation2 + $0x50] sm:$0x8] %v990
          %v992 = vld [vmem:[#allocation2 + $0x60] sm:$0x8]
          %v993 = vsel %vm973, 0, %v992
          %994 = vst [vmem:[#allocation2 + $0x60] sm:$0x8] %v993
          %v995 = vld [vmem:[#allocation2 + $0x70] sm:$0x8]
          %v996 = vsel %vm973, 0, %v995
          %997 = vst [vmem:[#allocation2 + $0x70] sm:$0x8] %v996
          %v998 = vld [vmem:[#allocation2 + $0x80] sm:$0x8]
          %v999 = vsel %vm973, 0, %v998
          %1000 = vst [vmem:[#allocation2 + $0x80] sm:$0x8] %v999
          %v1001 = vld [vmem:[#allocation2 + $0x90] sm:$0x8]
          %v1002 = vsel %vm973, 0, %v1001
          %1003 = vst [vmem:[#allocation2 + $0x90] sm:$0x8] %v1002
          %v1004 = vld [vmem:[#allocation2 + $0xa0] sm:$0x8]
          %v1005 = vsel %vm973, 0, %v1004
          %1006 = vst [vmem:[#allocation2 + $0xa0] sm:$0x8] %v1005
          %v1007 = vld [vmem:[#allocation2 + $0xb0] sm:$0x8]
          %v1008 = vsel %vm973, 0, %v1007
          %1009 = vst [vmem:[#allocation2 + $0xb0] sm:$0x8] %v1008
          %v1010 = vld [vmem:[#allocation2 + $0xc0] sm:$0x8]
          %v1011 = vsel %vm973, 0, %v1010
          %1012 = vst [vmem:[#allocation2 + $0xc0] sm:$0x8] %v1011
          %v1013 = vld [vmem:[#allocation2 + $0xd0] sm:$0x8]
          %v1014 = vsel %vm973, 0, %v1013
          %1015 = vst [vmem:[#allocation2 + $0xd0] sm:$0x8] %v1014
          %v1016 = vld [vmem:[#allocation2 + $0xe0] sm:$0x8]
          %v1017 = vsel %vm973, 0, %v1016
          %1018 = vst [vmem:[#allocation2 + $0xe0] sm:$0x8] %v1017
          %v1019 = vld [vmem:[#allocation2 + $0xf0] sm:$0x8]
          %v1020 = vsel %vm973, 0, %v1019
          %1021 = vst [vmem:[#allocation2 + $0xf0] sm:$0x8] %v1020
          %v1022 = vld [vmem:[#allocation2 + $0x100] sm:$0x8]
          %v1023 = vsel %vm973, 0, %v1022
          %1024 = vst [vmem:[#allocation2 + $0x100] sm:$0x8] %v1023
          %v1025 = vld [vmem:[#allocation2 + $0x110] sm:$0x8]
          %v1026 = vsel %vm973, 0, %v1025
          %1027 = vst [vmem:[#allocation2 + $0x110] sm:$0x8] %v1026
          %vm1028 = vcmask 1044484
          %vm1029 = vsmask.f32 4352
          %vm1030 = vmand %vm1028, %vm1029
          %v1031 = vld [vmem:[#allocation2 + $0x8] sm:$0x10]
          %v1032 = vsel %vm1030, 0, %v1031
          %1033 = vst [vmem:[#allocation2 + $0x8] sm:$0x10] %v1032
          %v1034 = vld [vmem:[#allocation2 + $0x18] sm:$0x10]
          %v1035 = vsel %vm1030, 0, %v1034
          %1036 = vst [vmem:[#allocation2 + $0x18] sm:$0x10] %v1035
          %v1037 = vld [vmem:[#allocation2 + $0x28] sm:$0x10]
          %v1038 = vsel %vm1030, 0, %v1037
          %1039 = vst [vmem:[#allocation2 + $0x28] sm:$0x10] %v1038
          %v1040 = vld [vmem:[#allocation2 + $0x38] sm:$0x10]
          %v1041 = vsel %vm1030, 0, %v1040
          %1042 = vst [vmem:[#allocation2 + $0x38] sm:$0x10] %v1041
          %v1043 = vld [vmem:[#allocation2 + $0x48] sm:$0x10]
          %v1044 = vsel %vm1030, 0, %v1043
          %1045 = vst [vmem:[#allocation2 + $0x48] sm:$0x10] %v1044
          %v1046 = vld [vmem:[#allocation2 + $0x58] sm:$0x10]
          %v1047 = vsel %vm1030, 0, %v1046
          %1048 = vst [vmem:[#allocation2 + $0x58] sm:$0x10] %v1047
          %v1049 = vld [vmem:[#allocation2 + $0x68] sm:$0x10]
          %v1050 = vsel %vm1030, 0, %v1049
          %1051 = vst [vmem:[#allocation2 + $0x68] sm:$0x10] %v1050
          %v1052 = vld [vmem:[#allocation2 + $0x78] sm:$0x10]
          %v1053 = vsel %vm1030, 0, %v1052
          %1054 = vst [vmem:[#allocation2 + $0x78] sm:$0x10] %v1053
          %v1055 = vld [vmem:[#allocation2 + $0x88] sm:$0x10]
          %v1056 = vsel %vm1030, 0, %v1055
          %1057 = vst [vmem:[#allocation2 + $0x88] sm:$0x10] %v1056
          %v1058 = vld [vmem:[#allocation2 + $0x98] sm:$0x10]
          %v1059 = vsel %vm1030, 0, %v1058
          %1060 = vst [vmem:[#allocation2 + $0x98] sm:$0x10] %v1059
          %v1061 = vld [vmem:[#allocation2 + $0xa8] sm:$0x10]
          %v1062 = vsel %vm1030, 0, %v1061
          %1063 = vst [vmem:[#allocation2 + $0xa8] sm:$0x10] %v1062
          %v1064 = vld [vmem:[#allocation2 + $0xb8] sm:$0x10]
          %v1065 = vsel %vm1030, 0, %v1064
          %1066 = vst [vmem:[#allocation2 + $0xb8] sm:$0x10] %v1065
          %v1067 = vld [vmem:[#allocation2 + $0xc8] sm:$0x10]
          %v1068 = vsel %vm1030, 0, %v1067
          %1069 = vst [vmem:[#allocation2 + $0xc8] sm:$0x10] %v1068
          %v1070 = vld [vmem:[#allocation2 + $0xd8] sm:$0x10]
          %v1071 = vsel %vm1030, 0, %v1070
          %1072 = vst [vmem:[#allocation2 + $0xd8] sm:$0x10] %v1071
          %v1073 = vld [vmem:[#allocation2 + $0xe8] sm:$0x10]
          %v1074 = vsel %vm1030, 0, %v1073
          %1075 = vst [vmem:[#allocation2 + $0xe8] sm:$0x10] %v1074
          %v1076 = vld [vmem:[#allocation2 + $0xf8] sm:$0x10]
          %v1077 = vsel %vm1030, 0, %v1076
          %1078 = vst [vmem:[#allocation2 + $0xf8] sm:$0x10] %v1077
          %v1079 = vld [vmem:[#allocation2 + $0x108] sm:$0x10]
          %v1080 = vsel %vm1030, 0, %v1079
          %1081 = vst [vmem:[#allocation2 + $0x108] sm:$0x10] %v1080
          %v1082 = vld [vmem:[#allocation2 + $0x118] sm:$0x10]
          %v1083 = vsel %vm1030, 0, %v1082
          %1084 = vst [vmem:[#allocation2 + $0x118] sm:$0x10] %v1083
        $region80: #{tpu_custom_call.1} parent=59 // pred_fallthru
          _
        %v1103 = vrot.slane %v949, 4
        %v1104 = vrot.slane %v950, 4
        %v1105 = vrot.slane %v951, 4
        %v1106 = vrot.slane %v952, 4
        %v1107 = vrot.slane %v953, 4
        %v1108 = vrot.slane %v954, 4
        %v1109 = vrot.slane %v955, 4
        %v1110 = vrot.slane %v956, 4
        %v1111 = vrot.slane %v957, 4
        %v1112 = vrot.slane %v958, 4
        %v1113 = vrot.slane %v959, 4
        %v1114 = vrot.slane %v960, 4
        %v1115 = vrot.slane %v961, 4
        %v1116 = vrot.slane %v962, 4
        %v1117 = vrot.slane %v963, 4
        %v1118 = vrot.slane %v964, 4
        %v1119 = vrot.slane %v965, 4
        %v1120 = vrot.slane %v966, 4
        %1139 = vst [vmem:[#allocation2] sm:$0xf0] %v1103
        %1140 = vst [vmem:[#allocation2 + $0x8] sm:$0xf] %v1103
        %1141 = vst [vmem:[#allocation2 + $0x10] sm:$0xf0] %v1104
        %1142 = vst [vmem:[#allocation2 + $0x18] sm:$0xf] %v1104
        %1143 = vst [vmem:[#allocation2 + $0x20] sm:$0xf0] %v1105
        %1144 = vst [vmem:[#allocation2 + $0x28] sm:$0xf] %v1105
        %1145 = vst [vmem:[#allocation2 + $0x30] sm:$0xf0] %v1106
        %1146 = vst [vmem:[#allocation2 + $0x38] sm:$0xf] %v1106
        %1147 = vst [vmem:[#allocation2 + $0x40] sm:$0xf0] %v1107
        %1148 = vst [vmem:[#allocation2 + $0x48] sm:$0xf] %v1107
        %1149 = vst [vmem:[#allocation2 + $0x50] sm:$0xf0] %v1108
        %1150 = vst [vmem:[#allocation2 + $0x58] sm:$0xf] %v1108
        %1151 = vst [vmem:[#allocation2 + $0x60] sm:$0xf0] %v1109
        %1152 = vst [vmem:[#allocation2 + $0x68] sm:$0xf] %v1109
        %1153 = vst [vmem:[#allocation2 + $0x70] sm:$0xf0] %v1110
        %1154 = vst [vmem:[#allocation2 + $0x78] sm:$0xf] %v1110
        %1155 = vst [vmem:[#allocation2 + $0x80] sm:$0xf0] %v1111
        %1156 = vst [vmem:[#allocation2 + $0x88] sm:$0xf] %v1111
        %1157 = vst [vmem:[#allocation2 + $0x90] sm:$0xf0] %v1112
        %1158 = vst [vmem:[#allocation2 + $0x98] sm:$0xf] %v1112
        %1159 = vst [vmem:[#allocation2 + $0xa0] sm:$0xf0] %v1113
        %1160 = vst [vmem:[#allocation2 + $0xa8] sm:$0xf] %v1113
        %1161 = vst [vmem:[#allocation2 + $0xb0] sm:$0xf0] %v1114
        %1162 = vst [vmem:[#allocation2 + $0xb8] sm:$0xf] %v1114
        %1163 = vst [vmem:[#allocation2 + $0xc0] sm:$0xf0] %v1115
        %1164 = vst [vmem:[#allocation2 + $0xc8] sm:$0xf] %v1115
        %1165 = vst [vmem:[#allocation2 + $0xd0] sm:$0xf0] %v1116
        %1166 = vst [vmem:[#allocation2 + $0xd8] sm:$0xf] %v1116
        %1167 = vst [vmem:[#allocation2 + $0xe0] sm:$0xf0] %v1117
        %1168 = vst [vmem:[#allocation2 + $0xe8] sm:$0xf] %v1117
        %1169 = vst [vmem:[#allocation2 + $0xf0] sm:$0xf0] %v1118
        %1170 = vst [vmem:[#allocation2 + $0xf8] sm:$0xf] %v1118
        %1171 = vst [vmem:[#allocation2 + $0x100] sm:$0xf0] %v1119
        %1172 = vst [vmem:[#allocation2 + $0x108] sm:$0xf] %v1119
        %1173 = vst [vmem:[#allocation2 + $0x110] sm:$0xf0] %v1120
        %1174 = vst [vmem:[#allocation2 + $0x118] sm:$0xf] %v1120
        // Predicated region
        $region81: #{tpu_custom_call.1} parent=59 // pred_check
          %p1175 = pneg %p967
        $region82: #{tpu_custom_call.1} parent=59 // pred_check_branch
          %1177 = sbr.rel (%p1175) target = $region84
        $region83: #{tpu_custom_call.1} parent=59 // pred_region
          %1178 = vst [vmem:[#allocation2] sm:$0xff] 0
          %1179 = vst [vmem:[#allocation2 + $0x8] sm:$0xff] 0
          %s1180 = scalar_lea.vmem [#allocation2], 272
          %1181 = vst [vmem:[%s1180] sm:$0xff] 0
          %1182 = vst [vmem:[%s1180 + $0x8] sm:$0xff] 0
        $region84: #{tpu_custom_call.1} parent=59 // pred_fallthru
          _
        %v1183 = vld [vmem:[#allocation2] sm:$0xf8]
        %v1184 = vld [vmem:[#allocation2 + $0x8] sm:$0xf]
        %v1185 = vld [vmem:[#allocation2 + $0x10] sm:$0xf8]
        %v1186 = vld [vmem:[#allocation2 + $0x18] sm:$0xf]
        %v1187 = vld [vmem:[#allocation2 + $0x20] sm:$0xf8]
        %v1188 = vld [vmem:[#allocation2 + $0x28] sm:$0xf]
        %v1189 = vld [vmem:[#allocation2 + $0x30] sm:$0xf8]
        %v1190 = vld [vmem:[#allocation2 + $0x38] sm:$0xf]
        %v1191 = vld [vmem:[#allocation2 + $0x40] sm:$0xf8]
        %v1192 = vld [vmem:[#allocation2 + $0x48] sm:$0xf]
        %v1193 = vld [vmem:[#allocation2 + $0x50] sm:$0xf8]
        %v1194 = vld [vmem:[#allocation2 + $0x58] sm:$0xf]
        %v1195 = vld [vmem:[#allocation2 + $0x60] sm:$0xf8]
        %v1196 = vld [vmem:[#allocation2 + $0x68] sm:$0xf]
        %v1197 = vld [vmem:[#allocation2 + $0x70] sm:$0xf8]
        %v1198 = vld [vmem:[#allocation2 + $0x78] sm:$0xf]
        %v1199 = vld [vmem:[#allocation2 + $0x80] sm:$0xf8]
        %v1200 = vld [vmem:[#allocation2 + $0x88] sm:$0xf]
        %v1201 = vld [vmem:[#allocation2 + $0x90] sm:$0xf8]
        %v1202 = vld [vmem:[#allocation2 + $0x98] sm:$0xf]
        %v1203 = vld [vmem:[#allocation2 + $0xa0] sm:$0xf8]
        %v1204 = vld [vmem:[#allocation2 + $0xa8] sm:$0xf]
        %v1205 = vld [vmem:[#allocation2 + $0xb0] sm:$0xf8]
        %v1206 = vld [vmem:[#allocation2 + $0xb8] sm:$0xf]
        %v1207 = vld [vmem:[#allocation2 + $0xc0] sm:$0xf8]
        %v1208 = vld [vmem:[#allocation2 + $0xc8] sm:$0xf]
        %v1209 = vld [vmem:[#allocation2 + $0xd0] sm:$0xf8]
        %v1210 = vld [vmem:[#allocation2 + $0xd8] sm:$0xf]
        %v1211 = vld [vmem:[#allocation2 + $0xe0] sm:$0xf8]
        %v1212 = vld [vmem:[#allocation2 + $0xe8] sm:$0xf]
        %v1213 = vld [vmem:[#allocation2 + $0xf0] sm:$0xf8]
        %v1214 = vld [vmem:[#allocation2 + $0xf8] sm:$0xf]
        %vm1215 = vsmask.f32 4352
        %v1217 = vshrl.u32 %v1183, 16
        %v1219 = vrot.slane %v1217, 3
        %v1220 = vshll.u32 %v1183, 16
        %v1222 = vrot.slane %v1220, 4
        %v1223 = vor.u32 %v1219, %v1222
        %v1225 = vshrl.u32 %v1184, 16
        %v1227 = vrot.slane %v1225, 3
        %v1228 = vshll.u32 %v1184, 16
        %v1230 = vrot.slane %v1228, 4
        %v1231 = vor.u32 %v1227, %v1230
        %v1232 = vsel %vm1215, %v1223, %v1231
        %v1234 = vshrl.u32 %v1185, 16
        %v1236 = vrot.slane %v1234, 3
        %v1237 = vshll.u32 %v1185, 16
        %v1239 = vrot.slane %v1237, 4
        %v1240 = vor.u32 %v1236, %v1239
        %v1242 = vshrl.u32 %v1186, 16
        %v1244 = vrot.slane %v1242, 3
        %v1245 = vshll.u32 %v1186, 16
        %v1247 = vrot.slane %v1245, 4
        %v1248 = vor.u32 %v1244, %v1247
        %v1249 = vsel %vm1215, %v1240, %v1248
        %v1251 = vshrl.u32 %v1187, 16
        %v1253 = vrot.slane %v1251, 3
        %v1254 = vshll.u32 %v1187, 16
        %v1256 = vrot.slane %v1254, 4
        %v1257 = vor.u32 %v1253, %v1256
        %v1259 = vshrl.u32 %v1188, 16
        %v1261 = vrot.slane %v1259, 3
        %v1262 = vshll.u32 %v1188, 16
        %v1264 = vrot.slane %v1262, 4
        %v1265 = vor.u32 %v1261, %v1264
        %v1266 = vsel %vm1215, %v1257, %v1265
        %v1268 = vshrl.u32 %v1189, 16
        %v1270 = vrot.slane %v1268, 3
        %v1271 = vshll.u32 %v1189, 16
        %v1273 = vrot.slane %v1271, 4
        %v1274 = vor.u32 %v1270, %v1273
        %v1276 = vshrl.u32 %v1190, 16
        %v1278 = vrot.slane %v1276, 3
        %v1279 = vshll.u32 %v1190, 16
        %v1281 = vrot.slane %v1279, 4
        %v1282 = vor.u32 %v1278, %v1281
        %v1283 = vsel %vm1215, %v1274, %v1282
        %v1285 = vshrl.u32 %v1191, 16
        %v1287 = vrot.slane %v1285, 3
        %v1288 = vshll.u32 %v1191, 16
        %v1290 = vrot.slane %v1288, 4
        %v1291 = vor.u32 %v1287, %v1290
        %v1293 = vshrl.u32 %v1192, 16
        %v1295 = vrot.slane %v1293, 3
        %v1296 = vshll.u32 %v1192, 16
        %v1298 = vrot.slane %v1296, 4
        %v1299 = vor.u32 %v1295, %v1298
        %v1300 = vsel %vm1215, %v1291, %v1299
        %v1302 = vshrl.u32 %v1193, 16
        %v1304 = vrot.slane %v1302, 3
        %v1305 = vshll.u32 %v1193, 16
        %v1307 = vrot.slane %v1305, 4
        %v1308 = vor.u32 %v1304, %v1307
        %v1310 = vshrl.u32 %v1194, 16
        %v1312 = vrot.slane %v1310, 3
        %v1313 = vshll.u32 %v1194, 16
        %v1315 = vrot.slane %v1313, 4
        %v1316 = vor.u32 %v1312, %v1315
        %v1317 = vsel %vm1215, %v1308, %v1316
        %v1319 = vshrl.u32 %v1195, 16
        %v1321 = vrot.slane %v1319, 3
        %v1322 = vshll.u32 %v1195, 16
        %v1324 = vrot.slane %v1322, 4
        %v1325 = vor.u32 %v1321, %v1324
        %v1327 = vshrl.u32 %v1196, 16
        %v1329 = vrot.slane %v1327, 3
        %v1330 = vshll.u32 %v1196, 16
        %v1332 = vrot.slane %v1330, 4
        %v1333 = vor.u32 %v1329, %v1332
        %v1334 = vsel %vm1215, %v1325, %v1333
        %v1336 = vshrl.u32 %v1197, 16
        %v1338 = vrot.slane %v1336, 3
        %v1339 = vshll.u32 %v1197, 16
        %v1341 = vrot.slane %v1339, 4
        %v1342 = vor.u32 %v1338, %v1341
        %v1344 = vshrl.u32 %v1198, 16
        %v1346 = vrot.slane %v1344, 3
        %v1347 = vshll.u32 %v1198, 16
        %v1349 = vrot.slane %v1347, 4
        %v1350 = vor.u32 %v1346, %v1349
        %v1351 = vsel %vm1215, %v1342, %v1350
        %v1353 = vshrl.u32 %v1199, 16
        %v1355 = vrot.slane %v1353, 3
        %v1356 = vshll.u32 %v1199, 16
        %v1358 = vrot.slane %v1356, 4
        %v1359 = vor.u32 %v1355, %v1358
        %v1361 = vshrl.u32 %v1200, 16
        %v1363 = vrot.slane %v1361, 3
        %v1364 = vshll.u32 %v1200, 16
        %v1366 = vrot.slane %v1364, 4
        %v1367 = vor.u32 %v1363, %v1366
        %v1368 = vsel %vm1215, %v1359, %v1367
        %v1370 = vshrl.u32 %v1201, 16
        %v1372 = vrot.slane %v1370, 3
        %v1373 = vshll.u32 %v1201, 16
        %v1375 = vrot.slane %v1373, 4
        %v1376 = vor.u32 %v1372, %v1375
        %v1378 = vshrl.u32 %v1202, 16
        %v1380 = vrot.slane %v1378, 3
        %v1381 = vshll.u32 %v1202, 16
        %v1383 = vrot.slane %v1381, 4
        %v1384 = vor.u32 %v1380, %v1383
        %v1385 = vsel %vm1215, %v1376, %v1384
        %v1387 = vshrl.u32 %v1203, 16
        %v1389 = vrot.slane %v1387, 3
        %v1390 = vshll.u32 %v1203, 16
        %v1392 = vrot.slane %v1390, 4
        %v1393 = vor.u32 %v1389, %v1392
        %v1395 = vshrl.u32 %v1204, 16
        %v1397 = vrot.slane %v1395, 3
        %v1398 = vshll.u32 %v1204, 16
        %v1400 = vrot.slane %v1398, 4
        %v1401 = vor.u32 %v1397, %v1400
        %v1402 = vsel %vm1215, %v1393, %v1401
        %v1404 = vshrl.u32 %v1205, 16
        %v1406 = vrot.slane %v1404, 3
        %v1407 = vshll.u32 %v1205, 16
        %v1409 = vrot.slane %v1407, 4
        %v1410 = vor.u32 %v1406, %v1409
        %v1412 = vshrl.u32 %v1206, 16
        %v1414 = vrot.slane %v1412, 3
        %v1415 = vshll.u32 %v1206, 16
        %v1417 = vrot.slane %v1415, 4
        %v1418 = vor.u32 %v1414, %v1417
        %v1419 = vsel %vm1215, %v1410, %v1418
        %v1421 = vshrl.u32 %v1207, 16
        %v1423 = vrot.slane %v1421, 3
        %v1424 = vshll.u32 %v1207, 16
        %v1426 = vrot.slane %v1424, 4
        %v1427 = vor.u32 %v1423, %v1426
        %v1429 = vshrl.u32 %v1208, 16
        %v1431 = vrot.slane %v1429, 3
        %v1432 = vshll.u32 %v1208, 16
        %v1434 = vrot.slane %v1432, 4
        %v1435 = vor.u32 %v1431, %v1434
        %v1436 = vsel %vm1215, %v1427, %v1435
        %v1438 = vshrl.u32 %v1209, 16
        %v1440 = vrot.slane %v1438, 3
        %v1441 = vshll.u32 %v1209, 16
        %v1443 = vrot.slane %v1441, 4
        %v1444 = vor.u32 %v1440, %v1443
        %v1446 = vshrl.u32 %v1210, 16
        %v1448 = vrot.slane %v1446, 3
        %v1449 = vshll.u32 %v1210, 16
        %v1451 = vrot.slane %v1449, 4
        %v1452 = vor.u32 %v1448, %v1451
        %v1453 = vsel %vm1215, %v1444, %v1452
        %v1455 = vshrl.u32 %v1211, 16
        %v1457 = vrot.slane %v1455, 3
        %v1458 = vshll.u32 %v1211, 16
        %v1460 = vrot.slane %v1458, 4
        %v1461 = vor.u32 %v1457, %v1460
        %v1463 = vshrl.u32 %v1212, 16
        %v1465 = vrot.slane %v1463, 3
        %v1466 = vshll.u32 %v1212, 16
        %v1468 = vrot.slane %v1466, 4
        %v1469 = vor.u32 %v1465, %v1468
        %v1470 = vsel %vm1215, %v1461, %v1469
        %v1472 = vshrl.u32 %v1213, 16
        %v1474 = vrot.slane %v1472, 3
        %v1475 = vshll.u32 %v1213, 16
        %v1477 = vrot.slane %v1475, 4
        %v1478 = vor.u32 %v1474, %v1477
        %v1480 = vshrl.u32 %v1214, 16
        %v1482 = vrot.slane %v1480, 3
        %v1483 = vshll.u32 %v1214, 16
        %v1485 = vrot.slane %v1483, 4
        %v1486 = vor.u32 %v1482, %v1485
        %v1487 = vsel %vm1215, %v1478, %v1486
        %1504 = vst [vmem:[#allocation3] sm:$0xff] %v1232
        %1505 = vst [vmem:[#allocation3 + $0x48] sm:$0xff] %v1249
        %1506 = vst [vmem:[#allocation3 + $0x90] sm:$0xff] %v1266
        %1507 = vst [vmem:[#allocation3 + $0xd8] sm:$0xff] %v1283
        %1508 = vst [vmem:[#allocation3 + $0x120] sm:$0xff] %v1300
        %1509 = vst [vmem:[#allocation3 + $0x168] sm:$0xff] %v1317
        %1510 = vst [vmem:[#allocation3 + $0x1b0] sm:$0xff] %v1334
        %1511 = vst [vmem:[#allocation3 + $0x1f8] sm:$0xff] %v1351
        %1512 = vst [vmem:[#allocation3 + $0x240] sm:$0xff] %v1368
        %1513 = vst [vmem:[#allocation3 + $0x288] sm:$0xff] %v1385
        %1514 = vst [vmem:[#allocation3 + $0x2d0] sm:$0xff] %v1402
        %1515 = vst [vmem:[#allocation3 + $0x318] sm:$0xff] %v1419
        %1516 = vst [vmem:[#allocation3 + $0x360] sm:$0xff] %v1436
        %1517 = vst [vmem:[#allocation3 + $0x3a8] sm:$0xff] %v1453
        %1518 = vst [vmem:[#allocation3 + $0x3f0] sm:$0xff] %v1470
        %1519 = vst [vmem:[#allocation3 + $0x438] sm:$0xff] %v1487
        %v1520 = vld [vmem:[#allocation2] sm:$0xf0]
        %v1521 = vld [vmem:[#allocation2 + $0x8] sm:$0xf]
        %v1522 = vld [vmem:[#allocation2 + $0x10] sm:$0xf0]
        %v1523 = vld [vmem:[#allocation2 + $0x18] sm:$0xf]
        %v1524 = vld [vmem:[#allocation2 + $0x20] sm:$0xf0]
        %v1525 = vld [vmem:[#allocation2 + $0x28] sm:$0xf]
        %v1526 = vld [vmem:[#allocation2 + $0x30] sm:$0xf0]
        %v1527 = vld [vmem:[#allocation2 + $0x38] sm:$0xf]
        %v1528 = vld [vmem:[#allocation2 + $0x40] sm:$0xf0]
        %v1529 = vld [vmem:[#allocation2 + $0x48] sm:$0xf]
        %v1530 = vld [vmem:[#allocation2 + $0x50] sm:$0xf0]
        %v1531 = vld [vmem:[#allocation2 + $0x58] sm:$0xf]
        %v1532 = vld [vmem:[#allocation2 + $0x60] sm:$0xf0]
        %v1533 = vld [vmem:[#allocation2 + $0x68] sm:$0xf]
        %v1534 = vld [vmem:[#allocation2 + $0x70] sm:$0xf0]
        %v1535 = vld [vmem:[#allocation2 + $0x78] sm:$0xf]
        %v1536 = vld [vmem:[#allocation2 + $0x80] sm:$0xf0]
        %v1537 = vld [vmem:[#allocation2 + $0x88] sm:$0xf]
        %v1538 = vld [vmem:[#allocation2 + $0x90] sm:$0xf0]
        %v1539 = vld [vmem:[#allocation2 + $0x98] sm:$0xf]
        %v1540 = vld [vmem:[#allocation2 + $0xa0] sm:$0xf0]
        %v1541 = vld [vmem:[#allocation2 + $0xa8] sm:$0xf]
        %v1542 = vld [vmem:[#allocation2 + $0xb0] sm:$0xf0]
        %v1543 = vld [vmem:[#allocation2 + $0xb8] sm:$0xf]
        %v1544 = vld [vmem:[#allocation2 + $0xc0] sm:$0xf0]
        %v1545 = vld [vmem:[#allocation2 + $0xc8] sm:$0xf]
        %v1546 = vld [vmem:[#allocation2 + $0xd0] sm:$0xf0]
        %v1547 = vld [vmem:[#allocation2 + $0xd8] sm:$0xf]
        %v1548 = vld [vmem:[#allocation2 + $0xe0] sm:$0xf0]
        %v1549 = vld [vmem:[#allocation2 + $0xe8] sm:$0xf]
        %v1550 = vld [vmem:[#allocation2 + $0xf0] sm:$0xf0]
        %v1551 = vld [vmem:[#allocation2 + $0xf8] sm:$0xf]
        %vm1584 = vcmask 1043456
        %v1585 = vrot.slane %v1520, 4
        %v1586 = vrot.slane %v1521, 4
        %v1587 = vsel %vm1584, %v1585, %v1586
        %v1588 = vrot.slane %v1522, 4
        %v1589 = vrot.slane %v1523, 4
        %v1590 = vsel %vm1584, %v1588, %v1589
        %v1591 = vrot.slane %v1524, 4
        %v1592 = vrot.slane %v1525, 4
        %v1593 = vsel %vm1584, %v1591, %v1592
        %v1594 = vrot.slane %v1526, 4
        %v1595 = vrot.slane %v1527, 4
        %v1596 = vsel %vm1584, %v1594, %v1595
        %v1597 = vrot.slane %v1528, 4
        %v1598 = vrot.slane %v1529, 4
        %v1599 = vsel %vm1584, %v1597, %v1598
        %v1600 = vrot.slane %v1530, 4
        %v1601 = vrot.slane %v1531, 4
        %v1602 = vsel %vm1584, %v1600, %v1601
        %v1603 = vrot.slane %v1532, 4
        %v1604 = vrot.slane %v1533, 4
        %v1605 = vsel %vm1584, %v1603, %v1604
        %v1606 = vrot.slane %v1534, 4
        %v1607 = vrot.slane %v1535, 4
        %v1608 = vsel %vm1584, %v1606, %v1607
        %v1609 = vrot.slane %v1536, 4
        %v1610 = vrot.slane %v1537, 4
        %v1611 = vsel %vm1584, %v1609, %v1610
        %v1612 = vrot.slane %v1538, 4
        %v1613 = vrot.slane %v1539, 4
        %v1614 = vsel %vm1584, %v1612, %v1613
        %v1615 = vrot.slane %v1540, 4
        %v1616 = vrot.slane %v1541, 4
        %v1617 = vsel %vm1584, %v1615, %v1616
        %v1618 = vrot.slane %v1542, 4
        %v1619 = vrot.slane %v1543, 4
        %v1620 = vsel %vm1584, %v1618, %v1619
        %v1621 = vrot.slane %v1544, 4
        %v1622 = vrot.slane %v1545, 4
        %v1623 = vsel %vm1584, %v1621, %v1622
        %v1624 = vrot.slane %v1546, 4
        %v1625 = vrot.slane %v1547, 4
        %v1626 = vsel %vm1584, %v1624, %v1625
        %v1627 = vrot.slane %v1548, 4
        %v1628 = vrot.slane %v1549, 4
        %v1629 = vsel %vm1584, %v1627, %v1628
        %v1630 = vrot.slane %v1550, 4
        %v1631 = vrot.slane %v1551, 4
        %v1632 = vsel %vm1584, %v1630, %v1631
        %1649 = vst [vmem:[#allocation3 + $0x8] sm:$0xff] %v1587
        %1650 = vst [vmem:[#allocation3 + $0x50] sm:$0xff] %v1590
        %1651 = vst [vmem:[#allocation3 + $0x98] sm:$0xff] %v1593
        %1652 = vst [vmem:[#allocation3 + $0xe0] sm:$0xff] %v1596
        %1653 = vst [vmem:[#allocation3 + $0x128] sm:$0xff] %v1599
        %1654 = vst [vmem:[#allocation3 + $0x170] sm:$0xff] %v1602
        %1655 = vst [vmem:[#allocation3 + $0x1b8] sm:$0xff] %v1605
        %1656 = vst [vmem:[#allocation3 + $0x200] sm:$0xff] %v1608
        %1657 = vst [vmem:[#allocation3 + $0x248] sm:$0xff] %v1611
        %1658 = vst [vmem:[#allocation3 + $0x290] sm:$0xff] %v1614
        %1659 = vst [vmem:[#allocation3 + $0x2d8] sm:$0xff] %v1617
        %1660 = vst [vmem:[#allocation3 + $0x320] sm:$0xff] %v1620
        %1661 = vst [vmem:[#allocation3 + $0x368] sm:$0xff] %v1623
        %1662 = vst [vmem:[#allocation3 + $0x3b0] sm:$0xff] %v1626
        %1663 = vst [vmem:[#allocation3 + $0x3f8] sm:$0xff] %v1629
        %1664 = vst [vmem:[#allocation3 + $0x440] sm:$0xff] %v1632
        %v1665 = vld [vmem:[#allocation2] sm:$0xf0]
        %v1666 = vld [vmem:[#allocation2 + $0x8] sm:$0x1f]
        %v1667 = vld [vmem:[#allocation2 + $0x10] sm:$0xf0]
        %v1668 = vld [vmem:[#allocation2 + $0x18] sm:$0x1f]
        %v1669 = vld [vmem:[#allocation2 + $0x20] sm:$0xf0]
        %v1670 = vld [vmem:[#allocation2 + $0x28] sm:$0x1f]
        %v1671 = vld [vmem:[#allocation2 + $0x30] sm:$0xf0]
        %v1672 = vld [vmem:[#allocation2 + $0x38] sm:$0x1f]
        %v1673 = vld [vmem:[#allocation2 + $0x40] sm:$0xf0]
        %v1674 = vld [vmem:[#allocation2 + $0x48] sm:$0x1f]
        %v1675 = vld [vmem:[#allocation2 + $0x50] sm:$0xf0]
        %v1676 = vld [vmem:[#allocation2 + $0x58] sm:$0x1f]
        %v1677 = vld [vmem:[#allocation2 + $0x60] sm:$0xf0]
        %v1678 = vld [vmem:[#allocation2 + $0x68] sm:$0x1f]
        %v1679 = vld [vmem:[#allocation2 + $0x70] sm:$0xf0]
        %v1680 = vld [vmem:[#allocation2 + $0x78] sm:$0x1f]
        %v1681 = vld [vmem:[#allocation2 + $0x80] sm:$0xf0]
        %v1682 = vld [vmem:[#allocation2 + $0x88] sm:$0x1f]
        %v1683 = vld [vmem:[#allocation2 + $0x90] sm:$0xf0]
        %v1684 = vld [vmem:[#allocation2 + $0x98] sm:$0x1f]
        %v1685 = vld [vmem:[#allocation2 + $0xa0] sm:$0xf0]
        %v1686 = vld [vmem:[#allocation2 + $0xa8] sm:$0x1f]
        %v1687 = vld [vmem:[#allocation2 + $0xb0] sm:$0xf0]
        %v1688 = vld [vmem:[#allocation2 + $0xb8] sm:$0x1f]
        %v1689 = vld [vmem:[#allocation2 + $0xc0] sm:$0xf0]
        %v1690 = vld [vmem:[#allocation2 + $0xc8] sm:$0x1f]
        %v1691 = vld [vmem:[#allocation2 + $0xd0] sm:$0xf0]
        %v1692 = vld [vmem:[#allocation2 + $0xd8] sm:$0x1f]
        %v1693 = vld [vmem:[#allocation2 + $0xe0] sm:$0xf0]
        %v1694 = vld [vmem:[#allocation2 + $0xe8] sm:$0x1f]
        %v1695 = vld [vmem:[#allocation2 + $0xf0] sm:$0xf0]
        %v1696 = vld [vmem:[#allocation2 + $0xf8] sm:$0x1f]
        %vm1697 = vsmask.f32 3328
        %v1699 = vshrl.u32 %v1665, 16
        %v1701 = vrot.slane %v1699, 4
        %v1702 = vshll.u32 %v1665, 16
        %v1704 = vrot.slane %v1702, 5
        %v1705 = vor.u32 %v1701, %v1704
        %v1707 = vshrl.u32 %v1666, 16
        %v1709 = vrot.slane %v1707, 4
        %v1710 = vshll.u32 %v1666, 16
        %v1712 = vrot.slane %v1710, 5
        %v1713 = vor.u32 %v1709, %v1712
        %v1714 = vsel %vm1697, %v1705, %v1713
        %v1716 = vshrl.u32 %v1667, 16
        %v1718 = vrot.slane %v1716, 4
        %v1719 = vshll.u32 %v1667, 16
        %v1721 = vrot.slane %v1719, 5
        %v1722 = vor.u32 %v1718, %v1721
        %v1724 = vshrl.u32 %v1668, 16
        %v1726 = vrot.slane %v1724, 4
        %v1727 = vshll.u32 %v1668, 16
        %v1729 = vrot.slane %v1727, 5
        %v1730 = vor.u32 %v1726, %v1729
        %v1731 = vsel %vm1697, %v1722, %v1730
        %v1733 = vshrl.u32 %v1669, 16
        %v1735 = vrot.slane %v1733, 4
        %v1736 = vshll.u32 %v1669, 16
        %v1738 = vrot.slane %v1736, 5
        %v1739 = vor.u32 %v1735, %v1738
        %v1741 = vshrl.u32 %v1670, 16
        %v1743 = vrot.slane %v1741, 4
        %v1744 = vshll.u32 %v1670, 16
        %v1746 = vrot.slane %v1744, 5
        %v1747 = vor.u32 %v1743, %v1746
        %v1748 = vsel %vm1697, %v1739, %v1747
        %v1750 = vshrl.u32 %v1671, 16
        %v1752 = vrot.slane %v1750, 4
        %v1753 = vshll.u32 %v1671, 16
        %v1755 = vrot.slane %v1753, 5
        %v1756 = vor.u32 %v1752, %v1755
        %v1758 = vshrl.u32 %v1672, 16
        %v1760 = vrot.slane %v1758, 4
        %v1761 = vshll.u32 %v1672, 16
        %v1763 = vrot.slane %v1761, 5
        %v1764 = vor.u32 %v1760, %v1763
        %v1765 = vsel %vm1697, %v1756, %v1764
        %v1767 = vshrl.u32 %v1673, 16
        %v1769 = vrot.slane %v1767, 4
        %v1770 = vshll.u32 %v1673, 16
        %v1772 = vrot.slane %v1770, 5
        %v1773 = vor.u32 %v1769, %v1772
        %v1775 = vshrl.u32 %v1674, 16
        %v1777 = vrot.slane %v1775, 4
        %v1778 = vshll.u32 %v1674, 16
        %v1780 = vrot.slane %v1778, 5
        %v1781 = vor.u32 %v1777, %v1780
        %v1782 = vsel %vm1697, %v1773, %v1781
        %v1784 = vshrl.u32 %v1675, 16
        %v1786 = vrot.slane %v1784, 4
        %v1787 = vshll.u32 %v1675, 16
        %v1789 = vrot.slane %v1787, 5
        %v1790 = vor.u32 %v1786, %v1789
        %v1792 = vshrl.u32 %v1676, 16
        %v1794 = vrot.slane %v1792, 4
        %v1795 = vshll.u32 %v1676, 16
        %v1797 = vrot.slane %v1795, 5
        %v1798 = vor.u32 %v1794, %v1797
        %v1799 = vsel %vm1697, %v1790, %v1798
        %v1801 = vshrl.u32 %v1677, 16
        %v1803 = vrot.slane %v1801, 4
        %v1804 = vshll.u32 %v1677, 16
        %v1806 = vrot.slane %v1804, 5
        %v1807 = vor.u32 %v1803, %v1806
        %v1809 = vshrl.u32 %v1678, 16
        %v1811 = vrot.slane %v1809, 4
        %v1812 = vshll.u32 %v1678, 16
        %v1814 = vrot.slane %v1812, 5
        %v1815 = vor.u32 %v1811, %v1814
        %v1816 = vsel %vm1697, %v1807, %v1815
        %v1818 = vshrl.u32 %v1679, 16
        %v1820 = vrot.slane %v1818, 4
        %v1821 = vshll.u32 %v1679, 16
        %v1823 = vrot.slane %v1821, 5
        %v1824 = vor.u32 %v1820, %v1823
        %v1826 = vshrl.u32 %v1680, 16
        %v1828 = vrot.slane %v1826, 4
        %v1829 = vshll.u32 %v1680, 16
        %v1831 = vrot.slane %v1829, 5
        %v1832 = vor.u32 %v1828, %v1831
        %v1833 = vsel %vm1697, %v1824, %v1832
        %v1835 = vshrl.u32 %v1681, 16
        %v1837 = vrot.slane %v1835, 4
        %v1838 = vshll.u32 %v1681, 16
        %v1840 = vrot.slane %v1838, 5
        %v1841 = vor.u32 %v1837, %v1840
        %v1843 = vshrl.u32 %v1682, 16
        %v1845 = vrot.slane %v1843, 4
        %v1846 = vshll.u32 %v1682, 16
        %v1848 = vrot.slane %v1846, 5
        %v1849 = vor.u32 %v1845, %v1848
        %v1850 = vsel %vm1697, %v1841, %v1849
        %v1852 = vshrl.u32 %v1683, 16
        %v1854 = vrot.slane %v1852, 4
        %v1855 = vshll.u32 %v1683, 16
        %v1857 = vrot.slane %v1855, 5
        %v1858 = vor.u32 %v1854, %v1857
        %v1860 = vshrl.u32 %v1684, 16
        %v1862 = vrot.slane %v1860, 4
        %v1863 = vshll.u32 %v1684, 16
        %v1865 = vrot.slane %v1863, 5
        %v1866 = vor.u32 %v1862, %v1865
        %v1867 = vsel %vm1697, %v1858, %v1866
        %v1869 = vshrl.u32 %v1685, 16
        %v1871 = vrot.slane %v1869, 4
        %v1872 = vshll.u32 %v1685, 16
        %v1874 = vrot.slane %v1872, 5
        %v1875 = vor.u32 %v1871, %v1874
        %v1877 = vshrl.u32 %v1686, 16
        %v1879 = vrot.slane %v1877, 4
        %v1880 = vshll.u32 %v1686, 16
        %v1882 = vrot.slane %v1880, 5
        %v1883 = vor.u32 %v1879, %v1882
        %v1884 = vsel %vm1697, %v1875, %v1883
        %v1886 = vshrl.u32 %v1687, 16
        %v1888 = vrot.slane %v1886, 4
        %v1889 = vshll.u32 %v1687, 16
        %v1891 = vrot.slane %v1889, 5
        %v1892 = vor.u32 %v1888, %v1891
        %v1894 = vshrl.u32 %v1688, 16
        %v1896 = vrot.slane %v1894, 4
        %v1897 = vshll.u32 %v1688, 16
        %v1899 = vrot.slane %v1897, 5
        %v1900 = vor.u32 %v1896, %v1899
        %v1901 = vsel %vm1697, %v1892, %v1900
        %v1903 = vshrl.u32 %v1689, 16
        %v1905 = vrot.slane %v1903, 4
        %v1906 = vshll.u32 %v1689, 16
        %v1908 = vrot.slane %v1906, 5
        %v1909 = vor.u32 %v1905, %v1908
        %v1911 = vshrl.u32 %v1690, 16
        %v1913 = vrot.slane %v1911, 4
        %v1914 = vshll.u32 %v1690, 16
        %v1916 = vrot.slane %v1914, 5
        %v1917 = vor.u32 %v1913, %v1916
        %v1918 = vsel %vm1697, %v1909, %v1917
        %v1920 = vshrl.u32 %v1691, 16
        %v1922 = vrot.slane %v1920, 4
        %v1923 = vshll.u32 %v1691, 16
        %v1925 = vrot.slane %v1923, 5
        %v1926 = vor.u32 %v1922, %v1925
        %v1928 = vshrl.u32 %v1692, 16
        %v1930 = vrot.slane %v1928, 4
        %v1931 = vshll.u32 %v1692, 16
        %v1933 = vrot.slane %v1931, 5
        %v1934 = vor.u32 %v1930, %v1933
        %v1935 = vsel %vm1697, %v1926, %v1934
        %v1937 = vshrl.u32 %v1693, 16
        %v1939 = vrot.slane %v1937, 4
        %v1940 = vshll.u32 %v1693, 16
        %v1942 = vrot.slane %v1940, 5
        %v1943 = vor.u32 %v1939, %v1942
        %v1945 = vshrl.u32 %v1694, 16
        %v1947 = vrot.slane %v1945, 4
        %v1948 = vshll.u32 %v1694, 16
        %v1950 = vrot.slane %v1948, 5
        %v1951 = vor.u32 %v1947, %v1950
        %v1952 = vsel %vm1697, %v1943, %v1951
        %v1954 = vshrl.u32 %v1695, 16
        %v1956 = vrot.slane %v1954, 4
        %v1957 = vshll.u32 %v1695, 16
        %v1959 = vrot.slane %v1957, 5
        %v1960 = vor.u32 %v1956, %v1959
        %v1962 = vshrl.u32 %v1696, 16
        %v1964 = vrot.slane %v1962, 4
        %v1965 = vshll.u32 %v1696, 16
        %v1967 = vrot.slane %v1965, 5
        %v1968 = vor.u32 %v1964, %v1967
        %v1969 = vsel %vm1697, %v1960, %v1968
        %1986 = vst [vmem:[#allocation3 + $0x10] sm:$0xff] %v1714
        %1987 = vst [vmem:[#allocation3 + $0x58] sm:$0xff] %v1731
        %1988 = vst [vmem:[#allocation3 + $0xa0] sm:$0xff] %v1748
        %1989 = vst [vmem:[#allocation3 + $0xe8] sm:$0xff] %v1765
        %1990 = vst [vmem:[#allocation3 + $0x130] sm:$0xff] %v1782
        %1991 = vst [vmem:[#allocation3 + $0x178] sm:$0xff] %v1799
        %1992 = vst [vmem:[#allocation3 + $0x1c0] sm:$0xff] %v1816
        %1993 = vst [vmem:[#allocation3 + $0x208] sm:$0xff] %v1833
        %1994 = vst [vmem:[#allocation3 + $0x250] sm:$0xff] %v1850
        %1995 = vst [vmem:[#allocation3 + $0x298] sm:$0xff] %v1867
        %1996 = vst [vmem:[#allocation3 + $0x2e0] sm:$0xff] %v1884
        %1997 = vst [vmem:[#allocation3 + $0x328] sm:$0xff] %v1901
        %1998 = vst [vmem:[#allocation3 + $0x370] sm:$0xff] %v1918
        %1999 = vst [vmem:[#allocation3 + $0x3b8] sm:$0xff] %v1935
        %2000 = vst [vmem:[#allocation3 + $0x400] sm:$0xff] %v1952
        %2001 = vst [vmem:[#allocation3 + $0x448] sm:$0xff] %v1969
        %s2002 = scalar_lea.vmem [#allocation2], 16
        %v2003 = vld [vmem:[%s2002] sm:$0xf8]
        %v2004 = vld [vmem:[%s2002 + $0x8] sm:$0xf]
        %v2005 = vld [vmem:[%s2002 + $0x10] sm:$0xf8]
        %v2006 = vld [vmem:[%s2002 + $0x18] sm:$0xf]
        %v2007 = vld [vmem:[%s2002 + $0x20] sm:$0xf8]
        %v2008 = vld [vmem:[%s2002 + $0x28] sm:$0xf]
        %v2009 = vld [vmem:[%s2002 + $0x30] sm:$0xf8]
        %v2010 = vld [vmem:[%s2002 + $0x38] sm:$0xf]
        %v2011 = vld [vmem:[%s2002 + $0x40] sm:$0xf8]
        %v2012 = vld [vmem:[%s2002 + $0x48] sm:$0xf]
        %v2013 = vld [vmem:[%s2002 + $0x50] sm:$0xf8]
        %v2014 = vld [vmem:[%s2002 + $0x58] sm:$0xf]
        %v2015 = vld [vmem:[%s2002 + $0x60] sm:$0xf8]
        %v2016 = vld [vmem:[%s2002 + $0x68] sm:$0xf]
        %v2017 = vld [vmem:[%s2002 + $0x70] sm:$0xf8]
        %v2018 = vld [vmem:[%s2002 + $0x78] sm:$0xf]
        %v2019 = vld [vmem:[%s2002 + $0x80] sm:$0xf8]
        %v2020 = vld [vmem:[%s2002 + $0x88] sm:$0xf]
        %v2021 = vld [vmem:[%s2002 + $0x90] sm:$0xf8]
        %v2022 = vld [vmem:[%s2002 + $0x98] sm:$0xf]
        %v2023 = vld [vmem:[%s2002 + $0xa0] sm:$0xf8]
        %v2024 = vld [vmem:[%s2002 + $0xa8] sm:$0xf]
        %v2025 = vld [vmem:[%s2002 + $0xb0] sm:$0xf8]
        %v2026 = vld [vmem:[%s2002 + $0xb8] sm:$0xf]
        %v2027 = vld [vmem:[%s2002 + $0xc0] sm:$0xf8]
        %v2028 = vld [vmem:[%s2002 + $0xc8] sm:$0xf]
        %v2029 = vld [vmem:[%s2002 + $0xd0] sm:$0xf8]
        %v2030 = vld [vmem:[%s2002 + $0xd8] sm:$0xf]
        %v2031 = vld [vmem:[%s2002 + $0xe0] sm:$0xf8]
        %v2032 = vld [vmem:[%s2002 + $0xe8] sm:$0xf]
        %v2033 = vld [vmem:[%s2002 + $0xf0] sm:$0xf8]
        %v2034 = vld [vmem:[%s2002 + $0xf8] sm:$0xf]
        %v2036 = vshrl.u32 %v2003, 16
        %v2038 = vrot.slane %v2036, 3
        %v2039 = vshll.u32 %v2003, 16
        %v2041 = vrot.slane %v2039, 4
        %v2042 = vor.u32 %v2038, %v2041
        %v2044 = vshrl.u32 %v2004, 16
        %v2046 = vrot.slane %v2044, 3
        %v2047 = vshll.u32 %v2004, 16
        %v2049 = vrot.slane %v2047, 4
        %v2050 = vor.u32 %v2046, %v2049
        %v2051 = vsel %vm1215, %v2042, %v2050
        %v2053 = vshrl.u32 %v2005, 16
        %v2055 = vrot.slane %v2053, 3
        %v2056 = vshll.u32 %v2005, 16
        %v2058 = vrot.slane %v2056, 4
        %v2059 = vor.u32 %v2055, %v2058
        %v2061 = vshrl.u32 %v2006, 16
        %v2063 = vrot.slane %v2061, 3
        %v2064 = vshll.u32 %v2006, 16
        %v2066 = vrot.slane %v2064, 4
        %v2067 = vor.u32 %v2063, %v2066
        %v2068 = vsel %vm1215, %v2059, %v2067
        %v2070 = vshrl.u32 %v2007, 16
        %v2072 = vrot.slane %v2070, 3
        %v2073 = vshll.u32 %v2007, 16
        %v2075 = vrot.slane %v2073, 4
        %v2076 = vor.u32 %v2072, %v2075
        %v2078 = vshrl.u32 %v2008, 16
        %v2080 = vrot.slane %v2078, 3
        %v2081 = vshll.u32 %v2008, 16
        %v2083 = vrot.slane %v2081, 4
        %v2084 = vor.u32 %v2080, %v2083
        %v2085 = vsel %vm1215, %v2076, %v2084
        %v2087 = vshrl.u32 %v2009, 16
        %v2089 = vrot.slane %v2087, 3
        %v2090 = vshll.u32 %v2009, 16
        %v2092 = vrot.slane %v2090, 4
        %v2093 = vor.u32 %v2089, %v2092
        %v2095 = vshrl.u32 %v2010, 16
        %v2097 = vrot.slane %v2095, 3
        %v2098 = vshll.u32 %v2010, 16
        %v2100 = vrot.slane %v2098, 4
        %v2101 = vor.u32 %v2097, %v2100
        %v2102 = vsel %vm1215, %v2093, %v2101
        %v2104 = vshrl.u32 %v2011, 16
        %v2106 = vrot.slane %v2104, 3
        %v2107 = vshll.u32 %v2011, 16
        %v2109 = vrot.slane %v2107, 4
        %v2110 = vor.u32 %v2106, %v2109
        %v2112 = vshrl.u32 %v2012, 16
        %v2114 = vrot.slane %v2112, 3
        %v2115 = vshll.u32 %v2012, 16
        %v2117 = vrot.slane %v2115, 4
        %v2118 = vor.u32 %v2114, %v2117
        %v2119 = vsel %vm1215, %v2110, %v2118
        %v2121 = vshrl.u32 %v2013, 16
        %v2123 = vrot.slane %v2121, 3
        %v2124 = vshll.u32 %v2013, 16
        %v2126 = vrot.slane %v2124, 4
        %v2127 = vor.u32 %v2123, %v2126
        %v2129 = vshrl.u32 %v2014, 16
        %v2131 = vrot.slane %v2129, 3
        %v2132 = vshll.u32 %v2014, 16
        %v2134 = vrot.slane %v2132, 4
        %v2135 = vor.u32 %v2131, %v2134
        %v2136 = vsel %vm1215, %v2127, %v2135
        %v2138 = vshrl.u32 %v2015, 16
        %v2140 = vrot.slane %v2138, 3
        %v2141 = vshll.u32 %v2015, 16
        %v2143 = vrot.slane %v2141, 4
        %v2144 = vor.u32 %v2140, %v2143
        %v2146 = vshrl.u32 %v2016, 16
        %v2148 = vrot.slane %v2146, 3
        %v2149 = vshll.u32 %v2016, 16
        %v2151 = vrot.slane %v2149, 4
        %v2152 = vor.u32 %v2148, %v2151
        %v2153 = vsel %vm1215, %v2144, %v2152
        %v2155 = vshrl.u32 %v2017, 16
        %v2157 = vrot.slane %v2155, 3
        %v2158 = vshll.u32 %v2017, 16
        %v2160 = vrot.slane %v2158, 4
        %v2161 = vor.u32 %v2157, %v2160
        %v2163 = vshrl.u32 %v2018, 16
        %v2165 = vrot.slane %v2163, 3
        %v2166 = vshll.u32 %v2018, 16
        %v2168 = vrot.slane %v2166, 4
        %v2169 = vor.u32 %v2165, %v2168
        %v2170 = vsel %vm1215, %v2161, %v2169
        %v2172 = vshrl.u32 %v2019, 16
        %v2174 = vrot.slane %v2172, 3
        %v2175 = vshll.u32 %v2019, 16
        %v2177 = vrot.slane %v2175, 4
        %v2178 = vor.u32 %v2174, %v2177
        %v2180 = vshrl.u32 %v2020, 16
        %v2182 = vrot.slane %v2180, 3
        %v2183 = vshll.u32 %v2020, 16
        %v2185 = vrot.slane %v2183, 4
        %v2186 = vor.u32 %v2182, %v2185
        %v2187 = vsel %vm1215, %v2178, %v2186
        %v2189 = vshrl.u32 %v2021, 16
        %v2191 = vrot.slane %v2189, 3
        %v2192 = vshll.u32 %v2021, 16
        %v2194 = vrot.slane %v2192, 4
        %v2195 = vor.u32 %v2191, %v2194
        %v2197 = vshrl.u32 %v2022, 16
        %v2199 = vrot.slane %v2197, 3
        %v2200 = vshll.u32 %v2022, 16
        %v2202 = vrot.slane %v2200, 4
        %v2203 = vor.u32 %v2199, %v2202
        %v2204 = vsel %vm1215, %v2195, %v2203
        %v2206 = vshrl.u32 %v2023, 16
        %v2208 = vrot.slane %v2206, 3
        %v2209 = vshll.u32 %v2023, 16
        %v2211 = vrot.slane %v2209, 4
        %v2212 = vor.u32 %v2208, %v2211
        %v2214 = vshrl.u32 %v2024, 16
        %v2216 = vrot.slane %v2214, 3
        %v2217 = vshll.u32 %v2024, 16
        %v2219 = vrot.slane %v2217, 4
        %v2220 = vor.u32 %v2216, %v2219
        %v2221 = vsel %vm1215, %v2212, %v2220
        %v2223 = vshrl.u32 %v2025, 16
        %v2225 = vrot.slane %v2223, 3
        %v2226 = vshll.u32 %v2025, 16
        %v2228 = vrot.slane %v2226, 4
        %v2229 = vor.u32 %v2225, %v2228
        %v2231 = vshrl.u32 %v2026, 16
        %v2233 = vrot.slane %v2231, 3
        %v2234 = vshll.u32 %v2026, 16
        %v2236 = vrot.slane %v2234, 4
        %v2237 = vor.u32 %v2233, %v2236
        %v2238 = vsel %vm1215, %v2229, %v2237
        %v2240 = vshrl.u32 %v2027, 16
        %v2242 = vrot.slane %v2240, 3
        %v2243 = vshll.u32 %v2027, 16
        %v2245 = vrot.slane %v2243, 4
        %v2246 = vor.u32 %v2242, %v2245
        %v2248 = vshrl.u32 %v2028, 16
        %v2250 = vrot.slane %v2248, 3
        %v2251 = vshll.u32 %v2028, 16
        %v2253 = vrot.slane %v2251, 4
        %v2254 = vor.u32 %v2250, %v2253
        %v2255 = vsel %vm1215, %v2246, %v2254
        %v2257 = vshrl.u32 %v2029, 16
        %v2259 = vrot.slane %v2257, 3
        %v2260 = vshll.u32 %v2029, 16
        %v2262 = vrot.slane %v2260, 4
        %v2263 = vor.u32 %v2259, %v2262
        %v2265 = vshrl.u32 %v2030, 16
        %v2267 = vrot.slane %v2265, 3
        %v2268 = vshll.u32 %v2030, 16
        %v2270 = vrot.slane %v2268, 4
        %v2271 = vor.u32 %v2267, %v2270
        %v2272 = vsel %vm1215, %v2263, %v2271
        %v2274 = vshrl.u32 %v2031, 16
        %v2276 = vrot.slane %v2274, 3
        %v2277 = vshll.u32 %v2031, 16
        %v2279 = vrot.slane %v2277, 4
        %v2280 = vor.u32 %v2276, %v2279
        %v2282 = vshrl.u32 %v2032, 16
        %v2284 = vrot.slane %v2282, 3
        %v2285 = vshll.u32 %v2032, 16
        %v2287 = vrot.slane %v2285, 4
        %v2288 = vor.u32 %v2284, %v2287
        %v2289 = vsel %vm1215, %v2280, %v2288
        %v2291 = vshrl.u32 %v2033, 16
        %v2293 = vrot.slane %v2291, 3
        %v2294 = vshll.u32 %v2033, 16
        %v2296 = vrot.slane %v2294, 4
        %v2297 = vor.u32 %v2293, %v2296
        %v2299 = vshrl.u32 %v2034, 16
        %v2301 = vrot.slane %v2299, 3
        %v2302 = vshll.u32 %v2034, 16
        %v2304 = vrot.slane %v2302, 4
        %v2305 = vor.u32 %v2301, %v2304
        %v2306 = vsel %vm1215, %v2297, %v2305
        %2323 = vst [vmem:[#allocation3 + $0x18] sm:$0xff] %v2051
        %2324 = vst [vmem:[#allocation3 + $0x60] sm:$0xff] %v2068
        %2325 = vst [vmem:[#allocation3 + $0xa8] sm:$0xff] %v2085
        %2326 = vst [vmem:[#allocation3 + $0xf0] sm:$0xff] %v2102
        %2327 = vst [vmem:[#allocation3 + $0x138] sm:$0xff] %v2119
        %2328 = vst [vmem:[#allocation3 + $0x180] sm:$0xff] %v2136
        %2329 = vst [vmem:[#allocation3 + $0x1c8] sm:$0xff] %v2153
        %2330 = vst [vmem:[#allocation3 + $0x210] sm:$0xff] %v2170
        %2331 = vst [vmem:[#allocation3 + $0x258] sm:$0xff] %v2187
        %2332 = vst [vmem:[#allocation3 + $0x2a0] sm:$0xff] %v2204
        %2333 = vst [vmem:[#allocation3 + $0x2e8] sm:$0xff] %v2221
        %2334 = vst [vmem:[#allocation3 + $0x330] sm:$0xff] %v2238
        %2335 = vst [vmem:[#allocation3 + $0x378] sm:$0xff] %v2255
        %2336 = vst [vmem:[#allocation3 + $0x3c0] sm:$0xff] %v2272
        %2337 = vst [vmem:[#allocation3 + $0x408] sm:$0xff] %v2289
        %2338 = vst [vmem:[#allocation3 + $0x450] sm:$0xff] %v2306
        %v2339 = vld [vmem:[%s2002] sm:$0xf0]
        %v2340 = vld [vmem:[%s2002 + $0x8] sm:$0xf]
        %v2341 = vld [vmem:[%s2002 + $0x10] sm:$0xf0]
        %v2342 = vld [vmem:[%s2002 + $0x18] sm:$0xf]
        %v2343 = vld [vmem:[%s2002 + $0x20] sm:$0xf0]
        %v2344 = vld [vmem:[%s2002 + $0x28] sm:$0xf]
        %v2345 = vld [vmem:[%s2002 + $0x30] sm:$0xf0]
        %v2346 = vld [vmem:[%s2002 + $0x38] sm:$0xf]
        %v2347 = vld [vmem:[%s2002 + $0x40] sm:$0xf0]
        %v2348 = vld [vmem:[%s2002 + $0x48] sm:$0xf]
        %v2349 = vld [vmem:[%s2002 + $0x50] sm:$0xf0]
        %v2350 = vld [vmem:[%s2002 + $0x58] sm:$0xf]
        %v2351 = vld [vmem:[%s2002 + $0x60] sm:$0xf0]
        %v2352 = vld [vmem:[%s2002 + $0x68] sm:$0xf]
        %v2353 = vld [vmem:[%s2002 + $0x70] sm:$0xf0]
        %v2354 = vld [vmem:[%s2002 + $0x78] sm:$0xf]
        %v2355 = vld [vmem:[%s2002 + $0x80] sm:$0xf0]
        %v2356 = vld [vmem:[%s2002 + $0x88] sm:$0xf]
        %v2357 = vld [vmem:[%s2002 + $0x90] sm:$0xf0]
        %v2358 = vld [vmem:[%s2002 + $0x98] sm:$0xf]
        %v2359 = vld [vmem:[%s2002 + $0xa0] sm:$0xf0]
        %v2360 = vld [vmem:[%s2002 + $0xa8] sm:$0xf]
        %v2361 = vld [vmem:[%s2002 + $0xb0] sm:$0xf0]
        %v2362 = vld [vmem:[%s2002 + $0xb8] sm:$0xf]
        %v2363 = vld [vmem:[%s2002 + $0xc0] sm:$0xf0]
        %v2364 = vld [vmem:[%s2002 + $0xc8] sm:$0xf]
        %v2365 = vld [vmem:[%s2002 + $0xd0] sm:$0xf0]
        %v2366 = vld [vmem:[%s2002 + $0xd8] sm:$0xf]
        %v2367 = vld [vmem:[%s2002 + $0xe0] sm:$0xf0]
        %v2368 = vld [vmem:[%s2002 + $0xe8] sm:$0xf]
        %v2369 = vld [vmem:[%s2002 + $0xf0] sm:$0xf0]
        %v2370 = vld [vmem:[%s2002 + $0xf8] sm:$0xf]
        %v2403 = vrot.slane %v2339, 4
        %v2404 = vrot.slane %v2340, 4
        %v2405 = vsel %vm1584, %v2403, %v2404
        %v2406 = vrot.slane %v2341, 4
        %v2407 = vrot.slane %v2342, 4
        %v2408 = vsel %vm1584, %v2406, %v2407
        %v2409 = vrot.slane %v2343, 4
        %v2410 = vrot.slane %v2344, 4
        %v2411 = vsel %vm1584, %v2409, %v2410
        %v2412 = vrot.slane %v2345, 4
        %v2413 = vrot.slane %v2346, 4
        %v2414 = vsel %vm1584, %v2412, %v2413
        %v2415 = vrot.slane %v2347, 4
        %v2416 = vrot.slane %v2348, 4
        %v2417 = vsel %vm1584, %v2415, %v2416
        %v2418 = vrot.slane %v2349, 4
        %v2419 = vrot.slane %v2350, 4
        %v2420 = vsel %vm1584, %v2418, %v2419
        %v2421 = vrot.slane %v2351, 4
        %v2422 = vrot.slane %v2352, 4
        %v2423 = vsel %vm1584, %v2421, %v2422
        %v2424 = vrot.slane %v2353, 4
        %v2425 = vrot.slane %v2354, 4
        %v2426 = vsel %vm1584, %v2424, %v2425
        %v2427 = vrot.slane %v2355, 4
        %v2428 = vrot.slane %v2356, 4
        %v2429 = vsel %vm1584, %v2427, %v2428
        %v2430 = vrot.slane %v2357, 4
        %v2431 = vrot.slane %v2358, 4
        %v2432 = vsel %vm1584, %v2430, %v2431
        %v2433 = vrot.slane %v2359, 4
        %v2434 = vrot.slane %v2360, 4
        %v2435 = vsel %vm1584, %v2433, %v2434
        %v2436 = vrot.slane %v2361, 4
        %v2437 = vrot.slane %v2362, 4
        %v2438 = vsel %vm1584, %v2436, %v2437
        %v2439 = vrot.slane %v2363, 4
        %v2440 = vrot.slane %v2364, 4
        %v2441 = vsel %vm1584, %v2439, %v2440
        %v2442 = vrot.slane %v2365, 4
        %v2443 = vrot.slane %v2366, 4
        %v2444 = vsel %vm1584, %v2442, %v2443
        %v2445 = vrot.slane %v2367, 4
        %v2446 = vrot.slane %v2368, 4
        %v2447 = vsel %vm1584, %v2445, %v2446
        %v2448 = vrot.slane %v2369, 4
        %v2449 = vrot.slane %v2370, 4
        %v2450 = vsel %vm1584, %v2448, %v2449
        %2467 = vst [vmem:[#allocation3 + $0x20] sm:$0xff] %v2405
        %2468 = vst [vmem:[#allocation3 + $0x68] sm:$0xff] %v2408
        %2469 = vst [vmem:[#allocation3 + $0xb0] sm:$0xff] %v2411
        %2470 = vst [vmem:[#allocation3 + $0xf8] sm:$0xff] %v2414
        %2471 = vst [vmem:[#allocation3 + $0x140] sm:$0xff] %v2417
        %2472 = vst [vmem:[#allocation3 + $0x188] sm:$0xff] %v2420
        %2473 = vst [vmem:[#allocation3 + $0x1d0] sm:$0xff] %v2423
        %2474 = vst [vmem:[#allocation3 + $0x218] sm:$0xff] %v2426
        %2475 = vst [vmem:[#allocation3 + $0x260] sm:$0xff] %v2429
        %2476 = vst [vmem:[#allocation3 + $0x2a8] sm:$0xff] %v2432
        %2477 = vst [vmem:[#allocation3 + $0x2f0] sm:$0xff] %v2435
        %2478 = vst [vmem:[#allocation3 + $0x338] sm:$0xff] %v2438
        %2479 = vst [vmem:[#allocation3 + $0x380] sm:$0xff] %v2441
        %2480 = vst [vmem:[#allocation3 + $0x3c8] sm:$0xff] %v2444
        %2481 = vst [vmem:[#allocation3 + $0x410] sm:$0xff] %v2447
        %2482 = vst [vmem:[#allocation3 + $0x458] sm:$0xff] %v2450
        %v2483 = vld [vmem:[%s2002] sm:$0xf0]
        %v2484 = vld [vmem:[%s2002 + $0x8] sm:$0x1f]
        %v2485 = vld [vmem:[%s2002 + $0x10] sm:$0xf0]
        %v2486 = vld [vmem:[%s2002 + $0x18] sm:$0x1f]
        %v2487 = vld [vmem:[%s2002 + $0x20] sm:$0xf0]
        %v2488 = vld [vmem:[%s2002 + $0x28] sm:$0x1f]
        %v2489 = vld [vmem:[%s2002 + $0x30] sm:$0xf0]
        %v2490 = vld [vmem:[%s2002 + $0x38] sm:$0x1f]
        %v2491 = vld [vmem:[%s2002 + $0x40] sm:$0xf0]
        %v2492 = vld [vmem:[%s2002 + $0x48] sm:$0x1f]
        %v2493 = vld [vmem:[%s2002 + $0x50] sm:$0xf0]
        %v2494 = vld [vmem:[%s2002 + $0x58] sm:$0x1f]
        %v2495 = vld [vmem:[%s2002 + $0x60] sm:$0xf0]
        %v2496 = vld [vmem:[%s2002 + $0x68] sm:$0x1f]
        %v2497 = vld [vmem:[%s2002 + $0x70] sm:$0xf0]
        %v2498 = vld [vmem:[%s2002 + $0x78] sm:$0x1f]
        %v2499 = vld [vmem:[%s2002 + $0x80] sm:$0xf0]
        %v2500 = vld [vmem:[%s2002 + $0x88] sm:$0x1f]
        %v2501 = vld [vmem:[%s2002 + $0x90] sm:$0xf0]
        %v2502 = vld [vmem:[%s2002 + $0x98] sm:$0x1f]
        %v2503 = vld [vmem:[%s2002 + $0xa0] sm:$0xf0]
        %v2504 = vld [vmem:[%s2002 + $0xa8] sm:$0x1f]
        %v2505 = vld [vmem:[%s2002 + $0xb0] sm:$0xf0]
        %v2506 = vld [vmem:[%s2002 + $0xb8] sm:$0x1f]
        %v2507 = vld [vmem:[%s2002 + $0xc0] sm:$0xf0]
        %v2508 = vld [vmem:[%s2002 + $0xc8] sm:$0x1f]
        %v2509 = vld [vmem:[%s2002 + $0xd0] sm:$0xf0]
        %v2510 = vld [vmem:[%s2002 + $0xd8] sm:$0x1f]
        %v2511 = vld [vmem:[%s2002 + $0xe0] sm:$0xf0]
        %v2512 = vld [vmem:[%s2002 + $0xe8] sm:$0x1f]
        %v2513 = vld [vmem:[%s2002 + $0xf0] sm:$0xf0]
        %v2514 = vld [vmem:[%s2002 + $0xf8] sm:$0x1f]
        %v2516 = vshrl.u32 %v2483, 16
        %v2518 = vrot.slane %v2516, 4
        %v2519 = vshll.u32 %v2483, 16
        %v2521 = vrot.slane %v2519, 5
        %v2522 = vor.u32 %v2518, %v2521
        %v2524 = vshrl.u32 %v2484, 16
        %v2526 = vrot.slane %v2524, 4
        %v2527 = vshll.u32 %v2484, 16
        %v2529 = vrot.slane %v2527, 5
        %v2530 = vor.u32 %v2526, %v2529
        %v2531 = vsel %vm1697, %v2522, %v2530
        %v2533 = vshrl.u32 %v2485, 16
        %v2535 = vrot.slane %v2533, 4
        %v2536 = vshll.u32 %v2485, 16
        %v2538 = vrot.slane %v2536, 5
        %v2539 = vor.u32 %v2535, %v2538
        %v2541 = vshrl.u32 %v2486, 16
        %v2543 = vrot.slane %v2541, 4
        %v2544 = vshll.u32 %v2486, 16
        %v2546 = vrot.slane %v2544, 5
        %v2547 = vor.u32 %v2543, %v2546
        %v2548 = vsel %vm1697, %v2539, %v2547
        %v2550 = vshrl.u32 %v2487, 16
        %v2552 = vrot.slane %v2550, 4
        %v2553 = vshll.u32 %v2487, 16
        %v2555 = vrot.slane %v2553, 5
        %v2556 = vor.u32 %v2552, %v2555
        %v2558 = vshrl.u32 %v2488, 16
        %v2560 = vrot.slane %v2558, 4
        %v2561 = vshll.u32 %v2488, 16
        %v2563 = vrot.slane %v2561, 5
        %v2564 = vor.u32 %v2560, %v2563
        %v2565 = vsel %vm1697, %v2556, %v2564
        %v2567 = vshrl.u32 %v2489, 16
        %v2569 = vrot.slane %v2567, 4
        %v2570 = vshll.u32 %v2489, 16
        %v2572 = vrot.slane %v2570, 5
        %v2573 = vor.u32 %v2569, %v2572
        %v2575 = vshrl.u32 %v2490, 16
        %v2577 = vrot.slane %v2575, 4
        %v2578 = vshll.u32 %v2490, 16
        %v2580 = vrot.slane %v2578, 5
        %v2581 = vor.u32 %v2577, %v2580
        %v2582 = vsel %vm1697, %v2573, %v2581
        %v2584 = vshrl.u32 %v2491, 16
        %v2586 = vrot.slane %v2584, 4
        %v2587 = vshll.u32 %v2491, 16
        %v2589 = vrot.slane %v2587, 5
        %v2590 = vor.u32 %v2586, %v2589
        %v2592 = vshrl.u32 %v2492, 16
        %v2594 = vrot.slane %v2592, 4
        %v2595 = vshll.u32 %v2492, 16
        %v2597 = vrot.slane %v2595, 5
        %v2598 = vor.u32 %v2594, %v2597
        %v2599 = vsel %vm1697, %v2590, %v2598
        %v2601 = vshrl.u32 %v2493, 16
        %v2603 = vrot.slane %v2601, 4
        %v2604 = vshll.u32 %v2493, 16
        %v2606 = vrot.slane %v2604, 5
        %v2607 = vor.u32 %v2603, %v2606
        %v2609 = vshrl.u32 %v2494, 16
        %v2611 = vrot.slane %v2609, 4
        %v2612 = vshll.u32 %v2494, 16
        %v2614 = vrot.slane %v2612, 5
        %v2615 = vor.u32 %v2611, %v2614
        %v2616 = vsel %vm1697, %v2607, %v2615
        %v2618 = vshrl.u32 %v2495, 16
        %v2620 = vrot.slane %v2618, 4
        %v2621 = vshll.u32 %v2495, 16
        %v2623 = vrot.slane %v2621, 5
        %v2624 = vor.u32 %v2620, %v2623
        %v2626 = vshrl.u32 %v2496, 16
        %v2628 = vrot.slane %v2626, 4
        %v2629 = vshll.u32 %v2496, 16
        %v2631 = vrot.slane %v2629, 5
        %v2632 = vor.u32 %v2628, %v2631
        %v2633 = vsel %vm1697, %v2624, %v2632
        %v2635 = vshrl.u32 %v2497, 16
        %v2637 = vrot.slane %v2635, 4
        %v2638 = vshll.u32 %v2497, 16
        %v2640 = vrot.slane %v2638, 5
        %v2641 = vor.u32 %v2637, %v2640
        %v2643 = vshrl.u32 %v2498, 16
        %v2645 = vrot.slane %v2643, 4
        %v2646 = vshll.u32 %v2498, 16
        %v2648 = vrot.slane %v2646, 5
        %v2649 = vor.u32 %v2645, %v2648
        %v2650 = vsel %vm1697, %v2641, %v2649
        %v2652 = vshrl.u32 %v2499, 16
        %v2654 = vrot.slane %v2652, 4
        %v2655 = vshll.u32 %v2499, 16
        %v2657 = vrot.slane %v2655, 5
        %v2658 = vor.u32 %v2654, %v2657
        %v2660 = vshrl.u32 %v2500, 16
        %v2662 = vrot.slane %v2660, 4
        %v2663 = vshll.u32 %v2500, 16
        %v2665 = vrot.slane %v2663, 5
        %v2666 = vor.u32 %v2662, %v2665
        %v2667 = vsel %vm1697, %v2658, %v2666
        %v2669 = vshrl.u32 %v2501, 16
        %v2671 = vrot.slane %v2669, 4
        %v2672 = vshll.u32 %v2501, 16
        %v2674 = vrot.slane %v2672, 5
        %v2675 = vor.u32 %v2671, %v2674
        %v2677 = vshrl.u32 %v2502, 16
        %v2679 = vrot.slane %v2677, 4
        %v2680 = vshll.u32 %v2502, 16
        %v2682 = vrot.slane %v2680, 5
        %v2683 = vor.u32 %v2679, %v2682
        %v2684 = vsel %vm1697, %v2675, %v2683
        %v2686 = vshrl.u32 %v2503, 16
        %v2688 = vrot.slane %v2686, 4
        %v2689 = vshll.u32 %v2503, 16
        %v2691 = vrot.slane %v2689, 5
        %v2692 = vor.u32 %v2688, %v2691
        %v2694 = vshrl.u32 %v2504, 16
        %v2696 = vrot.slane %v2694, 4
        %v2697 = vshll.u32 %v2504, 16
        %v2699 = vrot.slane %v2697, 5
        %v2700 = vor.u32 %v2696, %v2699
        %v2701 = vsel %vm1697, %v2692, %v2700
        %v2703 = vshrl.u32 %v2505, 16
        %v2705 = vrot.slane %v2703, 4
        %v2706 = vshll.u32 %v2505, 16
        %v2708 = vrot.slane %v2706, 5
        %v2709 = vor.u32 %v2705, %v2708
        %v2711 = vshrl.u32 %v2506, 16
        %v2713 = vrot.slane %v2711, 4
        %v2714 = vshll.u32 %v2506, 16
        %v2716 = vrot.slane %v2714, 5
        %v2717 = vor.u32 %v2713, %v2716
        %v2718 = vsel %vm1697, %v2709, %v2717
        %v2720 = vshrl.u32 %v2507, 16
        %v2722 = vrot.slane %v2720, 4
        %v2723 = vshll.u32 %v2507, 16
        %v2725 = vrot.slane %v2723, 5
        %v2726 = vor.u32 %v2722, %v2725
        %v2728 = vshrl.u32 %v2508, 16
        %v2730 = vrot.slane %v2728, 4
        %v2731 = vshll.u32 %v2508, 16
        %v2733 = vrot.slane %v2731, 5
        %v2734 = vor.u32 %v2730, %v2733
        %v2735 = vsel %vm1697, %v2726, %v2734
        %v2737 = vshrl.u32 %v2509, 16
        %v2739 = vrot.slane %v2737, 4
        %v2740 = vshll.u32 %v2509, 16
        %v2742 = vrot.slane %v2740, 5
        %v2743 = vor.u32 %v2739, %v2742
        %v2745 = vshrl.u32 %v2510, 16
        %v2747 = vrot.slane %v2745, 4
        %v2748 = vshll.u32 %v2510, 16
        %v2750 = vrot.slane %v2748, 5
        %v2751 = vor.u32 %v2747, %v2750
        %v2752 = vsel %vm1697, %v2743, %v2751
        %v2754 = vshrl.u32 %v2511, 16
        %v2756 = vrot.slane %v2754, 4
        %v2757 = vshll.u32 %v2511, 16
        %v2759 = vrot.slane %v2757, 5
        %v2760 = vor.u32 %v2756, %v2759
        %v2762 = vshrl.u32 %v2512, 16
        %v2764 = vrot.slane %v2762, 4
        %v2765 = vshll.u32 %v2512, 16
        %v2767 = vrot.slane %v2765, 5
        %v2768 = vor.u32 %v2764, %v2767
        %v2769 = vsel %vm1697, %v2760, %v2768
        %v2771 = vshrl.u32 %v2513, 16
        %v2773 = vrot.slane %v2771, 4
        %v2774 = vshll.u32 %v2513, 16
        %v2776 = vrot.slane %v2774, 5
        %v2777 = vor.u32 %v2773, %v2776
        %v2779 = vshrl.u32 %v2514, 16
        %v2781 = vrot.slane %v2779, 4
        %v2782 = vshll.u32 %v2514, 16
        %v2784 = vrot.slane %v2782, 5
        %v2785 = vor.u32 %v2781, %v2784
        %v2786 = vsel %vm1697, %v2777, %v2785
        %2803 = vst [vmem:[#allocation3 + $0x28] sm:$0xff] %v2531
        %2804 = vst [vmem:[#allocation3 + $0x70] sm:$0xff] %v2548
        %2805 = vst [vmem:[#allocation3 + $0xb8] sm:$0xff] %v2565
        %2806 = vst [vmem:[#allocation3 + $0x100] sm:$0xff] %v2582
        %2807 = vst [vmem:[#allocation3 + $0x148] sm:$0xff] %v2599
        %2808 = vst [vmem:[#allocation3 + $0x190] sm:$0xff] %v2616
        %2809 = vst [vmem:[#allocation3 + $0x1d8] sm:$0xff] %v2633
        %2810 = vst [vmem:[#allocation3 + $0x220] sm:$0xff] %v2650
        %2811 = vst [vmem:[#allocation3 + $0x268] sm:$0xff] %v2667
        %2812 = vst [vmem:[#allocation3 + $0x2b0] sm:$0xff] %v2684
        %2813 = vst [vmem:[#allocation3 + $0x2f8] sm:$0xff] %v2701
        %2814 = vst [vmem:[#allocation3 + $0x340] sm:$0xff] %v2718
        %2815 = vst [vmem:[#allocation3 + $0x388] sm:$0xff] %v2735
        %2816 = vst [vmem:[#allocation3 + $0x3d0] sm:$0xff] %v2752
        %2817 = vst [vmem:[#allocation3 + $0x418] sm:$0xff] %v2769
        %2818 = vst [vmem:[#allocation3 + $0x460] sm:$0xff] %v2786
        %s2819 = scalar_lea.vmem [#allocation2], 32
        %v2820 = vld [vmem:[%s2819] sm:$0xf8]
        %v2821 = vld [vmem:[%s2819 + $0x8] sm:$0xf]
        %v2822 = vld [vmem:[%s2819 + $0x10] sm:$0xf8]
        %v2823 = vld [vmem:[%s2819 + $0x18] sm:$0xf]
        %v2824 = vld [vmem:[%s2819 + $0x20] sm:$0xf8]
        %v2825 = vld [vmem:[%s2819 + $0x28] sm:$0xf]
        %v2826 = vld [vmem:[%s2819 + $0x30] sm:$0xf8]
        %v2827 = vld [vmem:[%s2819 + $0x38] sm:$0xf]
        %v2828 = vld [vmem:[%s2819 + $0x40] sm:$0xf8]
        %v2829 = vld [vmem:[%s2819 + $0x48] sm:$0xf]
        %v2830 = vld [vmem:[%s2819 + $0x50] sm:$0xf8]
        %v2831 = vld [vmem:[%s2819 + $0x58] sm:$0xf]
        %v2832 = vld [vmem:[%s2819 + $0x60] sm:$0xf8]
        %v2833 = vld [vmem:[%s2819 + $0x68] sm:$0xf]
        %v2834 = vld [vmem:[%s2819 + $0x70] sm:$0xf8]
        %v2835 = vld [vmem:[%s2819 + $0x78] sm:$0xf]
        %v2836 = vld [vmem:[%s2819 + $0x80] sm:$0xf8]
        %v2837 = vld [vmem:[%s2819 + $0x88] sm:$0xf]
        %v2838 = vld [vmem:[%s2819 + $0x90] sm:$0xf8]
        %v2839 = vld [vmem:[%s2819 + $0x98] sm:$0xf]
        %v2840 = vld [vmem:[%s2819 + $0xa0] sm:$0xf8]
        %v2841 = vld [vmem:[%s2819 + $0xa8] sm:$0xf]
        %v2842 = vld [vmem:[%s2819 + $0xb0] sm:$0xf8]
        %v2843 = vld [vmem:[%s2819 + $0xb8] sm:$0xf]
        %v2844 = vld [vmem:[%s2819 + $0xc0] sm:$0xf8]
        %v2845 = vld [vmem:[%s2819 + $0xc8] sm:$0xf]
        %v2846 = vld [vmem:[%s2819 + $0xd0] sm:$0xf8]
        %v2847 = vld [vmem:[%s2819 + $0xd8] sm:$0xf]
        %v2848 = vld [vmem:[%s2819 + $0xe0] sm:$0xf8]
        %v2849 = vld [vmem:[%s2819 + $0xe8] sm:$0xf]
        %v2850 = vld [vmem:[%s2819 + $0xf0] sm:$0xf8]
        %v2851 = vld [vmem:[%s2819 + $0xf8] sm:$0xf]
        %v2853 = vshrl.u32 %v2820, 16
        %v2855 = vrot.slane %v2853, 3
        %v2856 = vshll.u32 %v2820, 16
        %v2858 = vrot.slane %v2856, 4
        %v2859 = vor.u32 %v2855, %v2858
        %v2861 = vshrl.u32 %v2821, 16
        %v2863 = vrot.slane %v2861, 3
        %v2864 = vshll.u32 %v2821, 16
        %v2866 = vrot.slane %v2864, 4
        %v2867 = vor.u32 %v2863, %v2866
        %v2868 = vsel %vm1215, %v2859, %v2867
        %v2870 = vshrl.u32 %v2822, 16
        %v2872 = vrot.slane %v2870, 3
        %v2873 = vshll.u32 %v2822, 16
        %v2875 = vrot.slane %v2873, 4
        %v2876 = vor.u32 %v2872, %v2875
        %v2878 = vshrl.u32 %v2823, 16
        %v2880 = vrot.slane %v2878, 3
        %v2881 = vshll.u32 %v2823, 16
        %v2883 = vrot.slane %v2881, 4
        %v2884 = vor.u32 %v2880, %v2883
        %v2885 = vsel %vm1215, %v2876, %v2884
        %v2887 = vshrl.u32 %v2824, 16
        %v2889 = vrot.slane %v2887, 3
        %v2890 = vshll.u32 %v2824, 16
        %v2892 = vrot.slane %v2890, 4
        %v2893 = vor.u32 %v2889, %v2892
        %v2895 = vshrl.u32 %v2825, 16
        %v2897 = vrot.slane %v2895, 3
        %v2898 = vshll.u32 %v2825, 16
        %v2900 = vrot.slane %v2898, 4
        %v2901 = vor.u32 %v2897, %v2900
        %v2902 = vsel %vm1215, %v2893, %v2901
        %v2904 = vshrl.u32 %v2826, 16
        %v2906 = vrot.slane %v2904, 3
        %v2907 = vshll.u32 %v2826, 16
        %v2909 = vrot.slane %v2907, 4
        %v2910 = vor.u32 %v2906, %v2909
        %v2912 = vshrl.u32 %v2827, 16
        %v2914 = vrot.slane %v2912, 3
        %v2915 = vshll.u32 %v2827, 16
        %v2917 = vrot.slane %v2915, 4
        %v2918 = vor.u32 %v2914, %v2917
        %v2919 = vsel %vm1215, %v2910, %v2918
        %v2921 = vshrl.u32 %v2828, 16
        %v2923 = vrot.slane %v2921, 3
        %v2924 = vshll.u32 %v2828, 16
        %v2926 = vrot.slane %v2924, 4
        %v2927 = vor.u32 %v2923, %v2926
        %v2929 = vshrl.u32 %v2829, 16
        %v2931 = vrot.slane %v2929, 3
        %v2932 = vshll.u32 %v2829, 16
        %v2934 = vrot.slane %v2932, 4
        %v2935 = vor.u32 %v2931, %v2934
        %v2936 = vsel %vm1215, %v2927, %v2935
        %v2938 = vshrl.u32 %v2830, 16
        %v2940 = vrot.slane %v2938, 3
        %v2941 = vshll.u32 %v2830, 16
        %v2943 = vrot.slane %v2941, 4
        %v2944 = vor.u32 %v2940, %v2943
        %v2946 = vshrl.u32 %v2831, 16
        %v2948 = vrot.slane %v2946, 3
        %v2949 = vshll.u32 %v2831, 16
        %v2951 = vrot.slane %v2949, 4
        %v2952 = vor.u32 %v2948, %v2951
        %v2953 = vsel %vm1215, %v2944, %v2952
        %v2955 = vshrl.u32 %v2832, 16
        %v2957 = vrot.slane %v2955, 3
        %v2958 = vshll.u32 %v2832, 16
        %v2960 = vrot.slane %v2958, 4
        %v2961 = vor.u32 %v2957, %v2960
        %v2963 = vshrl.u32 %v2833, 16
        %v2965 = vrot.slane %v2963, 3
        %v2966 = vshll.u32 %v2833, 16
        %v2968 = vrot.slane %v2966, 4
        %v2969 = vor.u32 %v2965, %v2968
        %v2970 = vsel %vm1215, %v2961, %v2969
        %v2972 = vshrl.u32 %v2834, 16
        %v2974 = vrot.slane %v2972, 3
        %v2975 = vshll.u32 %v2834, 16
        %v2977 = vrot.slane %v2975, 4
        %v2978 = vor.u32 %v2974, %v2977
        %v2980 = vshrl.u32 %v2835, 16
        %v2982 = vrot.slane %v2980, 3
        %v2983 = vshll.u32 %v2835, 16
        %v2985 = vrot.slane %v2983, 4
        %v2986 = vor.u32 %v2982, %v2985
        %v2987 = vsel %vm1215, %v2978, %v2986
        %v2989 = vshrl.u32 %v2836, 16
        %v2991 = vrot.slane %v2989, 3
        %v2992 = vshll.u32 %v2836, 16
        %v2994 = vrot.slane %v2992, 4
        %v2995 = vor.u32 %v2991, %v2994
        %v2997 = vshrl.u32 %v2837, 16
        %v2999 = vrot.slane %v2997, 3
        %v3000 = vshll.u32 %v2837, 16
        %v3002 = vrot.slane %v3000, 4
        %v3003 = vor.u32 %v2999, %v3002
        %v3004 = vsel %vm1215, %v2995, %v3003
        %v3006 = vshrl.u32 %v2838, 16
        %v3008 = vrot.slane %v3006, 3
        %v3009 = vshll.u32 %v2838, 16
        %v3011 = vrot.slane %v3009, 4
        %v3012 = vor.u32 %v3008, %v3011
        %v3014 = vshrl.u32 %v2839, 16
        %v3016 = vrot.slane %v3014, 3
        %v3017 = vshll.u32 %v2839, 16
        %v3019 = vrot.slane %v3017, 4
        %v3020 = vor.u32 %v3016, %v3019
        %v3021 = vsel %vm1215, %v3012, %v3020
        %v3023 = vshrl.u32 %v2840, 16
        %v3025 = vrot.slane %v3023, 3
        %v3026 = vshll.u32 %v2840, 16
        %v3028 = vrot.slane %v3026, 4
        %v3029 = vor.u32 %v3025, %v3028
        %v3031 = vshrl.u32 %v2841, 16
        %v3033 = vrot.slane %v3031, 3
        %v3034 = vshll.u32 %v2841, 16
        %v3036 = vrot.slane %v3034, 4
        %v3037 = vor.u32 %v3033, %v3036
        %v3038 = vsel %vm1215, %v3029, %v3037
        %v3040 = vshrl.u32 %v2842, 16
        %v3042 = vrot.slane %v3040, 3
        %v3043 = vshll.u32 %v2842, 16
        %v3045 = vrot.slane %v3043, 4
        %v3046 = vor.u32 %v3042, %v3045
        %v3048 = vshrl.u32 %v2843, 16
        %v3050 = vrot.slane %v3048, 3
        %v3051 = vshll.u32 %v2843, 16
        %v3053 = vrot.slane %v3051, 4
        %v3054 = vor.u32 %v3050, %v3053
        %v3055 = vsel %vm1215, %v3046, %v3054
        %v3057 = vshrl.u32 %v2844, 16
        %v3059 = vrot.slane %v3057, 3
        %v3060 = vshll.u32 %v2844, 16
        %v3062 = vrot.slane %v3060, 4
        %v3063 = vor.u32 %v3059, %v3062
        %v3065 = vshrl.u32 %v2845, 16
        %v3067 = vrot.slane %v3065, 3
        %v3068 = vshll.u32 %v2845, 16
        %v3070 = vrot.slane %v3068, 4
        %v3071 = vor.u32 %v3067, %v3070
        %v3072 = vsel %vm1215, %v3063, %v3071
        %v3074 = vshrl.u32 %v2846, 16
        %v3076 = vrot.slane %v3074, 3
        %v3077 = vshll.u32 %v2846, 16
        %v3079 = vrot.slane %v3077, 4
        %v3080 = vor.u32 %v3076, %v3079
        %v3082 = vshrl.u32 %v2847, 16
        %v3084 = vrot.slane %v3082, 3
        %v3085 = vshll.u32 %v2847, 16
        %v3087 = vrot.slane %v3085, 4
        %v3088 = vor.u32 %v3084, %v3087
        %v3089 = vsel %vm1215, %v3080, %v3088
        %v3091 = vshrl.u32 %v2848, 16
        %v3093 = vrot.slane %v3091, 3
        %v3094 = vshll.u32 %v2848, 16
        %v3096 = vrot.slane %v3094, 4
        %v3097 = vor.u32 %v3093, %v3096
        %v3099 = vshrl.u32 %v2849, 16
        %v3101 = vrot.slane %v3099, 3
        %v3102 = vshll.u32 %v2849, 16
        %v3104 = vrot.slane %v3102, 4
        %v3105 = vor.u32 %v3101, %v3104
        %v3106 = vsel %vm1215, %v3097, %v3105
        %v3108 = vshrl.u32 %v2850, 16
        %v3110 = vrot.slane %v3108, 3
        %v3111 = vshll.u32 %v2850, 16
        %v3113 = vrot.slane %v3111, 4
        %v3114 = vor.u32 %v3110, %v3113
        %v3116 = vshrl.u32 %v2851, 16
        %v3118 = vrot.slane %v3116, 3
        %v3119 = vshll.u32 %v2851, 16
        %v3121 = vrot.slane %v3119, 4
        %v3122 = vor.u32 %v3118, %v3121
        %v3123 = vsel %vm1215, %v3114, %v3122
        %3140 = vst [vmem:[#allocation3 + $0x30] sm:$0xff] %v2868
        %3141 = vst [vmem:[#allocation3 + $0x78] sm:$0xff] %v2885
        %3142 = vst [vmem:[#allocation3 + $0xc0] sm:$0xff] %v2902
        %3143 = vst [vmem:[#allocation3 + $0x108] sm:$0xff] %v2919
        %3144 = vst [vmem:[#allocation3 + $0x150] sm:$0xff] %v2936
        %3145 = vst [vmem:[#allocation3 + $0x198] sm:$0xff] %v2953
        %3146 = vst [vmem:[#allocation3 + $0x1e0] sm:$0xff] %v2970
        %3147 = vst [vmem:[#allocation3 + $0x228] sm:$0xff] %v2987
        %3148 = vst [vmem:[#allocation3 + $0x270] sm:$0xff] %v3004
        %3149 = vst [vmem:[#allocation3 + $0x2b8] sm:$0xff] %v3021
        %3150 = vst [vmem:[#allocation3 + $0x300] sm:$0xff] %v3038
        %3151 = vst [vmem:[#allocation3 + $0x348] sm:$0xff] %v3055
        %3152 = vst [vmem:[#allocation3 + $0x390] sm:$0xff] %v3072
        %3153 = vst [vmem:[#allocation3 + $0x3d8] sm:$0xff] %v3089
        %3154 = vst [vmem:[#allocation3 + $0x420] sm:$0xff] %v3106
        %3155 = vst [vmem:[#allocation3 + $0x468] sm:$0xff] %v3123
        %v3156 = vld [vmem:[%s2819] sm:$0xf0]
        %v3157 = vld [vmem:[%s2819 + $0x8] sm:$0xf]
        %v3158 = vld [vmem:[%s2819 + $0x10] sm:$0xf0]
        %v3159 = vld [vmem:[%s2819 + $0x18] sm:$0xf]
        %v3160 = vld [vmem:[%s2819 + $0x20] sm:$0xf0]
        %v3161 = vld [vmem:[%s2819 + $0x28] sm:$0xf]
        %v3162 = vld [vmem:[%s2819 + $0x30] sm:$0xf0]
        %v3163 = vld [vmem:[%s2819 + $0x38] sm:$0xf]
        %v3164 = vld [vmem:[%s2819 + $0x40] sm:$0xf0]
        %v3165 = vld [vmem:[%s2819 + $0x48] sm:$0xf]
        %v3166 = vld [vmem:[%s2819 + $0x50] sm:$0xf0]
        %v3167 = vld [vmem:[%s2819 + $0x58] sm:$0xf]
        %v3168 = vld [vmem:[%s2819 + $0x60] sm:$0xf0]
        %v3169 = vld [vmem:[%s2819 + $0x68] sm:$0xf]
        %v3170 = vld [vmem:[%s2819 + $0x70] sm:$0xf0]
        %v3171 = vld [vmem:[%s2819 + $0x78] sm:$0xf]
        %v3172 = vld [vmem:[%s2819 + $0x80] sm:$0xf0]
        %v3173 = vld [vmem:[%s2819 + $0x88] sm:$0xf]
        %v3174 = vld [vmem:[%s2819 + $0x90] sm:$0xf0]
        %v3175 = vld [vmem:[%s2819 + $0x98] sm:$0xf]
        %v3176 = vld [vmem:[%s2819 + $0xa0] sm:$0xf0]
        %v3177 = vld [vmem:[%s2819 + $0xa8] sm:$0xf]
        %v3178 = vld [vmem:[%s2819 + $0xb0] sm:$0xf0]
        %v3179 = vld [vmem:[%s2819 + $0xb8] sm:$0xf]
        %v3180 = vld [vmem:[%s2819 + $0xc0] sm:$0xf0]
        %v3181 = vld [vmem:[%s2819 + $0xc8] sm:$0xf]
        %v3182 = vld [vmem:[%s2819 + $0xd0] sm:$0xf0]
        %v3183 = vld [vmem:[%s2819 + $0xd8] sm:$0xf]
        %v3184 = vld [vmem:[%s2819 + $0xe0] sm:$0xf0]
        %v3185 = vld [vmem:[%s2819 + $0xe8] sm:$0xf]
        %v3186 = vld [vmem:[%s2819 + $0xf0] sm:$0xf0]
        %v3187 = vld [vmem:[%s2819 + $0xf8] sm:$0xf]
        %v3220 = vrot.slane %v3156, 4
        %v3221 = vrot.slane %v3157, 4
        %v3222 = vsel %vm1584, %v3220, %v3221
        %v3223 = vrot.slane %v3158, 4
        %v3224 = vrot.slane %v3159, 4
        %v3225 = vsel %vm1584, %v3223, %v3224
        %v3226 = vrot.slane %v3160, 4
        %v3227 = vrot.slane %v3161, 4
        %v3228 = vsel %vm1584, %v3226, %v3227
        %v3229 = vrot.slane %v3162, 4
        %v3230 = vrot.slane %v3163, 4
        %v3231 = vsel %vm1584, %v3229, %v3230
        %v3232 = vrot.slane %v3164, 4
        %v3233 = vrot.slane %v3165, 4
        %v3234 = vsel %vm1584, %v3232, %v3233
        %v3235 = vrot.slane %v3166, 4
        %v3236 = vrot.slane %v3167, 4
        %v3237 = vsel %vm1584, %v3235, %v3236
        %v3238 = vrot.slane %v3168, 4
        %v3239 = vrot.slane %v3169, 4
        %v3240 = vsel %vm1584, %v3238, %v3239
        %v3241 = vrot.slane %v3170, 4
        %v3242 = vrot.slane %v3171, 4
        %v3243 = vsel %vm1584, %v3241, %v3242
        %v3244 = vrot.slane %v3172, 4
        %v3245 = vrot.slane %v3173, 4
        %v3246 = vsel %vm1584, %v3244, %v3245
        %v3247 = vrot.slane %v3174, 4
        %v3248 = vrot.slane %v3175, 4
        %v3249 = vsel %vm1584, %v3247, %v3248
        %v3250 = vrot.slane %v3176, 4
        %v3251 = vrot.slane %v3177, 4
        %v3252 = vsel %vm1584, %v3250, %v3251
        %v3253 = vrot.slane %v3178, 4
        %v3254 = vrot.slane %v3179, 4
        %v3255 = vsel %vm1584, %v3253, %v3254
        %v3256 = vrot.slane %v3180, 4
        %v3257 = vrot.slane %v3181, 4
        %v3258 = vsel %vm1584, %v3256, %v3257
        %v3259 = vrot.slane %v3182, 4
        %v3260 = vrot.slane %v3183, 4
        %v3261 = vsel %vm1584, %v3259, %v3260
        %v3262 = vrot.slane %v3184, 4
        %v3263 = vrot.slane %v3185, 4
        %v3264 = vsel %vm1584, %v3262, %v3263
        %v3265 = vrot.slane %v3186, 4
        %v3266 = vrot.slane %v3187, 4
        %v3267 = vsel %vm1584, %v3265, %v3266
        %3284 = vst [vmem:[#allocation3 + $0x38] sm:$0xff] %v3222
        %3285 = vst [vmem:[#allocation3 + $0x80] sm:$0xff] %v3225
        %3286 = vst [vmem:[#allocation3 + $0xc8] sm:$0xff] %v3228
        %3287 = vst [vmem:[#allocation3 + $0x110] sm:$0xff] %v3231
        %3288 = vst [vmem:[#allocation3 + $0x158] sm:$0xff] %v3234
        %3289 = vst [vmem:[#allocation3 + $0x1a0] sm:$0xff] %v3237
        %3290 = vst [vmem:[#allocation3 + $0x1e8] sm:$0xff] %v3240
        %3291 = vst [vmem:[#allocation3 + $0x230] sm:$0xff] %v3243
        %3292 = vst [vmem:[#allocation3 + $0x278] sm:$0xff] %v3246
        %3293 = vst [vmem:[#allocation3 + $0x2c0] sm:$0xff] %v3249
        %3294 = vst [vmem:[#allocation3 + $0x308] sm:$0xff] %v3252
        %3295 = vst [vmem:[#allocation3 + $0x350] sm:$0xff] %v3255
        %3296 = vst [vmem:[#allocation3 + $0x398] sm:$0xff] %v3258
        %3297 = vst [vmem:[#allocation3 + $0x3e0] sm:$0xff] %v3261
        %3298 = vst [vmem:[#allocation3 + $0x428] sm:$0xff] %v3264
        %3299 = vst [vmem:[#allocation3 + $0x470] sm:$0xff] %v3267
        %v3300 = vld [vmem:[%s2819] sm:$0xf0]
        %v3301 = vld [vmem:[%s2819 + $0x8] sm:$0x1f]
        %v3302 = vld [vmem:[%s2819 + $0x10] sm:$0xf0]
        %v3303 = vld [vmem:[%s2819 + $0x18] sm:$0x1f]
        %v3304 = vld [vmem:[%s2819 + $0x20] sm:$0xf0]
        %v3305 = vld [vmem:[%s2819 + $0x28] sm:$0x1f]
        %v3306 = vld [vmem:[%s2819 + $0x30] sm:$0xf0]
        %v3307 = vld [vmem:[%s2819 + $0x38] sm:$0x1f]
        %v3308 = vld [vmem:[%s2819 + $0x40] sm:$0xf0]
        %v3309 = vld [vmem:[%s2819 + $0x48] sm:$0x1f]
        %v3310 = vld [vmem:[%s2819 + $0x50] sm:$0xf0]
        %v3311 = vld [vmem:[%s2819 + $0x58] sm:$0x1f]
        %v3312 = vld [vmem:[%s2819 + $0x60] sm:$0xf0]
        %v3313 = vld [vmem:[%s2819 + $0x68] sm:$0x1f]
        %v3314 = vld [vmem:[%s2819 + $0x70] sm:$0xf0]
        %v3315 = vld [vmem:[%s2819 + $0x78] sm:$0x1f]
        %v3316 = vld [vmem:[%s2819 + $0x80] sm:$0xf0]
        %v3317 = vld [vmem:[%s2819 + $0x88] sm:$0x1f]
        %v3318 = vld [vmem:[%s2819 + $0x90] sm:$0xf0]
        %v3319 = vld [vmem:[%s2819 + $0x98] sm:$0x1f]
        %v3320 = vld [vmem:[%s2819 + $0xa0] sm:$0xf0]
        %v3321 = vld [vmem:[%s2819 + $0xa8] sm:$0x1f]
        %v3322 = vld [vmem:[%s2819 + $0xb0] sm:$0xf0]
        %v3323 = vld [vmem:[%s2819 + $0xb8] sm:$0x1f]
        %v3324 = vld [vmem:[%s2819 + $0xc0] sm:$0xf0]
        %v3325 = vld [vmem:[%s2819 + $0xc8] sm:$0x1f]
        %v3326 = vld [vmem:[%s2819 + $0xd0] sm:$0xf0]
        %v3327 = vld [vmem:[%s2819 + $0xd8] sm:$0x1f]
        %v3328 = vld [vmem:[%s2819 + $0xe0] sm:$0xf0]
        %v3329 = vld [vmem:[%s2819 + $0xe8] sm:$0x1f]
        %v3330 = vld [vmem:[%s2819 + $0xf0] sm:$0xf0]
        %v3331 = vld [vmem:[%s2819 + $0xf8] sm:$0x1f]
        %v3333 = vshrl.u32 %v3300, 16
        %v3335 = vrot.slane %v3333, 4
        %v3336 = vshll.u32 %v3300, 16
        %v3338 = vrot.slane %v3336, 5
        %v3339 = vor.u32 %v3335, %v3338
        %v3341 = vshrl.u32 %v3301, 16
        %v3343 = vrot.slane %v3341, 4
        %v3344 = vshll.u32 %v3301, 16
        %v3346 = vrot.slane %v3344, 5
        %v3347 = vor.u32 %v3343, %v3346
        %v3348 = vsel %vm1697, %v3339, %v3347
        %v3350 = vshrl.u32 %v3302, 16
        %v3352 = vrot.slane %v3350, 4
        %v3353 = vshll.u32 %v3302, 16
        %v3355 = vrot.slane %v3353, 5
        %v3356 = vor.u32 %v3352, %v3355
        %v3358 = vshrl.u32 %v3303, 16
        %v3360 = vrot.slane %v3358, 4
        %v3361 = vshll.u32 %v3303, 16
        %v3363 = vrot.slane %v3361, 5
        %v3364 = vor.u32 %v3360, %v3363
        %v3365 = vsel %vm1697, %v3356, %v3364
        %v3367 = vshrl.u32 %v3304, 16
        %v3369 = vrot.slane %v3367, 4
        %v3370 = vshll.u32 %v3304, 16
        %v3372 = vrot.slane %v3370, 5
        %v3373 = vor.u32 %v3369, %v3372
        %v3375 = vshrl.u32 %v3305, 16
        %v3377 = vrot.slane %v3375, 4
        %v3378 = vshll.u32 %v3305, 16
        %v3380 = vrot.slane %v3378, 5
        %v3381 = vor.u32 %v3377, %v3380
        %v3382 = vsel %vm1697, %v3373, %v3381
        %v3384 = vshrl.u32 %v3306, 16
        %v3386 = vrot.slane %v3384, 4
        %v3387 = vshll.u32 %v3306, 16
        %v3389 = vrot.slane %v3387, 5
        %v3390 = vor.u32 %v3386, %v3389
        %v3392 = vshrl.u32 %v3307, 16
        %v3394 = vrot.slane %v3392, 4
        %v3395 = vshll.u32 %v3307, 16
        %v3397 = vrot.slane %v3395, 5
        %v3398 = vor.u32 %v3394, %v3397
        %v3399 = vsel %vm1697, %v3390, %v3398
        %v3401 = vshrl.u32 %v3308, 16
        %v3403 = vrot.slane %v3401, 4
        %v3404 = vshll.u32 %v3308, 16
        %v3406 = vrot.slane %v3404, 5
        %v3407 = vor.u32 %v3403, %v3406
        %v3409 = vshrl.u32 %v3309, 16
        %v3411 = vrot.slane %v3409, 4
        %v3412 = vshll.u32 %v3309, 16
        %v3414 = vrot.slane %v3412, 5
        %v3415 = vor.u32 %v3411, %v3414
        %v3416 = vsel %vm1697, %v3407, %v3415
        %v3418 = vshrl.u32 %v3310, 16
        %v3420 = vrot.slane %v3418, 4
        %v3421 = vshll.u32 %v3310, 16
        %v3423 = vrot.slane %v3421, 5
        %v3424 = vor.u32 %v3420, %v3423
        %v3426 = vshrl.u32 %v3311, 16
        %v3428 = vrot.slane %v3426, 4
        %v3429 = vshll.u32 %v3311, 16
        %v3431 = vrot.slane %v3429, 5
        %v3432 = vor.u32 %v3428, %v3431
        %v3433 = vsel %vm1697, %v3424, %v3432
        %v3435 = vshrl.u32 %v3312, 16
        %v3437 = vrot.slane %v3435, 4
        %v3438 = vshll.u32 %v3312, 16
        %v3440 = vrot.slane %v3438, 5
        %v3441 = vor.u32 %v3437, %v3440
        %v3443 = vshrl.u32 %v3313, 16
        %v3445 = vrot.slane %v3443, 4
        %v3446 = vshll.u32 %v3313, 16
        %v3448 = vrot.slane %v3446, 5
        %v3449 = vor.u32 %v3445, %v3448
        %v3450 = vsel %vm1697, %v3441, %v3449
        %v3452 = vshrl.u32 %v3314, 16
        %v3454 = vrot.slane %v3452, 4
        %v3455 = vshll.u32 %v3314, 16
        %v3457 = vrot.slane %v3455, 5
        %v3458 = vor.u32 %v3454, %v3457
        %v3460 = vshrl.u32 %v3315, 16
        %v3462 = vrot.slane %v3460, 4
        %v3463 = vshll.u32 %v3315, 16
        %v3465 = vrot.slane %v3463, 5
        %v3466 = vor.u32 %v3462, %v3465
        %v3467 = vsel %vm1697, %v3458, %v3466
        %v3469 = vshrl.u32 %v3316, 16
        %v3471 = vrot.slane %v3469, 4
        %v3472 = vshll.u32 %v3316, 16
        %v3474 = vrot.slane %v3472, 5
        %v3475 = vor.u32 %v3471, %v3474
        %v3477 = vshrl.u32 %v3317, 16
        %v3479 = vrot.slane %v3477, 4
        %v3480 = vshll.u32 %v3317, 16
        %v3482 = vrot.slane %v3480, 5
        %v3483 = vor.u32 %v3479, %v3482
        %v3484 = vsel %vm1697, %v3475, %v3483
        %v3486 = vshrl.u32 %v3318, 16
        %v3488 = vrot.slane %v3486, 4
        %v3489 = vshll.u32 %v3318, 16
        %v3491 = vrot.slane %v3489, 5
        %v3492 = vor.u32 %v3488, %v3491
        %v3494 = vshrl.u32 %v3319, 16
        %v3496 = vrot.slane %v3494, 4
        %v3497 = vshll.u32 %v3319, 16
        %v3499 = vrot.slane %v3497, 5
        %v3500 = vor.u32 %v3496, %v3499
        %v3501 = vsel %vm1697, %v3492, %v3500
        %v3503 = vshrl.u32 %v3320, 16
        %v3505 = vrot.slane %v3503, 4
        %v3506 = vshll.u32 %v3320, 16
        %v3508 = vrot.slane %v3506, 5
        %v3509 = vor.u32 %v3505, %v3508
        %v3511 = vshrl.u32 %v3321, 16
        %v3513 = vrot.slane %v3511, 4
        %v3514 = vshll.u32 %v3321, 16
        %v3516 = vrot.slane %v3514, 5
        %v3517 = vor.u32 %v3513, %v3516
        %v3518 = vsel %vm1697, %v3509, %v3517
        %v3520 = vshrl.u32 %v3322, 16
        %v3522 = vrot.slane %v3520, 4
        %v3523 = vshll.u32 %v3322, 16
        %v3525 = vrot.slane %v3523, 5
        %v3526 = vor.u32 %v3522, %v3525
        %v3528 = vshrl.u32 %v3323, 16
        %v3530 = vrot.slane %v3528, 4
        %v3531 = vshll.u32 %v3323, 16
        %v3533 = vrot.slane %v3531, 5
        %v3534 = vor.u32 %v3530, %v3533
        %v3535 = vsel %vm1697, %v3526, %v3534
        %v3537 = vshrl.u32 %v3324, 16
        %v3539 = vrot.slane %v3537, 4
        %v3540 = vshll.u32 %v3324, 16
        %v3542 = vrot.slane %v3540, 5
        %v3543 = vor.u32 %v3539, %v3542
        %v3545 = vshrl.u32 %v3325, 16
        %v3547 = vrot.slane %v3545, 4
        %v3548 = vshll.u32 %v3325, 16
        %v3550 = vrot.slane %v3548, 5
        %v3551 = vor.u32 %v3547, %v3550
        %v3552 = vsel %vm1697, %v3543, %v3551
        %v3554 = vshrl.u32 %v3326, 16
        %v3556 = vrot.slane %v3554, 4
        %v3557 = vshll.u32 %v3326, 16
        %v3559 = vrot.slane %v3557, 5
        %v3560 = vor.u32 %v3556, %v3559
        %v3562 = vshrl.u32 %v3327, 16
        %v3564 = vrot.slane %v3562, 4
        %v3565 = vshll.u32 %v3327, 16
        %v3567 = vrot.slane %v3565, 5
        %v3568 = vor.u32 %v3564, %v3567
        %v3569 = vsel %vm1697, %v3560, %v3568
        %v3571 = vshrl.u32 %v3328, 16
        %v3573 = vrot.slane %v3571, 4
        %v3574 = vshll.u32 %v3328, 16
        %v3576 = vrot.slane %v3574, 5
        %v3577 = vor.u32 %v3573, %v3576
        %v3579 = vshrl.u32 %v3329, 16
        %v3581 = vrot.slane %v3579, 4
        %v3582 = vshll.u32 %v3329, 16
        %v3584 = vrot.slane %v3582, 5
        %v3585 = vor.u32 %v3581, %v3584
        %v3586 = vsel %vm1697, %v3577, %v3585
        %v3588 = vshrl.u32 %v3330, 16
        %v3590 = vrot.slane %v3588, 4
        %v3591 = vshll.u32 %v3330, 16
        %v3593 = vrot.slane %v3591, 5
        %v3594 = vor.u32 %v3590, %v3593
        %v3596 = vshrl.u32 %v3331, 16
        %v3598 = vrot.slane %v3596, 4
        %v3599 = vshll.u32 %v3331, 16
        %v3601 = vrot.slane %v3599, 5
        %v3602 = vor.u32 %v3598, %v3601
        %v3603 = vsel %vm1697, %v3594, %v3602
        %3620 = vst [vmem:[#allocation3 + $0x40] sm:$0xff] %v3348
        %3621 = vst [vmem:[#allocation3 + $0x88] sm:$0xff] %v3365
        %3622 = vst [vmem:[#allocation3 + $0xd0] sm:$0xff] %v3382
        %3623 = vst [vmem:[#allocation3 + $0x118] sm:$0xff] %v3399
        %3624 = vst [vmem:[#allocation3 + $0x160] sm:$0xff] %v3416
        %3625 = vst [vmem:[#allocation3 + $0x1a8] sm:$0xff] %v3433
        %3626 = vst [vmem:[#allocation3 + $0x1f0] sm:$0xff] %v3450
        %3627 = vst [vmem:[#allocation3 + $0x238] sm:$0xff] %v3467
        %3628 = vst [vmem:[#allocation3 + $0x280] sm:$0xff] %v3484
        %3629 = vst [vmem:[#allocation3 + $0x2c8] sm:$0xff] %v3501
        %3630 = vst [vmem:[#allocation3 + $0x310] sm:$0xff] %v3518
        %3631 = vst [vmem:[#allocation3 + $0x358] sm:$0xff] %v3535
        %3632 = vst [vmem:[#allocation3 + $0x3a0] sm:$0xff] %v3552
        %3633 = vst [vmem:[#allocation3 + $0x3e8] sm:$0xff] %v3569
        %3634 = vst [vmem:[#allocation3 + $0x430] sm:$0xff] %v3586
        %3635 = vst [vmem:[#allocation3 + $0x478] sm:$0xff] %v3603
        %v3636 = vld [vmem:[#allocation3] sm:$0xff]
        %v3637 = vld [vmem:[#allocation3 + $0x8] sm:$0xff]
        %v3638 = vld [vmem:[#allocation3 + $0x10] sm:$0xff]
        %v3639 = vld [vmem:[#allocation3 + $0x18] sm:$0xff]
        %v3640 = vld [vmem:[#allocation3 + $0x20] sm:$0xff]
        %v3641 = vld [vmem:[#allocation3 + $0x28] sm:$0xff]
        %v3642 = vld [vmem:[#allocation3 + $0x30] sm:$0xff]
        %v3643 = vld [vmem:[#allocation3 + $0x38] sm:$0xff]
        %v3644 = vld [vmem:[#allocation3 + $0x40] sm:$0xff]
        %v3645 = vld [vmem:[#allocation3 + $0x48] sm:$0xff]
        %v3646 = vld [vmem:[#allocation3 + $0x50] sm:$0xff]
        %v3647 = vld [vmem:[#allocation3 + $0x58] sm:$0xff]
        %v3648 = vld [vmem:[#allocation3 + $0x60] sm:$0xff]
        %v3649 = vld [vmem:[#allocation3 + $0x68] sm:$0xff]
        %v3650 = vld [vmem:[#allocation3 + $0x70] sm:$0xff]
        %v3651 = vld [vmem:[#allocation3 + $0x78] sm:$0xff]
        %v3652 = vld [vmem:[#allocation3 + $0x80] sm:$0xff]
        %v3653 = vld [vmem:[#allocation3 + $0x88] sm:$0xff]
        %v3654 = vld [vmem:[#allocation3 + $0x90] sm:$0xff]
        %v3655 = vld [vmem:[#allocation3 + $0x98] sm:$0xff]
        %v3656 = vld [vmem:[#allocation3 + $0xa0] sm:$0xff]
        %v3657 = vld [vmem:[#allocation3 + $0xa8] sm:$0xff]
        %v3658 = vld [vmem:[#allocation3 + $0xb0] sm:$0xff]
        %v3659 = vld [vmem:[#allocation3 + $0xb8] sm:$0xff]
        %v3660 = vld [vmem:[#allocation3 + $0xc0] sm:$0xff]
        %v3661 = vld [vmem:[#allocation3 + $0xc8] sm:$0xff]
        %v3662 = vld [vmem:[#allocation3 + $0xd0] sm:$0xff]
        %v3663 = vld [vmem:[#allocation3 + $0xd8] sm:$0xff]
        %v3664 = vld [vmem:[#allocation3 + $0xe0] sm:$0xff]
        %v3665 = vld [vmem:[#allocation3 + $0xe8] sm:$0xff]
        %v3666 = vld [vmem:[#allocation3 + $0xf0] sm:$0xff]
        %v3667 = vld [vmem:[#allocation3 + $0xf8] sm:$0xff]
        %v3668 = vld [vmem:[#allocation3 + $0x100] sm:$0xff]
        %v3669 = vld [vmem:[#allocation3 + $0x108] sm:$0xff]
        %v3670 = vld [vmem:[#allocation3 + $0x110] sm:$0xff]
        %v3671 = vld [vmem:[#allocation3 + $0x118] sm:$0xff]
        %v3672 = vld [vmem:[#allocation3 + $0x120] sm:$0xff]
        %v3673 = vld [vmem:[#allocation3 + $0x128] sm:$0xff]
        %v3674 = vld [vmem:[#allocation3 + $0x130] sm:$0xff]
        %v3675 = vld [vmem:[#allocation3 + $0x138] sm:$0xff]
        %v3676 = vld [vmem:[#allocation3 + $0x140] sm:$0xff]
        %v3677 = vld [vmem:[#allocation3 + $0x148] sm:$0xff]
        %v3678 = vld [vmem:[#allocation3 + $0x150] sm:$0xff]
        %v3679 = vld [vmem:[#allocation3 + $0x158] sm:$0xff]
        %v3680 = vld [vmem:[#allocation3 + $0x160] sm:$0xff]
        %v3681 = vld [vmem:[#allocation3 + $0x168] sm:$0xff]
        %v3682 = vld [vmem:[#allocation3 + $0x170] sm:$0xff]
        %v3683 = vld [vmem:[#allocation3 + $0x178] sm:$0xff]
        %v3684 = vld [vmem:[#allocation3 + $0x180] sm:$0xff]
        %v3685 = vld [vmem:[#allocation3 + $0x188] sm:$0xff]
        %v3686 = vld [vmem:[#allocation3 + $0x190] sm:$0xff]
        %v3687 = vld [vmem:[#allocation3 + $0x198] sm:$0xff]
        %v3688 = vld [vmem:[#allocation3 + $0x1a0] sm:$0xff]
        %v3689 = vld [vmem:[#allocation3 + $0x1a8] sm:$0xff]
        %v3690 = vld [vmem:[#allocation3 + $0x1b0] sm:$0xff]
        %v3691 = vld [vmem:[#allocation3 + $0x1b8] sm:$0xff]
        %v3692 = vld [vmem:[#allocation3 + $0x1c0] sm:$0xff]
        %v3693 = vld [vmem:[#allocation3 + $0x1c8] sm:$0xff]
        %v3694 = vld [vmem:[#allocation3 + $0x1d0] sm:$0xff]
        %v3695 = vld [vmem:[#allocation3 + $0x1d8] sm:$0xff]
        %v3696 = vld [vmem:[#allocation3 + $0x1e0] sm:$0xff]
        %v3697 = vld [vmem:[#allocation3 + $0x1e8] sm:$0xff]
        %v3698 = vld [vmem:[#allocation3 + $0x1f0] sm:$0xff]
        %v3699 = vld [vmem:[#allocation3 + $0x1f8] sm:$0xff]
        %v3700 = vld [vmem:[#allocation3 + $0x200] sm:$0xff]
        %v3701 = vld [vmem:[#allocation3 + $0x208] sm:$0xff]
        %v3702 = vld [vmem:[#allocation3 + $0x210] sm:$0xff]
        %v3703 = vld [vmem:[#allocation3 + $0x218] sm:$0xff]
        %v3704 = vld [vmem:[#allocation3 + $0x220] sm:$0xff]
        %v3705 = vld [vmem:[#allocation3 + $0x228] sm:$0xff]
        %v3706 = vld [vmem:[#allocation3 + $0x230] sm:$0xff]
        %v3707 = vld [vmem:[#allocation3 + $0x238] sm:$0xff]
        %v3708 = vld [vmem:[#allocation3 + $0x240] sm:$0xff]
        %v3709 = vld [vmem:[#allocation3 + $0x248] sm:$0xff]
        %v3710 = vld [vmem:[#allocation3 + $0x250] sm:$0xff]
        %v3711 = vld [vmem:[#allocation3 + $0x258] sm:$0xff]
        %v3712 = vld [vmem:[#allocation3 + $0x260] sm:$0xff]
        %v3713 = vld [vmem:[#allocation3 + $0x268] sm:$0xff]
        %v3714 = vld [vmem:[#allocation3 + $0x270] sm:$0xff]
        %v3715 = vld [vmem:[#allocation3 + $0x278] sm:$0xff]
        %v3716 = vld [vmem:[#allocation3 + $0x280] sm:$0xff]
        %v3717 = vld [vmem:[#allocation3 + $0x288] sm:$0xff]
        %v3718 = vld [vmem:[#allocation3 + $0x290] sm:$0xff]
        %v3719 = vld [vmem:[#allocation3 + $0x298] sm:$0xff]
        %v3720 = vld [vmem:[#allocation3 + $0x2a0] sm:$0xff]
        %v3721 = vld [vmem:[#allocation3 + $0x2a8] sm:$0xff]
        %v3722 = vld [vmem:[#allocation3 + $0x2b0] sm:$0xff]
        %v3723 = vld [vmem:[#allocation3 + $0x2b8] sm:$0xff]
        %v3724 = vld [vmem:[#allocation3 + $0x2c0] sm:$0xff]
        %v3725 = vld [vmem:[#allocation3 + $0x2c8] sm:$0xff]
        %v3726 = vld [vmem:[#allocation3 + $0x2d0] sm:$0xff]
        %v3727 = vld [vmem:[#allocation3 + $0x2d8] sm:$0xff]
        %v3728 = vld [vmem:[#allocation3 + $0x2e0] sm:$0xff]
        %v3729 = vld [vmem:[#allocation3 + $0x2e8] sm:$0xff]
        %v3730 = vld [vmem:[#allocation3 + $0x2f0] sm:$0xff]
        %v3731 = vld [vmem:[#allocation3 + $0x2f8] sm:$0xff]
        %v3732 = vld [vmem:[#allocation3 + $0x300] sm:$0xff]
        %v3733 = vld [vmem:[#allocation3 + $0x308] sm:$0xff]
        %v3734 = vld [vmem:[#allocation3 + $0x310] sm:$0xff]
        %v3735 = vld [vmem:[#allocation3 + $0x318] sm:$0xff]
        %v3736 = vld [vmem:[#allocation3 + $0x320] sm:$0xff]
        %v3737 = vld [vmem:[#allocation3 + $0x328] sm:$0xff]
        %v3738 = vld [vmem:[#allocation3 + $0x330] sm:$0xff]
        %v3739 = vld [vmem:[#allocation3 + $0x338] sm:$0xff]
        %v3740 = vld [vmem:[#allocation3 + $0x340] sm:$0xff]
        %v3741 = vld [vmem:[#allocation3 + $0x348] sm:$0xff]
        %v3742 = vld [vmem:[#allocation3 + $0x350] sm:$0xff]
        %v3743 = vld [vmem:[#allocation3 + $0x358] sm:$0xff]
        %v3744 = vld [vmem:[#allocation3 + $0x360] sm:$0xff]
        %v3745 = vld [vmem:[#allocation3 + $0x368] sm:$0xff]
        %v3746 = vld [vmem:[#allocation3 + $0x370] sm:$0xff]
        %v3747 = vld [vmem:[#allocation3 + $0x378] sm:$0xff]
        %v3748 = vld [vmem:[#allocation3 + $0x380] sm:$0xff]
        %v3749 = vld [vmem:[#allocation3 + $0x388] sm:$0xff]
        %v3750 = vld [vmem:[#allocation3 + $0x390] sm:$0xff]
        %v3751 = vld [vmem:[#allocation3 + $0x398] sm:$0xff]
        %v3752 = vld [vmem:[#allocation3 + $0x3a0] sm:$0xff]
        %v3753 = vld [vmem:[#allocation3 + $0x3a8] sm:$0xff]
        %v3754 = vld [vmem:[#allocation3 + $0x3b0] sm:$0xff]
        %v3755 = vld [vmem:[#allocation3 + $0x3b8] sm:$0xff]
        %v3756 = vld [vmem:[#allocation3 + $0x3c0] sm:$0xff]
        %v3757 = vld [vmem:[#allocation3 + $0x3c8] sm:$0xff]
        %v3758 = vld [vmem:[#allocation3 + $0x3d0] sm:$0xff]
        %v3759 = vld [vmem:[#allocation3 + $0x3d8] sm:$0xff]
        %v3760 = vld [vmem:[#allocation3 + $0x3e0] sm:$0xff]
        %v3761 = vld [vmem:[#allocation3 + $0x3e8] sm:$0xff]
        %v3762 = vld [vmem:[#allocation3 + $0x3f0] sm:$0xff]
        %v3763 = vld [vmem:[#allocation3 + $0x3f8] sm:$0xff]
        %v3764 = vld [vmem:[#allocation3 + $0x400] sm:$0xff]
        %v3765 = vld [vmem:[#allocation3 + $0x408] sm:$0xff]
        %v3766 = vld [vmem:[#allocation3 + $0x410] sm:$0xff]
        %v3767 = vld [vmem:[#allocation3 + $0x418] sm:$0xff]
        %v3768 = vld [vmem:[#allocation3 + $0x420] sm:$0xff]
        %v3769 = vld [vmem:[#allocation3 + $0x428] sm:$0xff]
        %v3770 = vld [vmem:[#allocation3 + $0x430] sm:$0xff]
        %v3771 = vld [vmem:[#allocation3 + $0x438] sm:$0xff]
        %v3772 = vld [vmem:[#allocation3 + $0x440] sm:$0xff]
        %v3773 = vld [vmem:[#allocation3 + $0x448] sm:$0xff]
        %v3774 = vld [vmem:[#allocation3 + $0x450] sm:$0xff]
        %v3775 = vld [vmem:[#allocation3 + $0x458] sm:$0xff]
        %v3776 = vld [vmem:[#allocation3 + $0x460] sm:$0xff]
        %v3777 = vld [vmem:[#allocation3 + $0x468] sm:$0xff]
        %v3778 = vld [vmem:[#allocation3 + $0x470] sm:$0xff]
        %v3779 = vld [vmem:[#allocation3 + $0x478] sm:$0xff]
        %v3780 = vld [vmem:[#allocation9] sm:$0xf]
        %v3781 = vld [vmem:[#allocation9 + $0x4] sm:$0xf]
        %v3782 = vld [vmem:[#allocation9 + $0x8] sm:$0xf]
        %v3783 = vld [vmem:[#allocation9 + $0xc] sm:$0xf]
        %v3784 = vld [vmem:[#allocation9 + $0x10] sm:$0xf]
        %v3785 = vld [vmem:[#allocation9 + $0x14] sm:$0xf]
        %v3786 = vld [vmem:[#allocation9 + $0x18] sm:$0xf]
        %v3787 = vld [vmem:[#allocation9 + $0x1c] sm:$0xf]
        %v3788 = vld [vmem:[#allocation9 + $0x20] sm:$0xf]
        %v3789 = vld [vmem:[#allocation9 + $0x24] sm:$0xf]
        %v3790 = vld [vmem:[#allocation9 + $0x28] sm:$0xf]
        %v3791 = vld [vmem:[#allocation9 + $0x2c] sm:$0xf]
        %v3792 = vld [vmem:[#allocation9 + $0x30] sm:$0xf]
        %v3793 = vld [vmem:[#allocation9 + $0x34] sm:$0xf]
        %v3794 = vld [vmem:[#allocation9 + $0x38] sm:$0xf]
        %v3795 = vld [vmem:[#allocation9 + $0x3c] sm:$0xf]
        %v3796 = vld [vmem:[#allocation9 + $0x40] sm:$0xf]
        %v3797 = vld [vmem:[#allocation9 + $0x44] sm:$0xf]
        %v3798 = vld [vmem:[#allocation9 + $0x48] sm:$0xf]
        %v3799 = vld [vmem:[#allocation9 + $0x4c] sm:$0xf]
        %v3800 = vld [vmem:[#allocation9 + $0x50] sm:$0xf]
        %v3801 = vld [vmem:[#allocation9 + $0x54] sm:$0xf]
        %v3802 = vld [vmem:[#allocation9 + $0x58] sm:$0xf]
        %v3803 = vld [vmem:[#allocation9 + $0x5c] sm:$0xf]
        %v3804 = vld [vmem:[#allocation9 + $0x60] sm:$0xf]
        %v3805 = vld [vmem:[#allocation9 + $0x64] sm:$0xf]
        %v3806 = vld [vmem:[#allocation9 + $0x68] sm:$0xf]
        %v3807 = vld [vmem:[#allocation9 + $0x6c] sm:$0xf]
        %v3808 = vld [vmem:[#allocation9 + $0x70] sm:$0xf]
        %v3809 = vld [vmem:[#allocation9 + $0x74] sm:$0xf]
        %v3810 = vld [vmem:[#allocation9 + $0x78] sm:$0xf]
        %v3811 = vld [vmem:[#allocation9 + $0x7c] sm:$0xf]
        %v3812 = vld [vmem:[#allocation9 + $0x80] sm:$0xf]
        %v3813 = vld [vmem:[#allocation9 + $0x84] sm:$0xf]
        %v3814 = vld [vmem:[#allocation9 + $0x88] sm:$0xf]
        %v3815 = vld [vmem:[#allocation9 + $0x8c] sm:$0xf]
        %v3816 = vld [vmem:[#allocation9 + $0x90] sm:$0xf]
        %v3817 = vld [vmem:[#allocation9 + $0x94] sm:$0xf]
        %v3818 = vld [vmem:[#allocation9 + $0x98] sm:$0xf]
        %v3819 = vld [vmem:[#allocation9 + $0x9c] sm:$0xf]
        %v3820 = vld [vmem:[#allocation9 + $0xa0] sm:$0xf]
        %v3821 = vld [vmem:[#allocation9 + $0xa4] sm:$0xf]
        %v3822 = vld [vmem:[#allocation9 + $0xa8] sm:$0xf]
        %v3823 = vld [vmem:[#allocation9 + $0xac] sm:$0xf]
        %v3824 = vld [vmem:[#allocation9 + $0xb0] sm:$0xf]
        %v3825 = vld [vmem:[#allocation9 + $0xb4] sm:$0xf]
        %v3826 = vld [vmem:[#allocation9 + $0xb8] sm:$0xf]
        %v3827 = vld [vmem:[#allocation9 + $0xbc] sm:$0xf]
        %v3828 = vld [vmem:[#allocation9 + $0xc0] sm:$0xf]
        %v3829 = vld [vmem:[#allocation9 + $0xc4] sm:$0xf]
        %v3830 = vld [vmem:[#allocation9 + $0xc8] sm:$0xf]
        %v3831 = vld [vmem:[#allocation9 + $0xcc] sm:$0xf]
        %v3832 = vld [vmem:[#allocation9 + $0xd0] sm:$0xf]
        %v3833 = vld [vmem:[#allocation9 + $0xd4] sm:$0xf]
        %v3834 = vld [vmem:[#allocation9 + $0xd8] sm:$0xf]
        %v3835 = vld [vmem:[#allocation9 + $0xdc] sm:$0xf]
        %v3836 = vld [vmem:[#allocation9 + $0xe0] sm:$0xf]
        %v3837 = vld [vmem:[#allocation9 + $0xe4] sm:$0xf]
        %v3838 = vld [vmem:[#allocation9 + $0xe8] sm:$0xf]
        %v3839 = vld [vmem:[#allocation9 + $0xec] sm:$0xf]
        %v3840 = vld [vmem:[#allocation9 + $0xf0] sm:$0xf]
        %v3841 = vld [vmem:[#allocation9 + $0xf4] sm:$0xf]
        %v3842 = vld [vmem:[#allocation9 + $0xf8] sm:$0xf]
        %v3843 = vld [vmem:[#allocation9 + $0xfc] sm:$0xf]
        %v3844 = vld [vmem:[#allocation9 + $0x100] sm:$0xf]
        %v3845 = vld [vmem:[#allocation9 + $0x104] sm:$0xf]
        %v3846 = vld [vmem:[#allocation9 + $0x108] sm:$0xf]
        %v3847 = vld [vmem:[#allocation9 + $0x10c] sm:$0xf]
        %v3848 = vld [vmem:[#allocation9 + $0x110] sm:$0xf]
        %v3849 = vld [vmem:[#allocation9 + $0x114] sm:$0xf]
        %v3850 = vld [vmem:[#allocation9 + $0x118] sm:$0xf]
        %v3851 = vld [vmem:[#allocation9 + $0x11c] sm:$0xf]
        %v3852 = vld [vmem:[#allocation9 + $0x120] sm:$0xf]
        %v3853 = vld [vmem:[#allocation9 + $0x124] sm:$0xf]
        %v3854 = vld [vmem:[#allocation9 + $0x128] sm:$0xf]
        %v3855 = vld [vmem:[#allocation9 + $0x12c] sm:$0xf]
        %v3856 = vld [vmem:[#allocation9 + $0x130] sm:$0xf]
        %v3857 = vld [vmem:[#allocation9 + $0x134] sm:$0xf]
        %v3858 = vld [vmem:[#allocation9 + $0x138] sm:$0xf]
        %v3859 = vld [vmem:[#allocation9 + $0x13c] sm:$0xf]
        %v3860 = vld [vmem:[#allocation9 + $0x140] sm:$0xf]
        %v3861 = vld [vmem:[#allocation9 + $0x144] sm:$0xf]
        %v3862 = vld [vmem:[#allocation9 + $0x148] sm:$0xf]
        %v3863 = vld [vmem:[#allocation9 + $0x14c] sm:$0xf]
        %v3864 = vld [vmem:[#allocation9 + $0x150] sm:$0xf]
        %v3865 = vld [vmem:[#allocation9 + $0x154] sm:$0xf]
        %v3866 = vld [vmem:[#allocation9 + $0x158] sm:$0xf]
        %v3867 = vld [vmem:[#allocation9 + $0x15c] sm:$0xf]
        %v3868 = vld [vmem:[#allocation9 + $0x160] sm:$0xf]
        %v3869 = vld [vmem:[#allocation9 + $0x164] sm:$0xf]
        %v3870 = vld [vmem:[#allocation9 + $0x168] sm:$0xf]
        %v3871 = vld [vmem:[#allocation9 + $0x16c] sm:$0xf]
        %v3872 = vld [vmem:[#allocation9 + $0x170] sm:$0xf]
        %v3873 = vld [vmem:[#allocation9 + $0x174] sm:$0xf]
        %v3874 = vld [vmem:[#allocation9 + $0x178] sm:$0xf]
        %v3875 = vld [vmem:[#allocation9 + $0x17c] sm:$0xf]
        %v3876 = vld [vmem:[#allocation9 + $0x180] sm:$0xf]
        %v3877 = vld [vmem:[#allocation9 + $0x184] sm:$0xf]
        %v3878 = vld [vmem:[#allocation9 + $0x188] sm:$0xf]
        %v3879 = vld [vmem:[#allocation9 + $0x18c] sm:$0xf]
        %v3880 = vld [vmem:[#allocation9 + $0x190] sm:$0xf]
        %v3881 = vld [vmem:[#allocation9 + $0x194] sm:$0xf]
        %v3882 = vld [vmem:[#allocation9 + $0x198] sm:$0xf]
        %v3883 = vld [vmem:[#allocation9 + $0x19c] sm:$0xf]
        %v3884 = vld [vmem:[#allocation9 + $0x1a0] sm:$0xf]
        %v3885 = vld [vmem:[#allocation9 + $0x1a4] sm:$0xf]
        %v3886 = vld [vmem:[#allocation9 + $0x1a8] sm:$0xf]
        %v3887 = vld [vmem:[#allocation9 + $0x1ac] sm:$0xf]
        %v3888 = vld [vmem:[#allocation9 + $0x1b0] sm:$0xf]
        %v3889 = vld [vmem:[#allocation9 + $0x1b4] sm:$0xf]
        %v3890 = vld [vmem:[#allocation9 + $0x1b8] sm:$0xf]
        %v3891 = vld [vmem:[#allocation9 + $0x1bc] sm:$0xf]
        %v3892 = vld [vmem:[#allocation9 + $0x1c0] sm:$0xf]
        %v3893 = vld [vmem:[#allocation9 + $0x1c4] sm:$0xf]
        %v3894 = vld [vmem:[#allocation9 + $0x1c8] sm:$0xf]
        %v3895 = vld [vmem:[#allocation9 + $0x1cc] sm:$0xf]
        %v3896 = vld [vmem:[#allocation9 + $0x1d0] sm:$0xf]
        %v3897 = vld [vmem:[#allocation9 + $0x1d4] sm:$0xf]
        %v3898 = vld [vmem:[#allocation9 + $0x1d8] sm:$0xf]
        %v3899 = vld [vmem:[#allocation9 + $0x1dc] sm:$0xf]
        %v3900 = vld [vmem:[#allocation9 + $0x1e0] sm:$0xf]
        %v3901 = vld [vmem:[#allocation9 + $0x1e4] sm:$0xf]
        %v3902 = vld [vmem:[#allocation9 + $0x1e8] sm:$0xf]
        %v3903 = vld [vmem:[#allocation9 + $0x1ec] sm:$0xf]
        %v3904 = vld [vmem:[#allocation9 + $0x1f0] sm:$0xf]
        %v3905 = vld [vmem:[#allocation9 + $0x1f4] sm:$0xf]
        %v3906 = vld [vmem:[#allocation9 + $0x1f8] sm:$0xf]
        %v3907 = vld [vmem:[#allocation9 + $0x1fc] sm:$0xf]
        %v3908 = vld [vmem:[#allocation9 + $0x200] sm:$0xf]
        %v3909 = vld [vmem:[#allocation9 + $0x204] sm:$0xf]
        %v3910 = vld [vmem:[#allocation9 + $0x208] sm:$0xf]
        %v3911 = vld [vmem:[#allocation9 + $0x20c] sm:$0xf]
        %v3912 = vld [vmem:[#allocation9 + $0x210] sm:$0xf]
        %v3913 = vld [vmem:[#allocation9 + $0x214] sm:$0xf]
        %v3914 = vld [vmem:[#allocation9 + $0x218] sm:$0xf]
        %v3915 = vld [vmem:[#allocation9 + $0x21c] sm:$0xf]
        %v3916 = vld [vmem:[#allocation9 + $0x220] sm:$0xf]
        %v3917 = vld [vmem:[#allocation9 + $0x224] sm:$0xf]
        %v3918 = vld [vmem:[#allocation9 + $0x228] sm:$0xf]
        %v3919 = vld [vmem:[#allocation9 + $0x22c] sm:$0xf]
        %v3920 = vld [vmem:[#allocation9 + $0x230] sm:$0xf]
        %v3921 = vld [vmem:[#allocation9 + $0x234] sm:$0xf]
        %v3922 = vld [vmem:[#allocation9 + $0x238] sm:$0xf]
        %v3923 = vld [vmem:[#allocation9 + $0x23c] sm:$0xf]
        %v4068 = vunpack.c.l.b16 %v3780
        %v4069 = vunpack.c.l.b16 %v3781
        %v4070 = vunpack.c.l.b16 %v3782
        %v4071 = vunpack.c.l.b16 %v3783
        %v4072 = vunpack.c.l.b16 %v3784
        %v4073 = vunpack.c.l.b16 %v3785
        %v4074 = vunpack.c.l.b16 %v3786
        %v4075 = vunpack.c.l.b16 %v3787
        %v4076 = vunpack.c.l.b16 %v3788
        %v4077 = vunpack.c.l.b16 %v3789
        %v4078 = vunpack.c.l.b16 %v3790
        %v4079 = vunpack.c.l.b16 %v3791
        %v4080 = vunpack.c.l.b16 %v3792
        %v4081 = vunpack.c.l.b16 %v3793
        %v4082 = vunpack.c.l.b16 %v3794
        %v4083 = vunpack.c.l.b16 %v3795
        %v4084 = vunpack.c.l.b16 %v3796
        %v4085 = vunpack.c.l.b16 %v3797
        %v4086 = vunpack.c.l.b16 %v3798
        %v4087 = vunpack.c.l.b16 %v3799
        %v4088 = vunpack.c.l.b16 %v3800
        %v4089 = vunpack.c.l.b16 %v3801
        %v4090 = vunpack.c.l.b16 %v3802
        %v4091 = vunpack.c.l.b16 %v3803
        %v4092 = vunpack.c.l.b16 %v3804
        %v4093 = vunpack.c.l.b16 %v3805
        %v4094 = vunpack.c.l.b16 %v3806
        %v4095 = vunpack.c.l.b16 %v3807
        %v4096 = vunpack.c.l.b16 %v3808
        %v4097 = vunpack.c.l.b16 %v3809
        %v4098 = vunpack.c.l.b16 %v3810
        %v4099 = vunpack.c.l.b16 %v3811
        %v4100 = vunpack.c.l.b16 %v3812
        %v4101 = vunpack.c.l.b16 %v3813
        %v4102 = vunpack.c.l.b16 %v3814
        %v4103 = vunpack.c.l.b16 %v3815
        %v4104 = vunpack.c.l.b16 %v3816
        %v4105 = vunpack.c.l.b16 %v3817
        %v4106 = vunpack.c.l.b16 %v3818
        %v4107 = vunpack.c.l.b16 %v3819
        %v4108 = vunpack.c.l.b16 %v3820
        %v4109 = vunpack.c.l.b16 %v3821
        %v4110 = vunpack.c.l.b16 %v3822
        %v4111 = vunpack.c.l.b16 %v3823
        %v4112 = vunpack.c.l.b16 %v3824
        %v4113 = vunpack.c.l.b16 %v3825
        %v4114 = vunpack.c.l.b16 %v3826
        %v4115 = vunpack.c.l.b16 %v3827
        %v4116 = vunpack.c.l.b16 %v3828
        %v4117 = vunpack.c.l.b16 %v3829
        %v4118 = vunpack.c.l.b16 %v3830
        %v4119 = vunpack.c.l.b16 %v3831
        %v4120 = vunpack.c.l.b16 %v3832
        %v4121 = vunpack.c.l.b16 %v3833
        %v4122 = vunpack.c.l.b16 %v3834
        %v4123 = vunpack.c.l.b16 %v3835
        %v4124 = vunpack.c.l.b16 %v3836
        %v4125 = vunpack.c.l.b16 %v3837
        %v4126 = vunpack.c.l.b16 %v3838
        %v4127 = vunpack.c.l.b16 %v3839
        %v4128 = vunpack.c.l.b16 %v3840
        %v4129 = vunpack.c.l.b16 %v3841
        %v4130 = vunpack.c.l.b16 %v3842
        %v4131 = vunpack.c.l.b16 %v3843
        %v4132 = vunpack.c.l.b16 %v3844
        %v4133 = vunpack.c.l.b16 %v3845
        %v4134 = vunpack.c.l.b16 %v3846
        %v4135 = vunpack.c.l.b16 %v3847
        %v4136 = vunpack.c.l.b16 %v3848
        %v4137 = vunpack.c.l.b16 %v3849
        %v4138 = vunpack.c.l.b16 %v3850
        %v4139 = vunpack.c.l.b16 %v3851
        %v4140 = vunpack.c.l.b16 %v3852
        %v4141 = vunpack.c.l.b16 %v3853
        %v4142 = vunpack.c.l.b16 %v3854
        %v4143 = vunpack.c.l.b16 %v3855
        %v4144 = vunpack.c.l.b16 %v3856
        %v4145 = vunpack.c.l.b16 %v3857
        %v4146 = vunpack.c.l.b16 %v3858
        %v4147 = vunpack.c.l.b16 %v3859
        %v4148 = vunpack.c.l.b16 %v3860
        %v4149 = vunpack.c.l.b16 %v3861
        %v4150 = vunpack.c.l.b16 %v3862
        %v4151 = vunpack.c.l.b16 %v3863
        %v4152 = vunpack.c.l.b16 %v3864
        %v4153 = vunpack.c.l.b16 %v3865
        %v4154 = vunpack.c.l.b16 %v3866
        %v4155 = vunpack.c.l.b16 %v3867
        %v4156 = vunpack.c.l.b16 %v3868
        %v4157 = vunpack.c.l.b16 %v3869
        %v4158 = vunpack.c.l.b16 %v3870
        %v4159 = vunpack.c.l.b16 %v3871
        %v4160 = vunpack.c.l.b16 %v3872
        %v4161 = vunpack.c.l.b16 %v3873
        %v4162 = vunpack.c.l.b16 %v3874
        %v4163 = vunpack.c.l.b16 %v3875
        %v4164 = vunpack.c.l.b16 %v3876
        %v4165 = vunpack.c.l.b16 %v3877
        %v4166 = vunpack.c.l.b16 %v3878
        %v4167 = vunpack.c.l.b16 %v3879
        %v4168 = vunpack.c.l.b16 %v3880
        %v4169 = vunpack.c.l.b16 %v3881
        %v4170 = vunpack.c.l.b16 %v3882
        %v4171 = vunpack.c.l.b16 %v3883
        %v4172 = vunpack.c.l.b16 %v3884
        %v4173 = vunpack.c.l.b16 %v3885
        %v4174 = vunpack.c.l.b16 %v3886
        %v4175 = vunpack.c.l.b16 %v3887
        %v4176 = vunpack.c.l.b16 %v3888
        %v4177 = vunpack.c.l.b16 %v3889
        %v4178 = vunpack.c.l.b16 %v3890
        %v4179 = vunpack.c.l.b16 %v3891
        %v4180 = vunpack.c.l.b16 %v3892
        %v4181 = vunpack.c.l.b16 %v3893
        %v4182 = vunpack.c.l.b16 %v3894
        %v4183 = vunpack.c.l.b16 %v3895
        %v4184 = vunpack.c.l.b16 %v3896
        %v4185 = vunpack.c.l.b16 %v3897
        %v4186 = vunpack.c.l.b16 %v3898
        %v4187 = vunpack.c.l.b16 %v3899
        %v4188 = vunpack.c.l.b16 %v3900
        %v4189 = vunpack.c.l.b16 %v3901
        %v4190 = vunpack.c.l.b16 %v3902
        %v4191 = vunpack.c.l.b16 %v3903
        %v4192 = vunpack.c.l.b16 %v3904
        %v4193 = vunpack.c.l.b16 %v3905
        %v4194 = vunpack.c.l.b16 %v3906
        %v4195 = vunpack.c.l.b16 %v3907
        %v4196 = vunpack.c.l.b16 %v3908
        %v4197 = vunpack.c.l.b16 %v3909
        %v4198 = vunpack.c.l.b16 %v3910
        %v4199 = vunpack.c.l.b16 %v3911
        %v4200 = vunpack.c.l.b16 %v3912
        %v4201 = vunpack.c.l.b16 %v3913
        %v4202 = vunpack.c.l.b16 %v3914
        %v4203 = vunpack.c.l.b16 %v3915
        %v4204 = vunpack.c.l.b16 %v3916
        %v4205 = vunpack.c.l.b16 %v3917
        %v4206 = vunpack.c.l.b16 %v3918
        %v4207 = vunpack.c.l.b16 %v3919
        %v4208 = vunpack.c.l.b16 %v3920
        %v4209 = vunpack.c.l.b16 %v3921
        %v4210 = vunpack.c.l.b16 %v3922
        %v4211 = vunpack.c.l.b16 %v3923
        %v4212 = vpack.c.b16 %v4069, %v4068
        %v4213 = vpack.c.b16 %v4071, %v4070
        %v4214 = vpack.c.b16 %v4073, %v4072
        %v4215 = vpack.c.b16 %v4075, %v4074
        %v4216 = vpack.c.b16 %v4077, %v4076
        %v4217 = vpack.c.b16 %v4079, %v4078
        %v4218 = vpack.c.b16 %v4081, %v4080
        %v4219 = vpack.c.b16 %v4083, %v4082
        %v4220 = vpack.c.b16 %v4085, %v4084
        %v4221 = vpack.c.b16 %v4087, %v4086
        %v4222 = vpack.c.b16 %v4089, %v4088
        %v4223 = vpack.c.b16 %v4091, %v4090
        %v4224 = vpack.c.b16 %v4093, %v4092
        %v4225 = vpack.c.b16 %v4095, %v4094
        %v4226 = vpack.c.b16 %v4097, %v4096
        %v4227 = vpack.c.b16 %v4099, %v4098
        %v4228 = vpack.c.b16 %v4101, %v4100
        %v4229 = vpack.c.b16 %v4103, %v4102
        %v4230 = vpack.c.b16 %v4105, %v4104
        %v4231 = vpack.c.b16 %v4107, %v4106
        %v4232 = vpack.c.b16 %v4109, %v4108
        %v4233 = vpack.c.b16 %v4111, %v4110
        %v4234 = vpack.c.b16 %v4113, %v4112
        %v4235 = vpack.c.b16 %v4115, %v4114
        %v4236 = vpack.c.b16 %v4117, %v4116
        %v4237 = vpack.c.b16 %v4119, %v4118
        %v4238 = vpack.c.b16 %v4121, %v4120
        %v4239 = vpack.c.b16 %v4123, %v4122
        %v4240 = vpack.c.b16 %v4125, %v4124
        %v4241 = vpack.c.b16 %v4127, %v4126
        %v4242 = vpack.c.b16 %v4129, %v4128
        %v4243 = vpack.c.b16 %v4131, %v4130
        %v4244 = vpack.c.b16 %v4133, %v4132
        %v4245 = vpack.c.b16 %v4135, %v4134
        %v4246 = vpack.c.b16 %v4137, %v4136
        %v4247 = vpack.c.b16 %v4139, %v4138
        %v4248 = vpack.c.b16 %v4141, %v4140
        %v4249 = vpack.c.b16 %v4143, %v4142
        %v4250 = vpack.c.b16 %v4145, %v4144
        %v4251 = vpack.c.b16 %v4147, %v4146
        %v4252 = vpack.c.b16 %v4149, %v4148
        %v4253 = vpack.c.b16 %v4151, %v4150
        %v4254 = vpack.c.b16 %v4153, %v4152
        %v4255 = vpack.c.b16 %v4155, %v4154
        %v4256 = vpack.c.b16 %v4157, %v4156
        %v4257 = vpack.c.b16 %v4159, %v4158
        %v4258 = vpack.c.b16 %v4161, %v4160
        %v4259 = vpack.c.b16 %v4163, %v4162
        %v4260 = vpack.c.b16 %v4165, %v4164
        %v4261 = vpack.c.b16 %v4167, %v4166
        %v4262 = vpack.c.b16 %v4169, %v4168
        %v4263 = vpack.c.b16 %v4171, %v4170
        %v4264 = vpack.c.b16 %v4173, %v4172
        %v4265 = vpack.c.b16 %v4175, %v4174
        %v4266 = vpack.c.b16 %v4177, %v4176
        %v4267 = vpack.c.b16 %v4179, %v4178
        %v4268 = vpack.c.b16 %v4181, %v4180
        %v4269 = vpack.c.b16 %v4183, %v4182
        %v4270 = vpack.c.b16 %v4185, %v4184
        %v4271 = vpack.c.b16 %v4187, %v4186
        %v4272 = vpack.c.b16 %v4189, %v4188
        %v4273 = vpack.c.b16 %v4191, %v4190
        %v4274 = vpack.c.b16 %v4193, %v4192
        %v4275 = vpack.c.b16 %v4195, %v4194
        %v4276 = vpack.c.b16 %v4197, %v4196
        %v4277 = vpack.c.b16 %v4199, %v4198
        %v4278 = vpack.c.b16 %v4201, %v4200
        %v4279 = vpack.c.b16 %v4203, %v4202
        %v4280 = vpack.c.b16 %v4205, %v4204
        %v4281 = vpack.c.b16 %v4207, %v4206
        %v4282 = vpack.c.b16 %v4209, %v4208
        %v4283 = vpack.c.b16 %v4211, %v4210
        %4356 = vmatprep.subr.bf16.mxu0 0
        %4357 = vmatpush1.bf16.msra.mxu0 %v4212
        %4358 = vmatprep.subr.bf16.mxu0 0
        %4359 = vmatpush1.bf16.msra.mxu0 %v4213
        %4360 = vmatprep.subr.bf16.mxu0 0
        %4361 = vmatpush1.bf16.msra.mxu0 %v4214
        %4362 = vmatprep.subr.bf16.mxu0 0
        %4363 = vmatpush1.bf16.msra.mxu0 %v4215
        %4364 = vmatprep.subr.bf16.mxu0 0
        %4365 = vmatpush1.bf16.msra.mxu0 %v4216
        %4366 = vmatprep.subr.bf16.mxu0 0
        %4367 = vmatpush1.bf16.msra.mxu0 %v4217
        %4368 = vmatprep.subr.bf16.mxu0 0
        %4369 = vmatpush1.bf16.msra.mxu0 %v4218
        %4370 = vmatprep.subr.bf16.mxu0 0
        %4371 = vmatpush1.bf16.msra.mxu0 %v4219
        %4372 = vmatprep.subr.bf16.mxu0 0
        %4373 = vmatpush1.bf16.msra.mxu0 %v4220
        %4374 = vmatprep.subr.bf16.mxu0 0
        %4375 = vmatpush1.bf16.msra.mxu0 %v4221
        %4376 = vmatprep.subr.bf16.mxu0 0
        %4377 = vmatpush1.bf16.msra.mxu0 %v4222
        %4378 = vmatprep.subr.bf16.mxu0 0
        %4379 = vmatpush1.bf16.msra.mxu0 %v4223
        %4380 = vmatprep.subr.bf16.mxu0 0
        %4381 = vmatpush1.bf16.msra.mxu0 %v4224
        %4382 = vmatprep.subr.bf16.mxu0 0
        %4383 = vmatpush1.bf16.msra.mxu0 %v4225
        %4384 = vmatprep.subr.bf16.mxu0 0
        %4385 = vmatpush1.bf16.msra.mxu0 %v4226
        %4386 = vmatprep.subr.bf16.mxu0 0
        %4387 = vmatpush1.bf16.msra.mxu0 %v4227
        %4388 = vmatprep.mubr.bf16.mxu0 %v3637
        %4389 = vmatmul.mubr.bf16.gmra.mrb[0].mxu0 %v3636
        %v4390 = vpop.f32.mrb[0].mxu0
        %v4391 = vadd.f32 0.0, %v4390
        %v4392 = vpop.f32.mrb[0].mxu0
        %v4393 = vpop.f32.mrb[0].mxu0
        %v4394 = vadd.f32 0.0, %v4393
        %v4395 = vpop.f32.mrb[0].mxu0
        %4396 = vmatprep.mubr.bf16.mxu0 %v3646
        %4397 = vmatmul.mubr.bf16.gmra.mrb[0].mxu0 %v3645
        %v4398 = vpop.f32.mrb[0].mxu0
        %v4399 = vadd.f32 0.0, %v4398
        %v4400 = vpop.f32.mrb[0].mxu0
        %v4401 = vpop.f32.mrb[0].mxu0
        %v4402 = vadd.f32 0.0, %v4401
        %v4403 = vpop.f32.mrb[0].mxu0
        %4404 = vmatprep.mubr.bf16.mxu0 %v3655
        %4405 = vmatmul.mubr.bf16.gmra.mrb[0].mxu0 %v3654
        %v4406 = vpop.f32.mrb[0].mxu0
        %v4407 = vadd.f32 0.0, %v4406
        %v4408 = vpop.f32.mrb[0].mxu0
        %v4409 = vpop.f32.mrb[0].mxu0
        %v4410 = vadd.f32 0.0, %v4409
        %v4411 = vpop.f32.mrb[0].mxu0
        %4412 = vmatprep.mubr.bf16.mxu0 %v3664
        %4413 = vmatmul.mubr.bf16.gmra.mrb[0].mxu0 %v3663
        %v4414 = vpop.f32.mrb[0].mxu0
        %v4415 = vadd.f32 0.0, %v4414
        %v4416 = vpop.f32.mrb[0].mxu0
        %v4417 = vpop.f32.mrb[0].mxu0
        %v4418 = vadd.f32 0.0, %v4417
        %v4419 = vpop.f32.mrb[0].mxu0
        %4420 = vmatprep.mubr.bf16.mxu0 %v3673
        %4421 = vmatmul.mubr.bf16.gmra.mrb[0].mxu0 %v3672
        %v4422 = vpop.f32.mrb[0].mxu0
        %v4423 = vadd.f32 0.0, %v4422
        %v4424 = vpop.f32.mrb[0].mxu0
        %v4425 = vpop.f32.mrb[0].mxu0
        %v4426 = vadd.f32 0.0, %v4425
        %v4427 = vpop.f32.mrb[0].mxu0
        %4428 = vmatprep.mubr.bf16.mxu0 %v3682
        %4429 = vmatmul.mubr.bf16.gmra.mrb[0].mxu0 %v3681
        %v4430 = vpop.f32.mrb[0].mxu0
        %v4431 = vadd.f32 0.0, %v4430
        %v4432 = vpop.f32.mrb[0].mxu0
        %v4433 = vpop.f32.mrb[0].mxu0
        %v4434 = vadd.f32 0.0, %v4433
        %v4435 = vpop.f32.mrb[0].mxu0
        %4436 = vmatprep.mubr.bf16.mxu0 %v3691
        %4437 = vmatmul.mubr.bf16.gmra.mrb[0].mxu0 %v3690
        %v4438 = vpop.f32.mrb[0].mxu0
        %v4439 = vadd.f32 0.0, %v4438
        %v4440 = vpop.f32.mrb[0].mxu0
        %v4441 = vpop.f32.mrb[0].mxu0
        %v4442 = vadd.f32 0.0, %v4441
        %v4443 = vpop.f32.mrb[0].mxu0
        %4444 = vmatprep.mubr.bf16.mxu0 %v3700
        %4445 = vmatmul.mubr.bf16.gmra.mrb[0].mxu0 %v3699
        %v4446 = vpop.f32.mrb[0].mxu0
        %v4447 = vadd.f32 0.0, %v4446
        %v4448 = vpop.f32.mrb[0].mxu0
        %v4449 = vpop.f32.mrb[0].mxu0
        %v4450 = vadd.f32 0.0, %v4449
        %v4451 = vpop.f32.mrb[0].mxu0
        %4452 = vmatprep.mubr.bf16.mxu0 %v3709
        %4453 = vmatmul.mubr.bf16.gmra.mrb[0].mxu0 %v3708
        %v4454 = vpop.f32.mrb[0].mxu0
        %v4455 = vadd.f32 0.0, %v4454
        %v4456 = vpop.f32.mrb[0].mxu0
        %v4457 = vpop.f32.mrb[0].mxu0
        %v4458 = vadd.f32 0.0, %v4457
        %v4459 = vpop.f32.mrb[0].mxu0
        %4460 = vmatprep.mubr.bf16.mxu0 %v3718
        %4461 = vmatmul.mubr.bf16.gmra.mrb[0].mxu0 %v3717
        %v4462 = vpop.f32.mrb[0].mxu0
        %v4463 = vadd.f32 0.0, %v4462
        %v4464 = vpop.f32.mrb[0].mxu0
        %v4465 = vpop.f32.mrb[0].mxu0
        %v4466 = vadd.f32 0.0, %v4465
        %v4467 = vpop.f32.mrb[0].mxu0
        %4468 = vmatprep.mubr.bf16.mxu0 %v3727
        %4469 = vmatmul.mubr.bf16.gmra.mrb[0].mxu0 %v3726
        %v4470 = vpop.f32.mrb[0].mxu0
        %v4471 = vadd.f32 0.0, %v4470
        %v4472 = vpop.f32.mrb[0].mxu0
        %v4473 = vpop.f32.mrb[0].mxu0
        %v4474 = vadd.f32 0.0, %v4473
        %v4475 = vpop.f32.mrb[0].mxu0
        %4476 = vmatprep.mubr.bf16.mxu0 %v3736
        %4477 = vmatmul.mubr.bf16.gmra.mrb[0].mxu0 %v3735
        %v4478 = vpop.f32.mrb[0].mxu0
        %v4479 = vadd.f32 0.0, %v4478
        %v4480 = vpop.f32.mrb[0].mxu0
        %v4481 = vpop.f32.mrb[0].mxu0
        %v4482 = vadd.f32 0.0, %v4481
        %v4483 = vpop.f32.mrb[0].mxu0
        %4484 = vmatprep.mubr.bf16.mxu0 %v3745
        %4485 = vmatmul.mubr.bf16.gmra.mrb[0].mxu0 %v3744
        %v4486 = vpop.f32.mrb[0].mxu0
        %v4487 = vadd.f32 0.0, %v4486
        %v4488 = vpop.f32.mrb[0].mxu0
        %v4489 = vpop.f32.mrb[0].mxu0
        %v4490 = vadd.f32 0.0, %v4489
        %v4491 = vpop.f32.mrb[0].mxu0
        %4492 = vmatprep.mubr.bf16.mxu0 %v3754
        %4493 = vmatmul.mubr.bf16.gmra.mrb[0].mxu0 %v3753
        %v4494 = vpop.f32.mrb[0].mxu0
        %v4495 = vadd.f32 0.0, %v4494
        %v4496 = vpop.f32.mrb[0].mxu0
        %v4497 = vpop.f32.mrb[0].mxu0
        %v4498 = vadd.f32 0.0, %v4497
        %v4499 = vpop.f32.mrb[0].mxu0
        %4500 = vmatprep.mubr.bf16.mxu0 %v3763
        %4501 = vmatmul.mubr.bf16.gmra.mrb[0].mxu0 %v3762
        %v4502 = vpop.f32.mrb[0].mxu0
        %v4503 = vadd.f32 0.0, %v4502
        %v4504 = vpop.f32.mrb[0].mxu0
        %v4505 = vpop.f32.mrb[0].mxu0
        %v4506 = vadd.f32 0.0, %v4505
        %v4507 = vpop.f32.mrb[0].mxu0
        %4508 = vmatprep.mubr.bf16.mxu0 %v3772
        %4509 = vmatmul.mubr.bf16.gmra.mrb[0].mxu0 %v3771
        %v4510 = vpop.f32.mrb[0].mxu0
        %v4511 = vadd.f32 0.0, %v4510
        %v4512 = vpop.f32.mrb[0].mxu0
        %v4513 = vpop.f32.mrb[0].mxu0
        %v4514 = vadd.f32 0.0, %v4513
        %v4515 = vpop.f32.mrb[0].mxu0
        %4516 = vdwg.mxu0
        %4517 = vmatprep.subr.bf16.mxu0 0
        %4518 = vmatpush1.bf16.msra.mxu0 %v4228
        %4519 = vmatprep.subr.bf16.mxu0 0
        %4520 = vmatpush1.bf16.msra.mxu0 %v4229
        %4521 = vmatprep.subr.bf16.mxu0 0
        %4522 = vmatpush1.bf16.msra.mxu0 %v4230
        %4523 = vmatprep.subr.bf16.mxu0 0
        %4524 = vmatpush1.bf16.msra.mxu0 %v4231
        %4525 = vmatprep.subr.bf16.mxu0 0
        %4526 = vmatpush1.bf16.msra.mxu0 %v4232
        %4527 = vmatprep.subr.bf16.mxu0 0
        %4528 = vmatpush1.bf16.msra.mxu0 %v4233
        %4529 = vmatprep.subr.bf16.mxu0 0
        %4530 = vmatpush1.bf16.msra.mxu0 %v4234
        %4531 = vmatprep.subr.bf16.mxu0 0
        %4532 = vmatpush1.bf16.msra.mxu0 %v4235
        %4533 = vmatprep.subr.bf16.mxu0 0
        %4534 = vmatpush1.bf16.msra.mxu0 %v4236
        %4535 = vmatprep.subr.bf16.mxu0 0
        %4536 = vmatpush1.bf16.msra.mxu0 %v4237
        %4537 = vmatprep.subr.bf16.mxu0 0
        %4538 = vmatpush1.bf16.msra.mxu0 %v4238
        %4539 = vmatprep.subr.bf16.mxu0 0
        %4540 = vmatpush1.bf16.msra.mxu0 %v4239
        %4541 = vmatprep.subr.bf16.mxu0 0
        %4542 = vmatpush1.bf16.msra.mxu0 %v4240
        %4543 = vmatprep.subr.bf16.mxu0 0
        %4544 = vmatpush1.bf16.msra.mxu0 %v4241
        %4545 = vmatprep.subr.bf16.mxu0 0
        %4546 = vmatpush1.bf16.msra.mxu0 %v4242
        %4547 = vmatprep.subr.bf16.mxu0 0
        %4548 = vmatpush1.bf16.msra.mxu0 %v4243
        %4549 = vmatprep.mubr.bf16.mxu0 %v3639
        %4550 = vmatmul.mubr.bf16.gmra.mrb[0].mxu0 %v3638
        %v4551 = vpop.f32.mrb[0].mxu0
        %v4552 = vadd.f32 %v4391, %v4551
        %v4553 = vpop.f32.mrb[0].mxu0
        %v4554 = vpop.f32.mrb[0].mxu0
        %v4555 = vadd.f32 %v4394, %v4554
        %v4556 = vpop.f32.mrb[0].mxu0
        %4557 = vmatprep.mubr.bf16.mxu0 %v3648
        %4558 = vmatmul.mubr.bf16.gmra.mrb[0].mxu0 %v3647
        %v4559 = vpop.f32.mrb[0].mxu0
        %v4560 = vadd.f32 %v4399, %v4559
        %v4561 = vpop.f32.mrb[0].mxu0
        %v4562 = vpop.f32.mrb[0].mxu0
        %v4563 = vadd.f32 %v4402, %v4562
        %v4564 = vpop.f32.mrb[0].mxu0
        %4565 = vmatprep.mubr.bf16.mxu0 %v3657
        %4566 = vmatmul.mubr.bf16.gmra.mrb[0].mxu0 %v3656
        %v4567 = vpop.f32.mrb[0].mxu0
        %v4568 = vadd.f32 %v4407, %v4567
        %v4569 = vpop.f32.mrb[0].mxu0
        %v4570 = vpop.f32.mrb[0].mxu0
        %v4571 = vadd.f32 %v4410, %v4570
        %v4572 = vpop.f32.mrb[0].mxu0
        %4573 = vmatprep.mubr.bf16.mxu0 %v3666
        %4574 = vmatmul.mubr.bf16.gmra.mrb[0].mxu0 %v3665
        %v4575 = vpop.f32.mrb[0].mxu0
        %v4576 = vadd.f32 %v4415, %v4575
        %v4577 = vpop.f32.mrb[0].mxu0
        %v4578 = vpop.f32.mrb[0].mxu0
        %v4579 = vadd.f32 %v4418, %v4578
        %v4580 = vpop.f32.mrb[0].mxu0
        %4581 = vmatprep.mubr.bf16.mxu0 %v3675
        %4582 = vmatmul.mubr.bf16.gmra.mrb[0].mxu0 %v3674
        %v4583 = vpop.f32.mrb[0].mxu0
        %v4584 = vadd.f32 %v4423, %v4583
        %v4585 = vpop.f32.mrb[0].mxu0
        %v4586 = vpop.f32.mrb[0].mxu0
        %v4587 = vadd.f32 %v4426, %v4586
        %v4588 = vpop.f32.mrb[0].mxu0
        %4589 = vmatprep.mubr.bf16.mxu0 %v3684
        %4590 = vmatmul.mubr.bf16.gmra.mrb[0].mxu0 %v3683
        %v4591 = vpop.f32.mrb[0].mxu0
        %v4592 = vadd.f32 %v4431, %v4591
        %v4593 = vpop.f32.mrb[0].mxu0
        %v4594 = vpop.f32.mrb[0].mxu0
        %v4595 = vadd.f32 %v4434, %v4594
        %v4596 = vpop.f32.mrb[0].mxu0
        %4597 = vmatprep.mubr.bf16.mxu0 %v3693
        %4598 = vmatmul.mubr.bf16.gmra.mrb[0].mxu0 %v3692
        %v4599 = vpop.f32.mrb[0].mxu0
        %v4600 = vadd.f32 %v4439, %v4599
        %v4601 = vpop.f32.mrb[0].mxu0
        %v4602 = vpop.f32.mrb[0].mxu0
        %v4603 = vadd.f32 %v4442, %v4602
        %v4604 = vpop.f32.mrb[0].mxu0
        %4605 = vmatprep.mubr.bf16.mxu0 %v3702
        %4606 = vmatmul.mubr.bf16.gmra.mrb[0].mxu0 %v3701
        %v4607 = vpop.f32.mrb[0].mxu0
        %v4608 = vadd.f32 %v4447, %v4607
        %v4609 = vpop.f32.mrb[0].mxu0
        %v4610 = vpop.f32.mrb[0].mxu0
        %v4611 = vadd.f32 %v4450, %v4610
        %v4612 = vpop.f32.mrb[0].mxu0
        %4613 = vmatprep.mubr.bf16.mxu0 %v3711
        %4614 = vmatmul.mubr.bf16.gmra.mrb[0].mxu0 %v3710
        %v4615 = vpop.f32.mrb[0].mxu0
        %v4616 = vadd.f32 %v4455, %v4615
        %v4617 = vpop.f32.mrb[0].mxu0
        %v4618 = vpop.f32.mrb[0].mxu0
        %v4619 = vadd.f32 %v4458, %v4618
        %v4620 = vpop.f32.mrb[0].mxu0
        %4621 = vmatprep.mubr.bf16.mxu0 %v3720
        %4622 = vmatmul.mubr.bf16.gmra.mrb[0].mxu0 %v3719
        %v4623 = vpop.f32.mrb[0].mxu0
        %v4624 = vadd.f32 %v4463, %v4623
        %v4625 = vpop.f32.mrb[0].mxu0
        %v4626 = vpop.f32.mrb[0].mxu0
        %v4627 = vadd.f32 %v4466, %v4626
        %v4628 = vpop.f32.mrb[0].mxu0
        %4629 = vmatprep.mubr.bf16.mxu0 %v3729
        %4630 = vmatmul.mubr.bf16.gmra.mrb[0].mxu0 %v3728
        %v4631 = vpop.f32.mrb[0].mxu0
        %v4632 = vadd.f32 %v4471, %v4631
        %v4633 = vpop.f32.mrb[0].mxu0
        %v4634 = vpop.f32.mrb[0].mxu0
        %v4635 = vadd.f32 %v4474, %v4634
        %v4636 = vpop.f32.mrb[0].mxu0
        %4637 = vmatprep.mubr.bf16.mxu0 %v3738
        %4638 = vmatmul.mubr.bf16.gmra.mrb[0].mxu0 %v3737
        %v4639 = vpop.f32.mrb[0].mxu0
        %v4640 = vadd.f32 %v4479, %v4639
        %v4641 = vpop.f32.mrb[0].mxu0
        %v4642 = vpop.f32.mrb[0].mxu0
        %v4643 = vadd.f32 %v4482, %v4642
        %v4644 = vpop.f32.mrb[0].mxu0
        %4645 = vmatprep.mubr.bf16.mxu0 %v3747
        %4646 = vmatmul.mubr.bf16.gmra.mrb[0].mxu0 %v3746
        %v4647 = vpop.f32.mrb[0].mxu0
        %v4648 = vadd.f32 %v4487, %v4647
        %v4649 = vpop.f32.mrb[0].mxu0
        %v4650 = vpop.f32.mrb[0].mxu0
        %v4651 = vadd.f32 %v4490, %v4650
        %v4652 = vpop.f32.mrb[0].mxu0
        %4653 = vmatprep.mubr.bf16.mxu0 %v3756
        %4654 = vmatmul.mubr.bf16.gmra.mrb[0].mxu0 %v3755
        %v4655 = vpop.f32.mrb[0].mxu0
        %v4656 = vadd.f32 %v4495, %v4655
        %v4657 = vpop.f32.mrb[0].mxu0
        %v4658 = vpop.f32.mrb[0].mxu0
        %v4659 = vadd.f32 %v4498, %v4658
        %v4660 = vpop.f32.mrb[0].mxu0
        %4661 = vmatprep.mubr.bf16.mxu0 %v3765
        %4662 = vmatmul.mubr.bf16.gmra.mrb[0].mxu0 %v3764
        %v4663 = vpop.f32.mrb[0].mxu0
        %v4664 = vadd.f32 %v4503, %v4663
        %v4665 = vpop.f32.mrb[0].mxu0
        %v4666 = vpop.f32.mrb[0].mxu0
        %v4667 = vadd.f32 %v4506, %v4666
        %v4668 = vpop.f32.mrb[0].mxu0
        %4669 = vmatprep.mubr.bf16.mxu0 %v3774
        %4670 = vmatmul.mubr.bf16.gmra.mrb[0].mxu0 %v3773
        %v4671 = vpop.f32.mrb[0].mxu0
        %v4672 = vadd.f32 %v4511, %v4671
        %v4673 = vpop.f32.mrb[0].mxu0
        %v4674 = vpop.f32.mrb[0].mxu0
        %v4675 = vadd.f32 %v4514, %v4674
        %v4676 = vpop.f32.mrb[0].mxu0
        %4677 = vdwg.mxu0
        %4678 = vmatprep.subr.bf16.mxu0 0
        %4679 = vmatpush1.bf16.msra.mxu0 %v4244
        %4680 = vmatprep.subr.bf16.mxu0 0
        %4681 = vmatpush1.bf16.msra.mxu0 %v4245
        %4682 = vmatprep.subr.bf16.mxu0 0
        %4683 = vmatpush1.bf16.msra.mxu0 %v4246
        %4684 = vmatprep.subr.bf16.mxu0 0
        %4685 = vmatpush1.bf16.msra.mxu0 %v4247
        %4686 = vmatprep.subr.bf16.mxu0 0
        %4687 = vmatpush1.bf16.msra.mxu0 %v4248
        %4688 = vmatprep.subr.bf16.mxu0 0
        %4689 = vmatpush1.bf16.msra.mxu0 %v4249
        %4690 = vmatprep.subr.bf16.mxu0 0
        %4691 = vmatpush1.bf16.msra.mxu0 %v4250
        %4692 = vmatprep.subr.bf16.mxu0 0
        %4693 = vmatpush1.bf16.msra.mxu0 %v4251
        %4694 = vmatprep.subr.bf16.mxu0 0
        %4695 = vmatpush1.bf16.msra.mxu0 %v4252
        %4696 = vmatprep.subr.bf16.mxu0 0
        %4697 = vmatpush1.bf16.msra.mxu0 %v4253
        %4698 = vmatprep.subr.bf16.mxu0 0
        %4699 = vmatpush1.bf16.msra.mxu0 %v4254
        %4700 = vmatprep.subr.bf16.mxu0 0
        %4701 = vmatpush1.bf16.msra.mxu0 %v4255
        %4702 = vmatprep.subr.bf16.mxu0 0
        %4703 = vmatpush1.bf16.msra.mxu0 %v4256
        %4704 = vmatprep.subr.bf16.mxu0 0
        %4705 = vmatpush1.bf16.msra.mxu0 %v4257
        %4706 = vmatprep.subr.bf16.mxu0 0
        %4707 = vmatpush1.bf16.msra.mxu0 %v4258
        %4708 = vmatprep.subr.bf16.mxu0 0
        %4709 = vmatpush1.bf16.msra.mxu0 %v4259
        %4710 = vmatprep.mubr.bf16.mxu0 %v3641
        %4711 = vmatmul.mubr.bf16.gmra.mrb[0].mxu0 %v3640
        %v4712 = vpop.f32.mrb[0].mxu0
        %v4713 = vadd.f32 %v4552, %v4712
        %v4714 = vpop.f32.mrb[0].mxu0
        %v4715 = vpop.f32.mrb[0].mxu0
        %v4716 = vadd.f32 %v4555, %v4715
        %v4717 = vpop.f32.mrb[0].mxu0
        %4718 = vmatprep.mubr.bf16.mxu0 %v3650
        %4719 = vmatmul.mubr.bf16.gmra.mrb[0].mxu0 %v3649
        %v4720 = vpop.f32.mrb[0].mxu0
        %v4721 = vadd.f32 %v4560, %v4720
        %v4722 = vpop.f32.mrb[0].mxu0
        %v4723 = vpop.f32.mrb[0].mxu0
        %v4724 = vadd.f32 %v4563, %v4723
        %v4725 = vpop.f32.mrb[0].mxu0
        %4726 = vmatprep.mubr.bf16.mxu0 %v3659
        %4727 = vmatmul.mubr.bf16.gmra.mrb[0].mxu0 %v3658
        %v4728 = vpop.f32.mrb[0].mxu0
        %v4729 = vadd.f32 %v4568, %v4728
        %v4730 = vpop.f32.mrb[0].mxu0
        %v4731 = vpop.f32.mrb[0].mxu0
        %v4732 = vadd.f32 %v4571, %v4731
        %v4733 = vpop.f32.mrb[0].mxu0
        %4734 = vmatprep.mubr.bf16.mxu0 %v3668
        %4735 = vmatmul.mubr.bf16.gmra.mrb[0].mxu0 %v3667
        %v4736 = vpop.f32.mrb[0].mxu0
        %v4737 = vadd.f32 %v4576, %v4736
        %v4738 = vpop.f32.mrb[0].mxu0
        %v4739 = vpop.f32.mrb[0].mxu0
        %v4740 = vadd.f32 %v4579, %v4739
        %v4741 = vpop.f32.mrb[0].mxu0
        %4742 = vmatprep.mubr.bf16.mxu0 %v3677
        %4743 = vmatmul.mubr.bf16.gmra.mrb[0].mxu0 %v3676
        %v4744 = vpop.f32.mrb[0].mxu0
        %v4745 = vadd.f32 %v4584, %v4744
        %v4746 = vpop.f32.mrb[0].mxu0
        %v4747 = vpop.f32.mrb[0].mxu0
        %v4748 = vadd.f32 %v4587, %v4747
        %v4749 = vpop.f32.mrb[0].mxu0
        %4750 = vmatprep.mubr.bf16.mxu0 %v3686
        %4751 = vmatmul.mubr.bf16.gmra.mrb[0].mxu0 %v3685
        %v4752 = vpop.f32.mrb[0].mxu0
        %v4753 = vadd.f32 %v4592, %v4752
        %v4754 = vpop.f32.mrb[0].mxu0
        %v4755 = vpop.f32.mrb[0].mxu0
        %v4756 = vadd.f32 %v4595, %v4755
        %v4757 = vpop.f32.mrb[0].mxu0
        %4758 = vmatprep.mubr.bf16.mxu0 %v3695
        %4759 = vmatmul.mubr.bf16.gmra.mrb[0].mxu0 %v3694
        %v4760 = vpop.f32.mrb[0].mxu0
        %v4761 = vadd.f32 %v4600, %v4760
        %v4762 = vpop.f32.mrb[0].mxu0
        %v4763 = vpop.f32.mrb[0].mxu0
        %v4764 = vadd.f32 %v4603, %v4763
        %v4765 = vpop.f32.mrb[0].mxu0
        %4766 = vmatprep.mubr.bf16.mxu0 %v3704
        %4767 = vmatmul.mubr.bf16.gmra.mrb[0].mxu0 %v3703
        %v4768 = vpop.f32.mrb[0].mxu0
        %v4769 = vadd.f32 %v4608, %v4768
        %v4770 = vpop.f32.mrb[0].mxu0
        %v4771 = vpop.f32.mrb[0].mxu0
        %v4772 = vadd.f32 %v4611, %v4771
        %v4773 = vpop.f32.mrb[0].mxu0
        %4774 = vmatprep.mubr.bf16.mxu0 %v3713
        %4775 = vmatmul.mubr.bf16.gmra.mrb[0].mxu0 %v3712
        %v4776 = vpop.f32.mrb[0].mxu0
        %v4777 = vadd.f32 %v4616, %v4776
        %v4778 = vpop.f32.mrb[0].mxu0
        %v4779 = vpop.f32.mrb[0].mxu0
        %v4780 = vadd.f32 %v4619, %v4779
        %v4781 = vpop.f32.mrb[0].mxu0
        %4782 = vmatprep.mubr.bf16.mxu0 %v3722
        %4783 = vmatmul.mubr.bf16.gmra.mrb[0].mxu0 %v3721
        %v4784 = vpop.f32.mrb[0].mxu0
        %v4785 = vadd.f32 %v4624, %v4784
        %v4786 = vpop.f32.mrb[0].mxu0
        %v4787 = vpop.f32.mrb[0].mxu0
        %v4788 = vadd.f32 %v4627, %v4787
        %v4789 = vpop.f32.mrb[0].mxu0
        %4790 = vmatprep.mubr.bf16.mxu0 %v3731
        %4791 = vmatmul.mubr.bf16.gmra.mrb[0].mxu0 %v3730
        %v4792 = vpop.f32.mrb[0].mxu0
        %v4793 = vadd.f32 %v4632, %v4792
        %v4794 = vpop.f32.mrb[0].mxu0
        %v4795 = vpop.f32.mrb[0].mxu0
        %v4796 = vadd.f32 %v4635, %v4795
        %v4797 = vpop.f32.mrb[0].mxu0
        %4798 = vmatprep.mubr.bf16.mxu0 %v3740
        %4799 = vmatmul.mubr.bf16.gmra.mrb[0].mxu0 %v3739
        %v4800 = vpop.f32.mrb[0].mxu0
        %v4801 = vadd.f32 %v4640, %v4800
        %v4802 = vpop.f32.mrb[0].mxu0
        %v4803 = vpop.f32.mrb[0].mxu0
        %v4804 = vadd.f32 %v4643, %v4803
        %v4805 = vpop.f32.mrb[0].mxu0
        %4806 = vmatprep.mubr.bf16.mxu0 %v3749
        %4807 = vmatmul.mubr.bf16.gmra.mrb[0].mxu0 %v3748
        %v4808 = vpop.f32.mrb[0].mxu0
        %v4809 = vadd.f32 %v4648, %v4808
        %v4810 = vpop.f32.mrb[0].mxu0
        %v4811 = vpop.f32.mrb[0].mxu0
        %v4812 = vadd.f32 %v4651, %v4811
        %v4813 = vpop.f32.mrb[0].mxu0
        %4814 = vmatprep.mubr.bf16.mxu0 %v3758
        %4815 = vmatmul.mubr.bf16.gmra.mrb[0].mxu0 %v3757
        %v4816 = vpop.f32.mrb[0].mxu0
        %v4817 = vadd.f32 %v4656, %v4816
        %v4818 = vpop.f32.mrb[0].mxu0
        %v4819 = vpop.f32.mrb[0].mxu0
        %v4820 = vadd.f32 %v4659, %v4819
        %v4821 = vpop.f32.mrb[0].mxu0
        %4822 = vmatprep.mubr.bf16.mxu0 %v3767
        %4823 = vmatmul.mubr.bf16.gmra.mrb[0].mxu0 %v3766
        %v4824 = vpop.f32.mrb[0].mxu0
        %v4825 = vadd.f32 %v4664, %v4824
        %v4826 = vpop.f32.mrb[0].mxu0
        %v4827 = vpop.f32.mrb[0].mxu0
        %v4828 = vadd.f32 %v4667, %v4827
        %v4829 = vpop.f32.mrb[0].mxu0
        %4830 = vmatprep.mubr.bf16.mxu0 %v3776
        %4831 = vmatmul.mubr.bf16.gmra.mrb[0].mxu0 %v3775
        %v4832 = vpop.f32.mrb[0].mxu0
        %v4833 = vadd.f32 %v4672, %v4832
        %v4834 = vpop.f32.mrb[0].mxu0
        %v4835 = vpop.f32.mrb[0].mxu0
        %v4836 = vadd.f32 %v4675, %v4835
        %v4837 = vpop.f32.mrb[0].mxu0
        %4838 = vdwg.mxu0
        %4839 = vmatprep.subr.bf16.mxu0 0
        %4840 = vmatpush1.bf16.msra.mxu0 %v4260
        %4841 = vmatprep.subr.bf16.mxu0 0
        %4842 = vmatpush1.bf16.msra.mxu0 %v4261
        %4843 = vmatprep.subr.bf16.mxu0 0
        %4844 = vmatpush1.bf16.msra.mxu0 %v4262
        %4845 = vmatprep.subr.bf16.mxu0 0
        %4846 = vmatpush1.bf16.msra.mxu0 %v4263
        %4847 = vmatprep.subr.bf16.mxu0 0
        %4848 = vmatpush1.bf16.msra.mxu0 %v4264
        %4849 = vmatprep.subr.bf16.mxu0 0
        %4850 = vmatpush1.bf16.msra.mxu0 %v4265
        %4851 = vmatprep.subr.bf16.mxu0 0
        %4852 = vmatpush1.bf16.msra.mxu0 %v4266
        %4853 = vmatprep.subr.bf16.mxu0 0
        %4854 = vmatpush1.bf16.msra.mxu0 %v4267
        %4855 = vmatprep.subr.bf16.mxu0 0
        %4856 = vmatpush1.bf16.msra.mxu0 %v4268
        %4857 = vmatprep.subr.bf16.mxu0 0
        %4858 = vmatpush1.bf16.msra.mxu0 %v4269
        %4859 = vmatprep.subr.bf16.mxu0 0
        %4860 = vmatpush1.bf16.msra.mxu0 %v4270
        %4861 = vmatprep.subr.bf16.mxu0 0
        %4862 = vmatpush1.bf16.msra.mxu0 %v4271
        %4863 = vmatprep.subr.bf16.mxu0 0
        %4864 = vmatpush1.bf16.msra.mxu0 %v4272
        %4865 = vmatprep.subr.bf16.mxu0 0
        %4866 = vmatpush1.bf16.msra.mxu0 %v4273
        %4867 = vmatprep.subr.bf16.mxu0 0
        %4868 = vmatpush1.bf16.msra.mxu0 %v4274
        %4869 = vmatprep.subr.bf16.mxu0 0
        %4870 = vmatpush1.bf16.msra.mxu0 %v4275
        %4871 = vmatprep.mubr.bf16.mxu0 %v3643
        %4872 = vmatmul.mubr.bf16.gmra.mrb[0].mxu0 %v3642
        %v4873 = vpop.f32.mrb[0].mxu0
        %v4874 = vadd.f32 %v4713, %v4873
        %v4875 = vpop.f32.mrb[0].mxu0
        %v4876 = vpop.f32.mrb[0].mxu0
        %v4877 = vadd.f32 %v4716, %v4876
        %v4878 = vpop.f32.mrb[0].mxu0
        %4879 = vmatprep.mubr.bf16.mxu0 %v3652
        %4880 = vmatmul.mubr.bf16.gmra.mrb[0].mxu0 %v3651
        %v4881 = vpop.f32.mrb[0].mxu0
        %v4882 = vadd.f32 %v4721, %v4881
        %v4883 = vpop.f32.mrb[0].mxu0
        %v4884 = vpop.f32.mrb[0].mxu0
        %v4885 = vadd.f32 %v4724, %v4884
        %v4886 = vpop.f32.mrb[0].mxu0
        %4887 = vmatprep.mubr.bf16.mxu0 %v3661
        %4888 = vmatmul.mubr.bf16.gmra.mrb[0].mxu0 %v3660
        %v4889 = vpop.f32.mrb[0].mxu0
        %v4890 = vadd.f32 %v4729, %v4889
        %v4891 = vpop.f32.mrb[0].mxu0
        %v4892 = vpop.f32.mrb[0].mxu0
        %v4893 = vadd.f32 %v4732, %v4892
        %v4894 = vpop.f32.mrb[0].mxu0
        %4895 = vmatprep.mubr.bf16.mxu0 %v3670
        %4896 = vmatmul.mubr.bf16.gmra.mrb[0].mxu0 %v3669
        %v4897 = vpop.f32.mrb[0].mxu0
        %v4898 = vadd.f32 %v4737, %v4897
        %v4899 = vpop.f32.mrb[0].mxu0
        %v4900 = vpop.f32.mrb[0].mxu0
        %v4901 = vadd.f32 %v4740, %v4900
        %v4902 = vpop.f32.mrb[0].mxu0
        %4903 = vmatprep.mubr.bf16.mxu0 %v3679
        %4904 = vmatmul.mubr.bf16.gmra.mrb[0].mxu0 %v3678
        %v4905 = vpop.f32.mrb[0].mxu0
        %v4906 = vadd.f32 %v4745, %v4905
        %v4907 = vpop.f32.mrb[0].mxu0
        %v4908 = vpop.f32.mrb[0].mxu0
        %v4909 = vadd.f32 %v4748, %v4908
        %v4910 = vpop.f32.mrb[0].mxu0
        %4911 = vmatprep.mubr.bf16.mxu0 %v3688
        %4912 = vmatmul.mubr.bf16.gmra.mrb[0].mxu0 %v3687
        %v4913 = vpop.f32.mrb[0].mxu0
        %v4914 = vadd.f32 %v4753, %v4913
        %v4915 = vpop.f32.mrb[0].mxu0
        %v4916 = vpop.f32.mrb[0].mxu0
        %v4917 = vadd.f32 %v4756, %v4916
        %v4918 = vpop.f32.mrb[0].mxu0
        %4919 = vmatprep.mubr.bf16.mxu0 %v3697
        %4920 = vmatmul.mubr.bf16.gmra.mrb[0].mxu0 %v3696
        %v4921 = vpop.f32.mrb[0].mxu0
        %v4922 = vadd.f32 %v4761, %v4921
        %v4923 = vpop.f32.mrb[0].mxu0
        %v4924 = vpop.f32.mrb[0].mxu0
        %v4925 = vadd.f32 %v4764, %v4924
        %v4926 = vpop.f32.mrb[0].mxu0
        %4927 = vmatprep.mubr.bf16.mxu0 %v3706
        %4928 = vmatmul.mubr.bf16.gmra.mrb[0].mxu0 %v3705
        %v4929 = vpop.f32.mrb[0].mxu0
        %v4930 = vadd.f32 %v4769, %v4929
        %v4931 = vpop.f32.mrb[0].mxu0
        %v4932 = vpop.f32.mrb[0].mxu0
        %v4933 = vadd.f32 %v4772, %v4932
        %v4934 = vpop.f32.mrb[0].mxu0
        %4935 = vmatprep.mubr.bf16.mxu0 %v3715
        %4936 = vmatmul.mubr.bf16.gmra.mrb[0].mxu0 %v3714
        %v4937 = vpop.f32.mrb[0].mxu0
        %v4938 = vadd.f32 %v4777, %v4937
        %v4939 = vpop.f32.mrb[0].mxu0
        %v4940 = vpop.f32.mrb[0].mxu0
        %v4941 = vadd.f32 %v4780, %v4940
        %v4942 = vpop.f32.mrb[0].mxu0
        %4943 = vmatprep.mubr.bf16.mxu0 %v3724
        %4944 = vmatmul.mubr.bf16.gmra.mrb[0].mxu0 %v3723
        %v4945 = vpop.f32.mrb[0].mxu0
        %v4946 = vadd.f32 %v4785, %v4945
        %v4947 = vpop.f32.mrb[0].mxu0
        %v4948 = vpop.f32.mrb[0].mxu0
        %v4949 = vadd.f32 %v4788, %v4948
        %v4950 = vpop.f32.mrb[0].mxu0
        %4951 = vmatprep.mubr.bf16.mxu0 %v3733
        %4952 = vmatmul.mubr.bf16.gmra.mrb[0].mxu0 %v3732
        %v4953 = vpop.f32.mrb[0].mxu0
        %v4954 = vadd.f32 %v4793, %v4953
        %v4955 = vpop.f32.mrb[0].mxu0
        %v4956 = vpop.f32.mrb[0].mxu0
        %v4957 = vadd.f32 %v4796, %v4956
        %v4958 = vpop.f32.mrb[0].mxu0
        %4959 = vmatprep.mubr.bf16.mxu0 %v3742
        %4960 = vmatmul.mubr.bf16.gmra.mrb[0].mxu0 %v3741
        %v4961 = vpop.f32.mrb[0].mxu0
        %v4962 = vadd.f32 %v4801, %v4961
        %v4963 = vpop.f32.mrb[0].mxu0
        %v4964 = vpop.f32.mrb[0].mxu0
        %v4965 = vadd.f32 %v4804, %v4964
        %v4966 = vpop.f32.mrb[0].mxu0
        %4967 = vmatprep.mubr.bf16.mxu0 %v3751
        %4968 = vmatmul.mubr.bf16.gmra.mrb[0].mxu0 %v3750
        %v4969 = vpop.f32.mrb[0].mxu0
        %v4970 = vadd.f32 %v4809, %v4969
        %v4971 = vpop.f32.mrb[0].mxu0
        %v4972 = vpop.f32.mrb[0].mxu0
        %v4973 = vadd.f32 %v4812, %v4972
        %v4974 = vpop.f32.mrb[0].mxu0
        %4975 = vmatprep.mubr.bf16.mxu0 %v3760
        %4976 = vmatmul.mubr.bf16.gmra.mrb[0].mxu0 %v3759
        %v4977 = vpop.f32.mrb[0].mxu0
        %v4978 = vadd.f32 %v4817, %v4977
        %v4979 = vpop.f32.mrb[0].mxu0
        %v4980 = vpop.f32.mrb[0].mxu0
        %v4981 = vadd.f32 %v4820, %v4980
        %v4982 = vpop.f32.mrb[0].mxu0
        %4983 = vmatprep.mubr.bf16.mxu0 %v3769
        %4984 = vmatmul.mubr.bf16.gmra.mrb[0].mxu0 %v3768
        %v4985 = vpop.f32.mrb[0].mxu0
        %v4986 = vadd.f32 %v4825, %v4985
        %v4987 = vpop.f32.mrb[0].mxu0
        %v4988 = vpop.f32.mrb[0].mxu0
        %v4989 = vadd.f32 %v4828, %v4988
        %v4990 = vpop.f32.mrb[0].mxu0
        %4991 = vmatprep.mubr.bf16.mxu0 %v3778
        %4992 = vmatmul.mubr.bf16.gmra.mrb[0].mxu0 %v3777
        %v4993 = vpop.f32.mrb[0].mxu0
        %v4994 = vadd.f32 %v4833, %v4993
        %v4995 = vpop.f32.mrb[0].mxu0
        %v4996 = vpop.f32.mrb[0].mxu0
        %v4997 = vadd.f32 %v4836, %v4996
        %v4998 = vpop.f32.mrb[0].mxu0
        %4999 = vdwg.mxu0
        %5000 = vmatprep.subr.bf16.mxu0 0
        %5001 = vmatpush1.bf16.msra.mxu0 %v4276
        %5002 = vmatprep.subr.bf16.mxu0 0
        %5003 = vmatpush1.bf16.msra.mxu0 %v4277
        %5004 = vmatprep.subr.bf16.mxu0 0
        %5005 = vmatpush1.bf16.msra.mxu0 %v4278
        %5006 = vmatprep.subr.bf16.mxu0 0
        %5007 = vmatpush1.bf16.msra.mxu0 %v4279
        %5008 = vmatprep.subr.bf16.mxu0 0
        %5009 = vmatpush1.bf16.msra.mxu0 %v4280
        %5010 = vmatprep.subr.bf16.mxu0 0
        %5011 = vmatpush1.bf16.msra.mxu0 %v4281
        %5012 = vmatprep.subr.bf16.mxu0 0
        %5013 = vmatpush1.bf16.msra.mxu0 %v4282
        %5014 = vmatprep.subr.bf16.mxu0 0
        %5015 = vmatpush1.bf16.msra.mxu0 %v4283
        %5016 = vmatprep.subr.bf16.mxu0 0
        %5017 = vmatpush1.bf16.msra.mxu0 0
        %5018 = vmatprep.subr.bf16.mxu0 0
        %5019 = vmatpush1.bf16.msra.mxu0 0
        %5020 = vmatprep.subr.bf16.mxu0 0
        %5021 = vmatpush1.bf16.msra.mxu0 0
        %5022 = vmatprep.subr.bf16.mxu0 0
        %5023 = vmatpush1.bf16.msra.mxu0 0
        %5024 = vmatprep.subr.bf16.mxu0 0
        %5025 = vmatpush1.bf16.msra.mxu0 0
        %5026 = vmatprep.subr.bf16.mxu0 0
        %5027 = vmatpush1.bf16.msra.mxu0 0
        %5028 = vmatprep.subr.bf16.mxu0 0
        %5029 = vmatpush1.bf16.msra.mxu0 0
        %5030 = vmatprep.subr.bf16.mxu0 0
        %5031 = vmatpush1.bf16.msra.mxu0 0
        %5032 = vmatprep.mubr.bf16.mxu0 0
        %5033 = vmatmul.mubr.bf16.gmra.mrb[0].mxu0 %v3644
        %v5034 = vpop.f32.mrb[0].mxu0
        %v5035 = vadd.f32 %v4874, %v5034
        %v5036 = vpop.f32.mrb[0].mxu0
        %v5037 = vpop.f32.mrb[0].mxu0
        %v5038 = vadd.f32 %v4877, %v5037
        %v5039 = vpop.f32.mrb[0].mxu0
        %5040 = vmatprep.mubr.bf16.mxu0 0
        %5041 = vmatmul.mubr.bf16.gmra.mrb[0].mxu0 %v3653
        %v5042 = vpop.f32.mrb[0].mxu0
        %v5043 = vadd.f32 %v4882, %v5042
        %v5044 = vpop.f32.mrb[0].mxu0
        %v5045 = vpop.f32.mrb[0].mxu0
        %v5046 = vadd.f32 %v4885, %v5045
        %v5047 = vpop.f32.mrb[0].mxu0
        %5048 = vmatprep.mubr.bf16.mxu0 0
        %5049 = vmatmul.mubr.bf16.gmra.mrb[0].mxu0 %v3662
        %v5050 = vpop.f32.mrb[0].mxu0
        %v5051 = vadd.f32 %v4890, %v5050
        %v5052 = vpop.f32.mrb[0].mxu0
        %v5053 = vpop.f32.mrb[0].mxu0
        %v5054 = vadd.f32 %v4893, %v5053
        %v5055 = vpop.f32.mrb[0].mxu0
        %5056 = vmatprep.mubr.bf16.mxu0 0
        %5057 = vmatmul.mubr.bf16.gmra.mrb[0].mxu0 %v3671
        %v5058 = vpop.f32.mrb[0].mxu0
        %v5059 = vadd.f32 %v4898, %v5058
        %v5060 = vpop.f32.mrb[0].mxu0
        %v5061 = vpop.f32.mrb[0].mxu0
        %v5062 = vadd.f32 %v4901, %v5061
        %v5063 = vpop.f32.mrb[0].mxu0
        %5064 = vmatprep.mubr.bf16.mxu0 0
        %5065 = vmatmul.mubr.bf16.gmra.mrb[0].mxu0 %v3680
        %v5066 = vpop.f32.mrb[0].mxu0
        %v5067 = vadd.f32 %v4906, %v5066
        %v5068 = vpop.f32.mrb[0].mxu0
        %v5069 = vpop.f32.mrb[0].mxu0
        %v5070 = vadd.f32 %v4909, %v5069
        %v5071 = vpop.f32.mrb[0].mxu0
        %5072 = vmatprep.mubr.bf16.mxu0 0
        %5073 = vmatmul.mubr.bf16.gmra.mrb[0].mxu0 %v3689
        %v5074 = vpop.f32.mrb[0].mxu0
        %v5075 = vadd.f32 %v4914, %v5074
        %v5076 = vpop.f32.mrb[0].mxu0
        %v5077 = vpop.f32.mrb[0].mxu0
        %v5078 = vadd.f32 %v4917, %v5077
        %v5079 = vpop.f32.mrb[0].mxu0
        %5080 = vmatprep.mubr.bf16.mxu0 0
        %5081 = vmatmul.mubr.bf16.gmra.mrb[0].mxu0 %v3698
        %v5082 = vpop.f32.mrb[0].mxu0
        %v5083 = vadd.f32 %v4922, %v5082
        %v5084 = vpop.f32.mrb[0].mxu0
        %v5085 = vpop.f32.mrb[0].mxu0
        %v5086 = vadd.f32 %v4925, %v5085
        %v5087 = vpop.f32.mrb[0].mxu0
        %5088 = vmatprep.mubr.bf16.mxu0 0
        %5089 = vmatmul.mubr.bf16.gmra.mrb[0].mxu0 %v3707
        %v5090 = vpop.f32.mrb[0].mxu0
        %v5091 = vadd.f32 %v4930, %v5090
        %v5092 = vpop.f32.mrb[0].mxu0
        %v5093 = vpop.f32.mrb[0].mxu0
        %v5094 = vadd.f32 %v4933, %v5093
        %v5095 = vpop.f32.mrb[0].mxu0
        %5096 = vmatprep.mubr.bf16.mxu0 0
        %5097 = vmatmul.mubr.bf16.gmra.mrb[0].mxu0 %v3716
        %v5098 = vpop.f32.mrb[0].mxu0
        %v5099 = vadd.f32 %v4938, %v5098
        %v5100 = vpop.f32.mrb[0].mxu0
        %v5101 = vpop.f32.mrb[0].mxu0
        %v5102 = vadd.f32 %v4941, %v5101
        %v5103 = vpop.f32.mrb[0].mxu0
        %5104 = vmatprep.mubr.bf16.mxu0 0
        %5105 = vmatmul.mubr.bf16.gmra.mrb[0].mxu0 %v3725
        %v5106 = vpop.f32.mrb[0].mxu0
        %v5107 = vadd.f32 %v4946, %v5106
        %v5108 = vpop.f32.mrb[0].mxu0
        %v5109 = vpop.f32.mrb[0].mxu0
        %v5110 = vadd.f32 %v4949, %v5109
        %v5111 = vpop.f32.mrb[0].mxu0
        %5112 = vmatprep.mubr.bf16.mxu0 0
        %5113 = vmatmul.mubr.bf16.gmra.mrb[0].mxu0 %v3734
        %v5114 = vpop.f32.mrb[0].mxu0
        %v5115 = vadd.f32 %v4954, %v5114
        %v5116 = vpop.f32.mrb[0].mxu0
        %v5117 = vpop.f32.mrb[0].mxu0
        %v5118 = vadd.f32 %v4957, %v5117
        %v5119 = vpop.f32.mrb[0].mxu0
        %5120 = vmatprep.mubr.bf16.mxu0 0
        %5121 = vmatmul.mubr.bf16.gmra.mrb[0].mxu0 %v3743
        %v5122 = vpop.f32.mrb[0].mxu0
        %v5123 = vadd.f32 %v4962, %v5122
        %v5124 = vpop.f32.mrb[0].mxu0
        %v5125 = vpop.f32.mrb[0].mxu0
        %v5126 = vadd.f32 %v4965, %v5125
        %v5127 = vpop.f32.mrb[0].mxu0
        %5128 = vmatprep.mubr.bf16.mxu0 0
        %5129 = vmatmul.mubr.bf16.gmra.mrb[0].mxu0 %v3752
        %v5130 = vpop.f32.mrb[0].mxu0
        %v5131 = vadd.f32 %v4970, %v5130
        %v5132 = vpop.f32.mrb[0].mxu0
        %v5133 = vpop.f32.mrb[0].mxu0
        %v5134 = vadd.f32 %v4973, %v5133
        %v5135 = vpop.f32.mrb[0].mxu0
        %5136 = vmatprep.mubr.bf16.mxu0 0
        %5137 = vmatmul.mubr.bf16.gmra.mrb[0].mxu0 %v3761
        %v5138 = vpop.f32.mrb[0].mxu0
        %v5139 = vadd.f32 %v4978, %v5138
        %v5140 = vpop.f32.mrb[0].mxu0
        %v5141 = vpop.f32.mrb[0].mxu0
        %v5142 = vadd.f32 %v4981, %v5141
        %v5143 = vpop.f32.mrb[0].mxu0
        %5144 = vmatprep.mubr.bf16.mxu0 0
        %5145 = vmatmul.mubr.bf16.gmra.mrb[0].mxu0 %v3770
        %v5146 = vpop.f32.mrb[0].mxu0
        %v5147 = vadd.f32 %v4986, %v5146
        %v5148 = vpop.f32.mrb[0].mxu0
        %v5149 = vpop.f32.mrb[0].mxu0
        %v5150 = vadd.f32 %v4989, %v5149
        %v5151 = vpop.f32.mrb[0].mxu0
        %5152 = vmatprep.mubr.bf16.mxu0 0
        %5153 = vmatmul.mubr.bf16.gmra.mrb[0].mxu0 %v3779
        %v5154 = vpop.f32.mrb[0].mxu0
        %v5155 = vadd.f32 %v4994, %v5154
        %v5156 = vpop.f32.mrb[0].mxu0
        %v5157 = vpop.f32.mrb[0].mxu0
        %v5158 = vadd.f32 %v4997, %v5157
        %v5159 = vpop.f32.mrb[0].mxu0
        %5160 = vdwg.mxu0
        %v5161 = vld [vmem:[%s5] sm:$0x1]
        %v5163 = vlaneseq
        %v5164 = vshrl.u32 %v5163, 7
        %v5165 = vsub.s32 0, %v5164
        %v5166 = vrot.slane %v5161, %v5165
        %v5168 = vmul.f32 %v5035, %v5166
        %v5169 = vmul.f32 %v5038, %v5166
        %v5170 = vmul.f32 %v5043, %v5166
        %v5171 = vmul.f32 %v5046, %v5166
        %v5172 = vmul.f32 %v5051, %v5166
        %v5173 = vmul.f32 %v5054, %v5166
        %v5174 = vmul.f32 %v5059, %v5166
        %v5175 = vmul.f32 %v5062, %v5166
        %v5176 = vmul.f32 %v5067, %v5166
        %v5177 = vmul.f32 %v5070, %v5166
        %v5178 = vmul.f32 %v5075, %v5166
        %v5179 = vmul.f32 %v5078, %v5166
        %v5180 = vmul.f32 %v5083, %v5166
        %v5181 = vmul.f32 %v5086, %v5166
        %v5182 = vmul.f32 %v5091, %v5166
        %v5183 = vmul.f32 %v5094, %v5166
        %v5184 = vmul.f32 %v5099, %v5166
        %v5185 = vmul.f32 %v5102, %v5166
        %v5186 = vmul.f32 %v5107, %v5166
        %v5187 = vmul.f32 %v5110, %v5166
        %v5188 = vmul.f32 %v5115, %v5166
        %v5189 = vmul.f32 %v5118, %v5166
        %v5190 = vmul.f32 %v5123, %v5166
        %v5191 = vmul.f32 %v5126, %v5166
        %v5192 = vmul.f32 %v5131, %v5166
        %v5193 = vmul.f32 %v5134, %v5166
        %v5194 = vmul.f32 %v5139, %v5166
        %v5195 = vmul.f32 %v5142, %v5166
        %v5196 = vmul.f32 %v5147, %v5166
        %v5197 = vmul.f32 %v5150, %v5166
        %v5198 = vmul.f32 %v5155, %v5166
        %v5199 = vmul.f32 %v5158, %v5166
        %v5200 = vld [vmem:[%s6] sm:$0x1]
        %v5202 = vlaneseq
        %v5203 = vshrl.u32 %v5202, 7
        %v5204 = vsub.s32 0, %v5203
        %v5205 = vrot.slane %v5200, %v5204
        %v5207 = vadd.f32 %v5168, %v5205
        %v5208 = vadd.f32 %v5169, %v5205
        %v5209 = vadd.f32 %v5170, %v5205
        %v5210 = vadd.f32 %v5171, %v5205
        %v5211 = vadd.f32 %v5172, %v5205
        %v5212 = vadd.f32 %v5173, %v5205
        %v5213 = vadd.f32 %v5174, %v5205
        %v5214 = vadd.f32 %v5175, %v5205
        %v5215 = vadd.f32 %v5176, %v5205
        %v5216 = vadd.f32 %v5177, %v5205
        %v5217 = vadd.f32 %v5178, %v5205
        %v5218 = vadd.f32 %v5179, %v5205
        %v5219 = vadd.f32 %v5180, %v5205
        %v5220 = vadd.f32 %v5181, %v5205
        %v5221 = vadd.f32 %v5182, %v5205
        %v5222 = vadd.f32 %v5183, %v5205
        %v5223 = vadd.f32 %v5184, %v5205
        %v5224 = vadd.f32 %v5185, %v5205
        %v5225 = vadd.f32 %v5186, %v5205
        %v5226 = vadd.f32 %v5187, %v5205
        %v5227 = vadd.f32 %v5188, %v5205
        %v5228 = vadd.f32 %v5189, %v5205
        %v5229 = vadd.f32 %v5190, %v5205
        %v5230 = vadd.f32 %v5191, %v5205
        %v5231 = vadd.f32 %v5192, %v5205
        %v5232 = vadd.f32 %v5193, %v5205
        %v5233 = vadd.f32 %v5194, %v5205
        %v5234 = vadd.f32 %v5195, %v5205
        %v5235 = vadd.f32 %v5196, %v5205
        %v5236 = vadd.f32 %v5197, %v5205
        %v5237 = vadd.f32 %v5198, %v5205
        %v5238 = vadd.f32 %v5199, %v5205
        %v5239 = vmax.f32 %v5207, 0.0
        %v5240 = vmax.f32 %v5208, 0.0
        %v5241 = vmax.f32 %v5209, 0.0
        %v5242 = vmax.f32 %v5210, 0.0
        %v5243 = vmax.f32 %v5211, 0.0
        %v5244 = vmax.f32 %v5212, 0.0
        %v5245 = vmax.f32 %v5213, 0.0
        %v5246 = vmax.f32 %v5214, 0.0
        %v5247 = vmax.f32 %v5215, 0.0
        %v5248 = vmax.f32 %v5216, 0.0
        %v5249 = vmax.f32 %v5217, 0.0
        %v5250 = vmax.f32 %v5218, 0.0
        %v5251 = vmax.f32 %v5219, 0.0
        %v5252 = vmax.f32 %v5220, 0.0
        %v5253 = vmax.f32 %v5221, 0.0
        %v5254 = vmax.f32 %v5222, 0.0
        %v5255 = vmax.f32 %v5223, 0.0
        %v5256 = vmax.f32 %v5224, 0.0
        %v5257 = vmax.f32 %v5225, 0.0
        %v5258 = vmax.f32 %v5226, 0.0
        %v5259 = vmax.f32 %v5227, 0.0
        %v5260 = vmax.f32 %v5228, 0.0
        %v5261 = vmax.f32 %v5229, 0.0
        %v5262 = vmax.f32 %v5230, 0.0
        %v5263 = vmax.f32 %v5231, 0.0
        %v5264 = vmax.f32 %v5232, 0.0
        %v5265 = vmax.f32 %v5233, 0.0
        %v5266 = vmax.f32 %v5234, 0.0
        %v5267 = vmax.f32 %v5235, 0.0
        %v5268 = vmax.f32 %v5236, 0.0
        %v5269 = vmax.f32 %v5237, 0.0
        %v5270 = vmax.f32 %v5238, 0.0
        %v5271 = vpack.c.bf16 %v5240, %v5239
        %v5272 = vpack.c.bf16 %v5242, %v5241
        %v5273 = vpack.c.bf16 %v5244, %v5243
        %v5274 = vpack.c.bf16 %v5246, %v5245
        %v5275 = vpack.c.bf16 %v5248, %v5247
        %v5276 = vpack.c.bf16 %v5250, %v5249
        %v5277 = vpack.c.bf16 %v5252, %v5251
        %v5278 = vpack.c.bf16 %v5254, %v5253
        %v5279 = vpack.c.bf16 %v5256, %v5255
        %v5280 = vpack.c.bf16 %v5258, %v5257
        %v5281 = vpack.c.bf16 %v5260, %v5259
        %v5282 = vpack.c.bf16 %v5262, %v5261
        %v5283 = vpack.c.bf16 %v5264, %v5263
        %v5284 = vpack.c.bf16 %v5266, %v5265
        %v5285 = vpack.c.bf16 %v5268, %v5267
        %v5286 = vpack.c.bf16 %v5270, %v5269
        %v5287 = vld [vmem:[#allocation10] sm:$0xf]
        %v5288 = vld [vmem:[#allocation10 + $0x4] sm:$0xf]
        %v5289 = vld [vmem:[#allocation10 + $0x8] sm:$0xf]
        %v5290 = vld [vmem:[#allocation10 + $0xc] sm:$0xf]
        %v5291 = vld [vmem:[#allocation10 + $0x10] sm:$0xf]
        %v5292 = vld [vmem:[#allocation10 + $0x14] sm:$0xf]
        %v5293 = vld [vmem:[#allocation10 + $0x18] sm:$0xf]
        %v5294 = vld [vmem:[#allocation10 + $0x1c] sm:$0xf]
        %v5295 = vld [vmem:[#allocation10 + $0x20] sm:$0xf]
        %v5296 = vld [vmem:[#allocation10 + $0x24] sm:$0xf]
        %v5297 = vld [vmem:[#allocation10 + $0x28] sm:$0xf]
        %v5298 = vld [vmem:[#allocation10 + $0x2c] sm:$0xf]
        %v5299 = vld [vmem:[#allocation10 + $0x30] sm:$0xf]
        %v5300 = vld [vmem:[#allocation10 + $0x34] sm:$0xf]
        %v5301 = vld [vmem:[#allocation10 + $0x38] sm:$0xf]
        %v5302 = vld [vmem:[#allocation10 + $0x3c] sm:$0xf]
        %v5319 = vunpack.c.l.b16 %v5287
        %v5320 = vunpack.c.l.b16 %v5288
        %v5321 = vunpack.c.l.b16 %v5289
        %v5322 = vunpack.c.l.b16 %v5290
        %v5323 = vunpack.c.l.b16 %v5291
        %v5324 = vunpack.c.l.b16 %v5292
        %v5325 = vunpack.c.l.b16 %v5293
        %v5326 = vunpack.c.l.b16 %v5294
        %v5327 = vunpack.c.l.b16 %v5295
        %v5328 = vunpack.c.l.b16 %v5296
        %v5329 = vunpack.c.l.b16 %v5297
        %v5330 = vunpack.c.l.b16 %v5298
        %v5331 = vunpack.c.l.b16 %v5299
        %v5332 = vunpack.c.l.b16 %v5300
        %v5333 = vunpack.c.l.b16 %v5301
        %v5334 = vunpack.c.l.b16 %v5302
        %v5335 = vpack.c.b16 %v5320, %v5319
        %v5336 = vpack.c.b16 %v5322, %v5321
        %v5337 = vpack.c.b16 %v5324, %v5323
        %v5338 = vpack.c.b16 %v5326, %v5325
        %v5339 = vpack.c.b16 %v5328, %v5327
        %v5340 = vpack.c.b16 %v5330, %v5329
        %v5341 = vpack.c.b16 %v5332, %v5331
        %v5342 = vpack.c.b16 %v5334, %v5333
        %5351 = vmatprep.subr.bf16.mxu0 0
        %5352 = vmatpush1.bf16.msra.mxu0 %v5335
        %5353 = vmatprep.subr.bf16.mxu0 0
        %5354 = vmatpush1.bf16.msra.mxu0 %v5336
        %5355 = vmatprep.subr.bf16.mxu0 0
        %5356 = vmatpush1.bf16.msra.mxu0 %v5337
        %5357 = vmatprep.subr.bf16.mxu0 0
        %5358 = vmatpush1.bf16.msra.mxu0 %v5338
        %5359 = vmatprep.subr.bf16.mxu0 0
        %5360 = vmatpush1.bf16.msra.mxu0 %v5339
        %5361 = vmatprep.subr.bf16.mxu0 0
        %5362 = vmatpush1.bf16.msra.mxu0 %v5340
        %5363 = vmatprep.subr.bf16.mxu0 0
        %5364 = vmatpush1.bf16.msra.mxu0 %v5341
        %5365 = vmatprep.subr.bf16.mxu0 0
        %5366 = vmatpush1.bf16.msra.mxu0 %v5342
        %5367 = vmatprep.subr.bf16.mxu0 0
        %5368 = vmatpush1.bf16.msra.mxu0 0
        %5369 = vmatprep.subr.bf16.mxu0 0
        %5370 = vmatpush1.bf16.msra.mxu0 0
        %5371 = vmatprep.subr.bf16.mxu0 0
        %5372 = vmatpush1.bf16.msra.mxu0 0
        %5373 = vmatprep.subr.bf16.mxu0 0
        %5374 = vmatpush1.bf16.msra.mxu0 0
        %5375 = vmatprep.subr.bf16.mxu0 0
        %5376 = vmatpush1.bf16.msra.mxu0 0
        %5377 = vmatprep.subr.bf16.mxu0 0
        %5378 = vmatpush1.bf16.msra.mxu0 0
        %5379 = vmatprep.subr.bf16.mxu0 0
        %5380 = vmatpush1.bf16.msra.mxu0 0
        %5381 = vmatprep.subr.bf16.mxu0 0
        %5382 = vmatpush1.bf16.msra.mxu0 0
        %5383 = vmatprep.mubr.bf16.mxu0 0
        %5384 = vmatmul.mubr.bf16.gmra.mrb[0].mxu0 %v5271
        %v5385 = vpop.f32.mrb[0].mxu0
        %v5386 = vadd.f32 0.0, %v5385
        %v5387 = vpop.f32.mrb[0].mxu0
        %v5388 = vpop.f32.mrb[0].mxu0
        %v5389 = vadd.f32 0.0, %v5388
        %v5390 = vpop.f32.mrb[0].mxu0
        %5391 = vmatprep.mubr.bf16.mxu0 0
        %5392 = vmatmul.mubr.bf16.gmra.mrb[0].mxu0 %v5272
        %v5393 = vpop.f32.mrb[0].mxu0
        %v5394 = vadd.f32 0.0, %v5393
        %v5395 = vpop.f32.mrb[0].mxu0
        %v5396 = vpop.f32.mrb[0].mxu0
        %v5397 = vadd.f32 0.0, %v5396
        %v5398 = vpop.f32.mrb[0].mxu0
        %5399 = vmatprep.mubr.bf16.mxu0 0
        %5400 = vmatmul.mubr.bf16.gmra.mrb[0].mxu0 %v5273
        %v5401 = vpop.f32.mrb[0].mxu0
        %v5402 = vadd.f32 0.0, %v5401
        %v5403 = vpop.f32.mrb[0].mxu0
        %v5404 = vpop.f32.mrb[0].mxu0
        %v5405 = vadd.f32 0.0, %v5404
        %v5406 = vpop.f32.mrb[0].mxu0
        %5407 = vmatprep.mubr.bf16.mxu0 0
        %5408 = vmatmul.mubr.bf16.gmra.mrb[0].mxu0 %v5274
        %v5409 = vpop.f32.mrb[0].mxu0
        %v5410 = vadd.f32 0.0, %v5409
        %v5411 = vpop.f32.mrb[0].mxu0
        %v5412 = vpop.f32.mrb[0].mxu0
        %v5413 = vadd.f32 0.0, %v5412
        %v5414 = vpop.f32.mrb[0].mxu0
        %5415 = vmatprep.mubr.bf16.mxu0 0
        %5416 = vmatmul.mubr.bf16.gmra.mrb[0].mxu0 %v5275
        %v5417 = vpop.f32.mrb[0].mxu0
        %v5418 = vadd.f32 0.0, %v5417
        %v5419 = vpop.f32.mrb[0].mxu0
        %v5420 = vpop.f32.mrb[0].mxu0
        %v5421 = vadd.f32 0.0, %v5420
        %v5422 = vpop.f32.mrb[0].mxu0
        %5423 = vmatprep.mubr.bf16.mxu0 0
        %5424 = vmatmul.mubr.bf16.gmra.mrb[0].mxu0 %v5276
        %v5425 = vpop.f32.mrb[0].mxu0
        %v5426 = vadd.f32 0.0, %v5425
        %v5427 = vpop.f32.mrb[0].mxu0
        %v5428 = vpop.f32.mrb[0].mxu0
        %v5429 = vadd.f32 0.0, %v5428
        %v5430 = vpop.f32.mrb[0].mxu0
        %5431 = vmatprep.mubr.bf16.mxu0 0
        %5432 = vmatmul.mubr.bf16.gmra.mrb[0].mxu0 %v5277
        %v5433 = vpop.f32.mrb[0].mxu0
        %v5434 = vadd.f32 0.0, %v5433
        %v5435 = vpop.f32.mrb[0].mxu0
        %v5436 = vpop.f32.mrb[0].mxu0
        %v5437 = vadd.f32 0.0, %v5436
        %v5438 = vpop.f32.mrb[0].mxu0
        %5439 = vmatprep.mubr.bf16.mxu0 0
        %5440 = vmatmul.mubr.bf16.gmra.mrb[0].mxu0 %v5278
        %v5441 = vpop.f32.mrb[0].mxu0
        %v5442 = vadd.f32 0.0, %v5441
        %v5443 = vpop.f32.mrb[0].mxu0
        %v5444 = vpop.f32.mrb[0].mxu0
        %v5445 = vadd.f32 0.0, %v5444
        %v5446 = vpop.f32.mrb[0].mxu0
        %5447 = vmatprep.mubr.bf16.mxu0 0
        %5448 = vmatmul.mubr.bf16.gmra.mrb[0].mxu0 %v5279
        %v5449 = vpop.f32.mrb[0].mxu0
        %v5450 = vadd.f32 0.0, %v5449
        %v5451 = vpop.f32.mrb[0].mxu0
        %v5452 = vpop.f32.mrb[0].mxu0
        %v5453 = vadd.f32 0.0, %v5452
        %v5454 = vpop.f32.mrb[0].mxu0
        %5455 = vmatprep.mubr.bf16.mxu0 0
        %5456 = vmatmul.mubr.bf16.gmra.mrb[0].mxu0 %v5280
        %v5457 = vpop.f32.mrb[0].mxu0
        %v5458 = vadd.f32 0.0, %v5457
        %v5459 = vpop.f32.mrb[0].mxu0
        %v5460 = vpop.f32.mrb[0].mxu0
        %v5461 = vadd.f32 0.0, %v5460
        %v5462 = vpop.f32.mrb[0].mxu0
        %5463 = vmatprep.mubr.bf16.mxu0 0
        %5464 = vmatmul.mubr.bf16.gmra.mrb[0].mxu0 %v5281
        %v5465 = vpop.f32.mrb[0].mxu0
        %v5466 = vadd.f32 0.0, %v5465
        %v5467 = vpop.f32.mrb[0].mxu0
        %v5468 = vpop.f32.mrb[0].mxu0
        %v5469 = vadd.f32 0.0, %v5468
        %v5470 = vpop.f32.mrb[0].mxu0
        %5471 = vmatprep.mubr.bf16.mxu0 0
        %5472 = vmatmul.mubr.bf16.gmra.mrb[0].mxu0 %v5282
        %v5473 = vpop.f32.mrb[0].mxu0
        %v5474 = vadd.f32 0.0, %v5473
        %v5475 = vpop.f32.mrb[0].mxu0
        %v5476 = vpop.f32.mrb[0].mxu0
        %v5477 = vadd.f32 0.0, %v5476
        %v5478 = vpop.f32.mrb[0].mxu0
        %5479 = vmatprep.mubr.bf16.mxu0 0
        %5480 = vmatmul.mubr.bf16.gmra.mrb[0].mxu0 %v5283
        %v5481 = vpop.f32.mrb[0].mxu0
        %v5482 = vadd.f32 0.0, %v5481
        %v5483 = vpop.f32.mrb[0].mxu0
        %v5484 = vpop.f32.mrb[0].mxu0
        %v5485 = vadd.f32 0.0, %v5484
        %v5486 = vpop.f32.mrb[0].mxu0
        %5487 = vmatprep.mubr.bf16.mxu0 0
        %5488 = vmatmul.mubr.bf16.gmra.mrb[0].mxu0 %v5284
        %v5489 = vpop.f32.mrb[0].mxu0
        %v5490 = vadd.f32 0.0, %v5489
        %v5491 = vpop.f32.mrb[0].mxu0
        %v5492 = vpop.f32.mrb[0].mxu0
        %v5493 = vadd.f32 0.0, %v5492
        %v5494 = vpop.f32.mrb[0].mxu0
        %5495 = vmatprep.mubr.bf16.mxu0 0
        %5496 = vmatmul.mubr.bf16.gmra.mrb[0].mxu0 %v5285
        %v5497 = vpop.f32.mrb[0].mxu0
        %v5498 = vadd.f32 0.0, %v5497
        %v5499 = vpop.f32.mrb[0].mxu0
        %v5500 = vpop.f32.mrb[0].mxu0
        %v5501 = vadd.f32 0.0, %v5500
        %v5502 = vpop.f32.mrb[0].mxu0
        %5503 = vmatprep.mubr.bf16.mxu0 0
        %5504 = vmatmul.mubr.bf16.gmra.mrb[0].mxu0 %v5286
        %v5505 = vpop.f32.mrb[0].mxu0
        %v5506 = vadd.f32 0.0, %v5505
        %v5507 = vpop.f32.mrb[0].mxu0
        %v5508 = vpop.f32.mrb[0].mxu0
        %v5509 = vadd.f32 0.0, %v5508
        %v5510 = vpop.f32.mrb[0].mxu0
        %5511 = vdwg.mxu0
        %v5512 = vld [vmem:[%s8] sm:$0x1]
        %v5514 = vlaneseq
        %v5515 = vshrl.u32 %v5514, 7
        %v5516 = vsub.s32 0, %v5515
        %v5517 = vrot.slane %v5512, %v5516
        %v5519 = vmul.f32 %v5386, %v5517
        %v5520 = vmul.f32 %v5389, %v5517
        %v5521 = vmul.f32 %v5394, %v5517
        %v5522 = vmul.f32 %v5397, %v5517
        %v5523 = vmul.f32 %v5402, %v5517
        %v5524 = vmul.f32 %v5405, %v5517
        %v5525 = vmul.f32 %v5410, %v5517
        %v5526 = vmul.f32 %v5413, %v5517
        %v5527 = vmul.f32 %v5418, %v5517
        %v5528 = vmul.f32 %v5421, %v5517
        %v5529 = vmul.f32 %v5426, %v5517
        %v5530 = vmul.f32 %v5429, %v5517
        %v5531 = vmul.f32 %v5434, %v5517
        %v5532 = vmul.f32 %v5437, %v5517
        %v5533 = vmul.f32 %v5442, %v5517
        %v5534 = vmul.f32 %v5445, %v5517
        %v5535 = vmul.f32 %v5450, %v5517
        %v5536 = vmul.f32 %v5453, %v5517
        %v5537 = vmul.f32 %v5458, %v5517
        %v5538 = vmul.f32 %v5461, %v5517
        %v5539 = vmul.f32 %v5466, %v5517
        %v5540 = vmul.f32 %v5469, %v5517
        %v5541 = vmul.f32 %v5474, %v5517
        %v5542 = vmul.f32 %v5477, %v5517
        %v5543 = vmul.f32 %v5482, %v5517
        %v5544 = vmul.f32 %v5485, %v5517
        %v5545 = vmul.f32 %v5490, %v5517
        %v5546 = vmul.f32 %v5493, %v5517
        %v5547 = vmul.f32 %v5498, %v5517
        %v5548 = vmul.f32 %v5501, %v5517
        %v5549 = vmul.f32 %v5506, %v5517
        %v5550 = vmul.f32 %v5509, %v5517
        %v5551 = vld [vmem:[%s9] sm:$0x1]
        %v5553 = vlaneseq
        %v5554 = vshrl.u32 %v5553, 7
        %v5555 = vsub.s32 0, %v5554
        %v5556 = vrot.slane %v5551, %v5555
        %v5558 = vadd.f32 %v5519, %v5556
        %v5559 = vadd.f32 %v5520, %v5556
        %v5560 = vadd.f32 %v5521, %v5556
        %v5561 = vadd.f32 %v5522, %v5556
        %v5562 = vadd.f32 %v5523, %v5556
        %v5563 = vadd.f32 %v5524, %v5556
        %v5564 = vadd.f32 %v5525, %v5556
        %v5565 = vadd.f32 %v5526, %v5556
        %v5566 = vadd.f32 %v5527, %v5556
        %v5567 = vadd.f32 %v5528, %v5556
        %v5568 = vadd.f32 %v5529, %v5556
        %v5569 = vadd.f32 %v5530, %v5556
        %v5570 = vadd.f32 %v5531, %v5556
        %v5571 = vadd.f32 %v5532, %v5556
        %v5572 = vadd.f32 %v5533, %v5556
        %v5573 = vadd.f32 %v5534, %v5556
        %v5574 = vadd.f32 %v5535, %v5556
        %v5575 = vadd.f32 %v5536, %v5556
        %v5576 = vadd.f32 %v5537, %v5556
        %v5577 = vadd.f32 %v5538, %v5556
        %v5578 = vadd.f32 %v5539, %v5556
        %v5579 = vadd.f32 %v5540, %v5556
        %v5580 = vadd.f32 %v5541, %v5556
        %v5581 = vadd.f32 %v5542, %v5556
        %v5582 = vadd.f32 %v5543, %v5556
        %v5583 = vadd.f32 %v5544, %v5556
        %v5584 = vadd.f32 %v5545, %v5556
        %v5585 = vadd.f32 %v5546, %v5556
        %v5586 = vadd.f32 %v5547, %v5556
        %v5587 = vadd.f32 %v5548, %v5556
        %v5588 = vadd.f32 %v5549, %v5556
        %v5589 = vadd.f32 %v5550, %v5556
        %v5590 = vunpack.c.l.bf16 %v444
        %v5591 = vunpack.c.l.bf16 %v445
        %v5592 = vunpack.c.l.bf16 %v446
        %v5593 = vunpack.c.l.bf16 %v447
        %v5594 = vunpack.c.l.bf16 %v448
        %v5595 = vunpack.c.l.bf16 %v449
        %v5596 = vunpack.c.l.bf16 %v450
        %v5597 = vunpack.c.l.bf16 %v451
        %v5598 = vunpack.c.l.bf16 %v452
        %v5599 = vunpack.c.l.bf16 %v453
        %v5600 = vunpack.c.l.bf16 %v454
        %v5601 = vunpack.c.l.bf16 %v455
        %v5602 = vunpack.c.l.bf16 %v456
        %v5603 = vunpack.c.l.bf16 %v457
        %v5604 = vunpack.c.l.bf16 %v458
        %v5605 = vunpack.c.l.bf16 %v459
        %v5606 = vunpack.c.l.bf16 %v460
        %v5607 = vunpack.c.l.bf16 %v461
        %v5608 = vunpack.c.l.bf16 %v462
        %v5609 = vunpack.c.l.bf16 %v463
        %v5610 = vunpack.c.l.bf16 %v464
        %v5611 = vunpack.c.l.bf16 %v465
        %v5612 = vunpack.c.l.bf16 %v466
        %v5613 = vunpack.c.l.bf16 %v467
        %v5614 = vunpack.c.l.bf16 %v468
        %v5615 = vunpack.c.l.bf16 %v469
        %v5616 = vunpack.c.l.bf16 %v470
        %v5617 = vunpack.c.l.bf16 %v471
        %v5618 = vunpack.c.l.bf16 %v472
        %v5619 = vunpack.c.l.bf16 %v473
        %v5620 = vunpack.c.l.bf16 %v474
        %v5621 = vunpack.c.l.bf16 %v475
        %v5622 = vadd.f32 %v5558, %v5590
        %v5623 = vadd.f32 %v5559, %v5591
        %v5624 = vadd.f32 %v5560, %v5592
        %v5625 = vadd.f32 %v5561, %v5593
        %v5626 = vadd.f32 %v5562, %v5594
        %v5627 = vadd.f32 %v5563, %v5595
        %v5628 = vadd.f32 %v5564, %v5596
        %v5629 = vadd.f32 %v5565, %v5597
        %v5630 = vadd.f32 %v5566, %v5598
        %v5631 = vadd.f32 %v5567, %v5599
        %v5632 = vadd.f32 %v5568, %v5600
        %v5633 = vadd.f32 %v5569, %v5601
        %v5634 = vadd.f32 %v5570, %v5602
        %v5635 = vadd.f32 %v5571, %v5603
        %v5636 = vadd.f32 %v5572, %v5604
        %v5637 = vadd.f32 %v5573, %v5605
        %v5638 = vadd.f32 %v5574, %v5606
        %v5639 = vadd.f32 %v5575, %v5607
        %v5640 = vadd.f32 %v5576, %v5608
        %v5641 = vadd.f32 %v5577, %v5609
        %v5642 = vadd.f32 %v5578, %v5610
        %v5643 = vadd.f32 %v5579, %v5611
        %v5644 = vadd.f32 %v5580, %v5612
        %v5645 = vadd.f32 %v5581, %v5613
        %v5646 = vadd.f32 %v5582, %v5614
        %v5647 = vadd.f32 %v5583, %v5615
        %v5648 = vadd.f32 %v5584, %v5616
        %v5649 = vadd.f32 %v5585, %v5617
        %v5650 = vadd.f32 %v5586, %v5618
        %v5651 = vadd.f32 %v5587, %v5619
        %v5652 = vadd.f32 %v5588, %v5620
        %v5653 = vadd.f32 %v5589, %v5621
        %v5654 = vmax.f32 %v5622, 0.0
        %v5655 = vmax.f32 %v5623, 0.0
        %v5656 = vmax.f32 %v5624, 0.0
        %v5657 = vmax.f32 %v5625, 0.0
        %v5658 = vmax.f32 %v5626, 0.0
        %v5659 = vmax.f32 %v5627, 0.0
        %v5660 = vmax.f32 %v5628, 0.0
        %v5661 = vmax.f32 %v5629, 0.0
        %v5662 = vmax.f32 %v5630, 0.0
        %v5663 = vmax.f32 %v5631, 0.0
        %v5664 = vmax.f32 %v5632, 0.0
        %v5665 = vmax.f32 %v5633, 0.0
        %v5666 = vmax.f32 %v5634, 0.0
        %v5667 = vmax.f32 %v5635, 0.0
        %v5668 = vmax.f32 %v5636, 0.0
        %v5669 = vmax.f32 %v5637, 0.0
        %v5670 = vmax.f32 %v5638, 0.0
        %v5671 = vmax.f32 %v5639, 0.0
        %v5672 = vmax.f32 %v5640, 0.0
        %v5673 = vmax.f32 %v5641, 0.0
        %v5674 = vmax.f32 %v5642, 0.0
        %v5675 = vmax.f32 %v5643, 0.0
        %v5676 = vmax.f32 %v5644, 0.0
        %v5677 = vmax.f32 %v5645, 0.0
        %v5678 = vmax.f32 %v5646, 0.0
        %v5679 = vmax.f32 %v5647, 0.0
        %v5680 = vmax.f32 %v5648, 0.0
        %v5681 = vmax.f32 %v5649, 0.0
        %v5682 = vmax.f32 %v5650, 0.0
        %v5683 = vmax.f32 %v5651, 0.0
        %v5684 = vmax.f32 %v5652, 0.0
        %v5685 = vmax.f32 %v5653, 0.0
        %5686 = vst [vmem:[%s435] sm:$0xff] %v5654
        %5687 = vst [vmem:[%s435 + $0x8] sm:$0xff] %v5655
        %5688 = vst [vmem:[%s435 + $0x10] sm:$0xff] %v5656
        %5689 = vst [vmem:[%s435 + $0x18] sm:$0xff] %v5657
        %5690 = vst [vmem:[%s435 + $0x20] sm:$0xff] %v5658
        %5691 = vst [vmem:[%s435 + $0x28] sm:$0xff] %v5659
        %5692 = vst [vmem:[%s435 + $0x30] sm:$0xff] %v5660
        %5693 = vst [vmem:[%s435 + $0x38] sm:$0xff] %v5661
        %5694 = vst [vmem:[%s435 + $0x40] sm:$0xff] %v5662
        %5695 = vst [vmem:[%s435 + $0x48] sm:$0xff] %v5663
        %5696 = vst [vmem:[%s435 + $0x50] sm:$0xff] %v5664
        %5697 = vst [vmem:[%s435 + $0x58] sm:$0xff] %v5665
        %5698 = vst [vmem:[%s435 + $0x60] sm:$0xff] %v5666
        %5699 = vst [vmem:[%s435 + $0x68] sm:$0xff] %v5667
        %5700 = vst [vmem:[%s435 + $0x70] sm:$0xff] %v5668
        %5701 = vst [vmem:[%s435 + $0x78] sm:$0xff] %v5669
        %5702 = vst [vmem:[%s435 + $0x80] sm:$0xff] %v5670
        %5703 = vst [vmem:[%s435 + $0x88] sm:$0xff] %v5671
        %5704 = vst [vmem:[%s435 + $0x90] sm:$0xff] %v5672
        %5705 = vst [vmem:[%s435 + $0x98] sm:$0xff] %v5673
        %5706 = vst [vmem:[%s435 + $0xa0] sm:$0xff] %v5674
        %5707 = vst [vmem:[%s435 + $0xa8] sm:$0xff] %v5675
        %5708 = vst [vmem:[%s435 + $0xb0] sm:$0xff] %v5676
        %5709 = vst [vmem:[%s435 + $0xb8] sm:$0xff] %v5677
        %5710 = vst [vmem:[%s435 + $0xc0] sm:$0xff] %v5678
        %5711 = vst [vmem:[%s435 + $0xc8] sm:$0xff] %v5679
        %5712 = vst [vmem:[%s435 + $0xd0] sm:$0xff] %v5680
        %5713 = vst [vmem:[%s435 + $0xd8] sm:$0xff] %v5681
        %5714 = vst [vmem:[%s435 + $0xe0] sm:$0xff] %v5682
        %5715 = vst [vmem:[%s435 + $0xe8] sm:$0xff] %v5683
        %5716 = vst [vmem:[%s435 + $0xf0] sm:$0xff] %v5684
        %5717 = vst [vmem:[%s435 + $0xf8] sm:$0xff] %v5685
        %s5718 = sand.u32 %s266, 1
        %s5719 = scalar_lea.sflag [#allocation6], %s5718
        %s5720 = sand.u32 %s266, 1
        %s5721 = smul.addr %s5720, 256
        %s5722 = scalar_lea.vmem [#allocation12], %s5721
        // Predicated region
        $region85: #{tpu_custom_call.1} parent=59 // pred_check
          %p5723 = pneg %p276
        $region86: #{tpu_custom_call.1} parent=59 // pred_check_branch
          %5725 = sbr.rel (%p5723) target = $region88
        $region87: #{tpu_custom_call.1} parent=59 // pred_region
          %s5726 = smul.u32 16, %s34
          %s5728 = ssub.s32 4096, 4096
          %5729 = vsyncadd %s5719, %s5728
          %s5730 = smul.addr %s5726, 2
          %s5731 = smul.addr %s33, 32
          %s5732 = sadd.s32 %s5730, %s5731
          %s5733 = smul.addr %s5732, 128
          %s5734 = scalar_lea.hbm %s10, %s5733
          %s5735 = sshll.u32 %s5722, 4
          %s5736 = int_to_ptr.vmem [resolvable:$true] %s5735
          %5741 = dma.vmem_to_hbm [thread:$0]  %s5736, 4096, %s5734, %s5719, 128, 128, 8
        $region88: #{tpu_custom_call.1} parent=59 // pred_fallthru
          _
      $region60: #{tpu_custom_call.1} parent=5 // pred_fallthru
        _
      %p5742 = scmp.le.s32.totalorder 2, %s24
      // Predicated region
      $region89: #{tpu_custom_call.1} parent=5 // pred_check
        %p5743 = pneg %p5742
      $region90: #{tpu_custom_call.1} parent=5 // pred_check_branch
        %5745 = sbr.rel (%p5743) target = $region92
      $region91: #{tpu_custom_call.1} parent=5 // pred_region
        %s5746 = ssub.s32 %s24, 2
        // Predicated region
        $region93: #{tpu_custom_call.1} parent=91 // pred_check
          %p5747 = pneg %p282
        $region94: #{tpu_custom_call.1} parent=91 // pred_check_branch
          %5749 = sbr.rel (%p5747) target = $region96
        $region95: #{tpu_custom_call.1} parent=91 // pred_region
          %s5750 = sand.u32 %s267, 1
          %s5751 = scalar_lea.sflag [#allocation6], %s5750
          %s5752 = sand.u32 %s267, 1
          %s5753 = smul.addr %s5752, 256
          %s5754 = scalar_lea.vmem [#allocation12], %s5753
          %5755 = dma.done %s5751, 4096
        $region96: #{tpu_custom_call.1} parent=91 // pred_fallthru
          _
      $region92: #{tpu_custom_call.1} parent=5 // pred_fallthru
        _
    $region6: #{tpu_custom_call.1} parent=1 // loop_footer
      %s28 = sadd.s32 1, %s24
    $region7: #{tpu_custom_call.1} parent=1 // loop_footer_branch
      %23 = sbr.rel target = $region3
    $region8: #{tpu_custom_call.1} parent=1 // loop_exit
      _
    %5756 = vsyncpa [#allocation5], 1
    %s5757 = scalar_lea.sflag [#allocation5], 1
    %5758 = vsyncpa %s5757, 1
    %5759 = vsyncpa [#allocation8], 1
    %5760 = vsyncpa [#allocation11], 1
    %5761 = vsyncpa [#allocation6], 1
    %s5762 = scalar_lea.sflag [#allocation6], 1
    %5763 = vsyncpa %s5762, 1

</llo_original>
